<compile_context>
chip_gen: v6e
topology: v6e:2x2x1
jax: 0.10.0
libtpu: 0.0.40
codegen_flags: <defaults>
</compile_context>

<pallas_src>
import functools

import jax
import jax.numpy as jnp
from jax.experimental import pallas as pl
from jax.experimental.pallas import tpu as pltpu

LEAKY_SLOPE = 0.01            # nn.LeakyReLU() default
BN_EPS = 1e-5                 # nn.BatchNorm2d default
TM_CAP = 512                  # max rows per grid step (single block if M <= cap)
VMEM_LIMIT = 32 * 1024 * 1024


# ----------------------------------------------------------------------------
# Pallas kernels
# ----------------------------------------------------------------------------
def _matmul_bias_act_kernel(x_ref, w_ref, b_ref, o_ref, *, act):
    """bf16 (TM,K)@(K,N) on the MXU with f32 accumulator, + folded bias, act."""
    acc = jnp.dot(x_ref[...], w_ref[...], preferred_element_type=jnp.float32)
    acc = acc + b_ref[...]                      # conv bias + BN shift, folded
    if act == "leaky_relu":
        acc = jnp.where(acc >= 0, acc, LEAKY_SLOPE * acc)
    elif act == "tanh":
        acc = jnp.tanh(acc)
    o_ref[...] = acc.astype(o_ref.dtype)


def fused_matmul(x, w, b, act="none", out_dtype=jnp.bfloat16):
    """y = act(x @ w + b), tiled over M. x/w run in bf16, accumulate f32."""
    M, K = x.shape
    N = w.shape[1]
    x = x.astype(jnp.bfloat16)
    w = w.astype(jnp.bfloat16)
    b2 = b.reshape(1, N).astype(jnp.float32)

    if M <= TM_CAP:                 # single full block: no padding, no slice
        TM, Mp = M, M
    else:
        TM = TM_CAP
        Mp = pl.cdiv(M, TM) * TM
        if Mp != M:
            x = jnp.pad(x, ((0, Mp - M), (0, 0)))

    out = pl.pallas_call(
        functools.partial(_matmul_bias_act_kernel, act=act),
        out_shape=jax.ShapeDtypeStruct((Mp, N), out_dtype),
        grid_spec=pltpu.PrefetchScalarGridSpec(
            num_scalar_prefetch=0,
            grid=(Mp // TM,),
            in_specs=[
                pl.BlockSpec((TM, K), lambda i: (i, 0)),
                pl.BlockSpec((K, N), lambda i: (0, 0)),
                pl.BlockSpec((1, N), lambda i: (0, 0)),
            ],
            out_specs=pl.BlockSpec((TM, N), lambda i: (i, 0)),
        ),
        compiler_params=pltpu.CompilerParams(
            dimension_semantics=("parallel",),
            vmem_limit_bytes=VMEM_LIMIT),
    )(x, w, b2)
    return out if Mp == M else out[:M]


def _latent_head_kernel(x_ref, wmu_ref, wvar_ref, wd_ref,
                        bmu_ref, bvar_ref, bd_ref, eps_ref,
                        mu_ref, lv_ref, d_ref):
    """Fused fc_mu + fc_var + reparameterize + decoder_input (one launch)."""
    x = x_ref[...]
    mu = jnp.dot(x, wmu_ref[...], preferred_element_type=jnp.float32) + bmu_ref[...]
    lv = jnp.dot(x, wvar_ref[...], preferred_element_type=jnp.float32) + bvar_ref[...]
    z = eps_ref[...] * jnp.exp(0.5 * lv) + mu
    d = jnp.dot(z, wd_ref[...], preferred_element_type=jnp.float32) + bd_ref[...]
    mu_ref[...] = mu
    lv_ref[...] = lv
    d_ref[...] = d.astype(d_ref.dtype)


def latent_head(h_flat, p_mu, p_var, p_dec, eps):
    B, K = h_flat.shape
    L = p_mu["w"].shape[0]
    D = p_dec["w"].shape[0]
    f32 = jnp.float32
    args = (
        h_flat.astype(f32),
        jnp.transpose(p_mu["w"]).astype(f32),       # (K, L)
        jnp.transpose(p_var["w"]).astype(f32),      # (K, L)
        jnp.transpose(p_dec["w"]).astype(f32),      # (L, D)
        p_mu["b"].reshape(1, L).astype(f32),
        p_var["b"].reshape(1, L).astype(f32),
        p_dec["b"].reshape(1, D).astype(f32),
        eps.astype(f32),
    )
    mu, lv, d = pl.pallas_call(
        _latent_head_kernel,
        out_shape=(jax.ShapeDtypeStruct((B, L), f32),
                   jax.ShapeDtypeStruct((B, L), f32),
                   jax.ShapeDtypeStruct((B, D), jnp.bfloat16)),
        grid_spec=pltpu.PrefetchScalarGridSpec(
            num_scalar_prefetch=0,
            grid=(1,),
            in_specs=[pl.BlockSpec(a.shape, lambda i: (0, 0)) for a in args],
            out_specs=(pl.BlockSpec((B, L), lambda i: (0, 0)),
                       pl.BlockSpec((B, L), lambda i: (0, 0)),
                       pl.BlockSpec((B, D), lambda i: (0, 0))),
        ),
        compiler_params=pltpu.CompilerParams(
            dimension_semantics=("arbitrary",),
            vmem_limit_bytes=VMEM_LIMIT),
    )(*args)
    return mu, lv, d


# ----------------------------------------------------------------------------
# im2col glue (pure data movement, now in bf16) + layer wrappers
# ----------------------------------------------------------------------------
def _im2col(x, k, stride, pad):
    """x: (N,H,W,C) NHWC -> patches (N*OH*OW, k*k*C), flat order (kh,kw,c)."""
    # TODO(synk): overlapping/strided halo windows aren't expressible with
    # BlockSpec index_maps, so patch extraction stays in XLA (in bf16).
    N, H, W, C = x.shape
    xp = jnp.pad(x, ((0, 0), (pad, pad), (pad, pad), (0, 0)))
    OH = (H + 2 * pad - k) // stride + 1
    OW = (W + 2 * pad - k) // stride + 1
    cols = []
    for kh in range(k):
        for kw in range(k):
            cols.append(
                xp[:, kh:kh + stride * (OH - 1) + 1:stride,
                      kw:kw + stride * (OW - 1) + 1:stride, :])
    patches = jnp.concatenate(cols, axis=-1)            # (N, OH, OW, k*k*C)
    return patches.reshape(N * OH * OW, k * k * C), (N, OH, OW)


def _bn_fold(bn):
    # eval-mode BatchNorm: y = gamma*(x-mean)/sqrt(var+eps) + beta = x*s + t
    s = bn["gamma"] / jnp.sqrt(bn["var"] + BN_EPS)
    t = bn["beta"] - bn["mean"] * s
    return s, t


def conv2d_fused(x, w, b, s, t, stride, pad, act, out_dtype=jnp.bfloat16):
    """PyTorch Conv2d(w:(Cout,Cin,3,3)) on NHWC input; BN folded into w/b."""
    cout = w.shape[0]
    patches, (N, OH, OW) = _im2col(x, 3, stride, pad)
    wm = jnp.transpose(w, (2, 3, 1, 0)).reshape(-1, cout)   # (kh,kw,cin) x cout
    wm = wm * s[None, :]                                    # fold BN scale
    bb = s * b + t                                          # fold bias + shift
    out = fused_matmul(patches, wm, bb, act, out_dtype)
    return out.reshape(N, OH, OW, cout)


def convT2d_fused(x, w_t, b, s, t, act, out_dtype=jnp.bfloat16):
    """PyTorch ConvTranspose2d(w:(Cin,Cout,3,3), stride=2, pad=1, out_pad=1)
    via sub-pixel phase decomposition (no zero-dilated input, no zero MACs).

    out[2m+dy, 2n+dx] is produced by column block (dy,dx) of one matmul over
    4-tap patches [x[m+1,n+1], x[m+1,n], x[m,n+1], x[m,n]]."""
    N, H, W, C = x.shape
    cout = w_t.shape[1]
    xp = jnp.pad(x, ((0, 0), (0, 1), (0, 1), (0, 0)))       # bottom/right halo
    patches = jnp.concatenate(
        [xp[:, 1:, 1:, :],        # x[m+1, n+1]
         xp[:, 1:, :W, :],        # x[m+1, n  ]
         xp[:, :H, 1:, :],        # x[m  , n+1]
         x],                      # x[m  , n  ]
        axis=-1).reshape(N * H * W, 4 * C)

    wk = lambda kh, kw: w_t[:, :, kh, kw]                   # (Cin, Cout)
    zero = jnp.zeros((C, cout), w_t.dtype)
    col_ee = jnp.concatenate([zero,     zero,     zero,     wk(1, 1)], axis=0)
    col_eo = jnp.concatenate([zero,     zero,     wk(1, 0), wk(1, 2)], axis=0)
    col_oe = jnp.concatenate([zero,     wk(0, 1), zero,     wk(2, 1)], axis=0)
    col_oo = jnp.concatenate([wk(0, 0), wk(0, 2), wk(2, 0), wk(2, 2)], axis=0)
    wm = jnp.concatenate([col_ee, col_eo, col_oe, col_oo], axis=1)  # (4C,4Cout)

    wm = wm * jnp.tile(s, 4)[None, :]                       # fold BN scale
    bb = jnp.tile(s * b + t, 4)                             # fold bias + shift
    out = fused_matmul(patches, wm, bb, act, out_dtype)     # (N*H*W, 4Cout)

    out = out.reshape(N, H, W, 2, 2, cout)                  # depth-to-space
    out = jnp.transpose(out, (0, 1, 3, 2, 4, 5)).reshape(N, 2 * H, 2 * W, cout)
    return out


# ----------------------------------------------------------------------------
# VanillaVAE forward
# ----------------------------------------------------------------------------
def vae_forward(params, x_nchw, eps, latent_fmap):
    x = jnp.transpose(x_nchw, (0, 2, 3, 1)).astype(jnp.bfloat16)   # NCHW->NHWC

    # ----- encoder: [Conv2d(s=2) + BN + LeakyReLU] * len(hidden_dims)
    h = x
    for layer in params["encoder"]:
        s, t = _bn_fold(layer["bn"])
        h = conv2d_fused(h, layer["w"], layer["b"], s, t,
                         stride=2, pad=1, act="leaky_relu")

    # ----- flatten (match torch.flatten on NCHW)
    N = h.shape[0]
    h_flat = jnp.transpose(h, (0, 3, 1, 2)).reshape(N, -1)

    # ----- fused fc_mu + fc_var + reparameterize + decoder_input
    mu, log_var, d = latent_head(h_flat, params["fc_mu"], params["fc_var"],
                                 params["decoder_input"], eps)

    # ----- view(-1, C_last, fh, fw) then to NHWC
    c_last = params["encoder"][-1]["w"].shape[0]
    fh, fw = latent_fmap
    d = d.reshape(N, c_last, fh, fw)
    d = jnp.transpose(d, (0, 2, 3, 1))

    # ----- decoder: [ConvT(s=2) + BN + LeakyReLU] * (len(hidden_dims)-1)
    for layer in params["decoder"]:
        s, t = _bn_fold(layer["bn"])
        d = convT2d_fused(d, layer["w"], layer["b"], s, t, act="leaky_relu")

    # ----- final layer: ConvT + BN + LeakyReLU + Conv2d(->3) + Tanh
    fl = params["final"]
    s, t = _bn_fold(fl["convT"]["bn"])
    d = convT2d_fused(d, fl["convT"]["w"], fl["convT"]["b"], s, t,
                      act="leaky_relu")
    ones = jnp.ones((3,), jnp.float32)
    zeros = jnp.zeros((3,), jnp.float32)
    d = conv2d_fused(d, fl["conv"]["w"], fl["conv"]["b"], ones, zeros,
                     stride=1, pad=1, act="tanh", out_dtype=jnp.float32)

    recon = jnp.transpose(d, (0, 3, 1, 2))                  # NHWC -> NCHW
    return recon, x_nchw, mu, log_var


# ----------------------------------------------------------------------------
# Deterministic parameter initialization (shapes follow VanillaVAE.__init__)
# ----------------------------------------------------------------------------
def _nrm(key, shape, scale=0.1):
    return scale * jax.random.normal(key, shape, jnp.float32)


def init_params(key, in_channels, latent_dim, input_size, hidden_dims):
    keys = iter(jax.random.split(key, 64))

    def bn_init(c):
        return {
            "gamma": 1.0 + _nrm(next(keys), (c,)),
            "beta": _nrm(next(keys), (c,)),
            "mean": _nrm(next(keys), (c,)),
            "var": 0.5 + jax.nn.sigmoid(_nrm(next(keys), (c,))),   # strictly > 0
        }

    def conv_layer(cin, cout):
        return {"w": _nrm(next(keys), (cout, cin, 3, 3)),
                "b": _nrm(next(keys), (cout,)),
                "bn": bn_init(cout)}

    def convT_layer(cin, cout):
        return {"w": _nrm(next(keys), (cin, cout, 3, 3)),   # PyTorch ConvT layout
                "b": _nrm(next(keys), (cout,)),
                "bn": bn_init(cout)}

    beta = 2 ** len(hidden_dims)
    fh, fw = input_size // beta, input_size // beta
    before_latent = hidden_dims[-1] * fh * fw

    encoder, cin = [], in_channels
    for h_dim in hidden_dims:
        encoder.append(conv_layer(cin, h_dim))
        cin = h_dim

    decoder = []
    for i in range(len(hidden_dims) - 1, 0, -1):
        decoder.append(convT_layer(hidden_dims[i], hidden_dims[i - 1]))

    params = {
        "encoder": encoder,
        "fc_mu": {"w": _nrm(next(keys), (latent_dim, before_latent)),
                  "b": _nrm(next(keys), (latent_dim,))},
        "fc_var": {"w": _nrm(next(keys), (latent_dim, before_latent)),
                   "b": _nrm(next(keys), (latent_dim,))},
        "decoder_input": {"w": _nrm(next(keys), (before_latent, latent_dim)),
                          "b": _nrm(next(keys), (before_latent,))},
        "decoder": decoder,
        "final": {"convT": convT_layer(hidden_dims[0], hidden_dims[0]),
                  "conv": {"w": _nrm(next(keys), (3, hidden_dims[0], 3, 3)),
                           "b": _nrm(next(keys), (3,))}},
    }
    return params, (fh, fw)


# ----------------------------------------------------------------------------
if __name__ == "__main__":
    # TODO(synk): BatchNorm2d is implemented in eval mode (running stats folded
    # into the kernel); training-mode batch statistics are not computed.
    key = jax.random.PRNGKey(0)
    k_param, k_x, k_eps = jax.random.split(key, 3)

    in_channels, latent_dim, input_size = 3, 16, 16
    hidden_dims = [8, 16, 32]           # small variant of default [32,64,128,256,512]

    params, latent_fmap = init_params(k_param, in_channels, latent_dim,
                                      input_size, hidden_dims)

    x = jax.random.normal(k_x, (2, in_channels, input_size, input_size), jnp.float32)
    eps = jax.random.normal(k_eps, (2, latent_dim), jnp.float32)  # torch.randn_like

    fwd = jax.jit(lambda p, xx, ee: vae_forward(p, xx, ee, latent_fmap))
    recon, inp, mu, log_var = fwd(params, x, eps)
    jax.block_until_ready((recon, inp, mu, log_var))

    assert recon.shape == (2, 3, input_size, input_size)
    assert mu.shape == (2, latent_dim) and log_var.shape == (2, latent_dim)
    assert jnp.all(jnp.isfinite(recon)) and jnp.all(jnp.abs(recon) <= 1.0)
    print("KERNEL_OK")
</pallas_src>

<mosaic_0001>
module attributes {stable_mosaic.version = 11 : i64} {
  func.func @_matmul_bias_act_kernel(%arg0: i32, %arg1: memref<128x27xbf16, #tpu.memory_space<vmem>>, %arg2: memref<27x8xbf16, #tpu.memory_space<vmem>>, %arg3: memref<1x8xf32, #tpu.memory_space<vmem>>, %arg4: memref<128x8xbf16, #tpu.memory_space<vmem>>) attributes {dimension_semantics = [#tpu.dimension_semantics<parallel>], iteration_bounds = array<i64: 1>, scalar_prefetch = 0 : i64, scratch_operands = 0 : i64, tpu.core_type = #tpu.core_type<tc>, window_params = [{transform_indices = @transform_0, window_bounds = array<i64: 128, 27>}, {pipeline_mode = #tpu.pipeline_mode<synchronous>, transform_indices = @transform_1, window_bounds = array<i64: 27, 8>}, {pipeline_mode = #tpu.pipeline_mode<synchronous>, transform_indices = @transform_2, window_bounds = array<i64: 1, 8>}, {transform_indices = @transform_3, window_bounds = array<i64: 128, 8>}]} {
    %c0 = arith.constant 0 : index
    %c0_0 = arith.constant 0 : index
    %0 = vector.load %arg1[%c0, %c0_0] : memref<128x27xbf16, #tpu.memory_space<vmem>>, vector<128x27xbf16>
    %c0_1 = arith.constant 0 : index
    %c0_2 = arith.constant 0 : index
    %1 = vector.load %arg2[%c0_1, %c0_2] : memref<27x8xbf16, #tpu.memory_space<vmem>>, vector<27x8xbf16>
    %cst = arith.constant dense<0.000000e+00> : vector<128x8xf32>
    %2 = tpu.matmul %0, %1, %cst {dimension_numbers = #tpu.dot_dimension_numbers<[1], [0], [0], [1], [0, 0, 1, 1], [], []>} : vector<128x27xbf16>, vector<27x8xbf16>, vector<128x8xf32> -> vector<128x8xf32>
    %c0_3 = arith.constant 0 : index
    %c0_4 = arith.constant 0 : index
    %3 = vector.load %arg3[%c0_3, %c0_4] : memref<1x8xf32, #tpu.memory_space<vmem>>, vector<1x8xf32>
    %4 = vector.broadcast %3 : vector<1x8xf32> to vector<128x8xf32>
    %5 = arith.addf %2, %4 : vector<128x8xf32>
    %cst_5 = arith.constant 0.000000e+00 : f32
    %6 = vector.broadcast %cst_5 : f32 to vector<128x8xf32>
    %7 = arith.cmpf oge, %5, %6 : vector<128x8xf32>
    %cst_6 = arith.constant 0.00999999977 : f32
    %8 = vector.broadcast %cst_6 : f32 to vector<128x8xf32>
    %9 = arith.mulf %8, %5 : vector<128x8xf32>
    %10 = arith.select %7, %5, %9 : vector<128x8xi1>, vector<128x8xf32>
    %11 = arith.truncf %10 : vector<128x8xf32> to vector<128x8xbf16>
    %c0_7 = arith.constant 0 : index
    %c0_8 = arith.constant 0 : index
    %12 = vector.load %arg4[%c0_7, %c0_8] : memref<128x8xbf16, #tpu.memory_space<vmem>>, vector<128x8xbf16>
    tpu.vector_store %arg4[%c0_7, %c0_8], %11 {strides = array<i32>} : memref<128x8xbf16, #tpu.memory_space<vmem>>, vector<128x8xbf16>,
    return
  }
  func.func @transform_0(%arg0: i32) -> (i32, i32) {
    %c0_i32 = arith.constant 0 : i32
    %c0_i32_0 = arith.constant 0 : i32
    return %arg0, %c0_i32 : i32, i32
  }
  func.func @transform_1(%arg0: i32) -> (i32, i32) {
    %c0_i32 = arith.constant 0 : i32
    %c0_i32_0 = arith.constant 0 : i32
    %c0_i32_1 = arith.constant 0 : i32
    return %c0_i32, %c0_i32_0 : i32, i32
  }
  func.func @transform_2(%arg0: i32) -> (i32, i32) {
    %c0_i32 = arith.constant 0 : i32
    %c0_i32_0 = arith.constant 0 : i32
    %c0_i32_1 = arith.constant 0 : i32
    return %c0_i32, %c0_i32_0 : i32, i32
  }
  func.func @transform_3(%arg0: i32) -> (i32, i32) {
    %c0_i32 = arith.constant 0 : i32
    %c0_i32_0 = arith.constant 0 : i32
    return %arg0, %c0_i32 : i32, i32
  }
}

module attributes {stable_mosaic.version = 11 : i64} {
  func.func @_matmul_bias_act_kernel(%arg0: i32, %arg1: memref<32x72xbf16, #tpu.memory_space<vmem>>, %arg2: memref<72x16xbf16, #tpu.memory_space<vmem>>, %arg3: memref<1x16xf32, #tpu.memory_space<vmem>>, %arg4: memref<32x16xbf16, #tpu.memory_space<vmem>>) attributes {dimension_semantics = [#tpu.dimension_semantics<parallel>], iteration_bounds = array<i64: 1>, scalar_prefetch = 0 : i64, scratch_operands = 0 : i64, tpu.core_type = #tpu.core_type<tc>, window_params = [{transform_indices = @transform_0, window_bounds = array<i64: 32, 72>}, {pipeline_mode = #tpu.pipeline_mode<synchronous>, transform_indices = @transform_1, window_bounds = array<i64: 72, 16>}, {pipeline_mode = #tpu.pipeline_mode<synchronous>, transform_indices = @transform_2, window_bounds = array<i64: 1, 16>}, {transform_indices = @transform_3, window_bounds = array<i64: 32, 16>}]} {
    %c0 = arith.constant 0 : index
    %c0_0 = arith.constant 0 : index
    %0 = vector.load %arg1[%c0, %c0_0] : memref<32x72xbf16, #tpu.memory_space<vmem>>, vector<32x72xbf16>
    %c0_1 = arith.constant 0 : index
    %c0_2 = arith.constant 0 : index
    %1 = vector.load %arg2[%c0_1, %c0_2] : memref<72x16xbf16, #tpu.memory_space<vmem>>, vector<72x16xbf16>
    %cst = arith.constant dense<0.000000e+00> : vector<32x16xf32>
    %2 = tpu.matmul %0, %1, %cst {dimension_numbers = #tpu.dot_dimension_numbers<[1], [0], [0], [1], [0, 0, 1, 1], [], []>} : vector<32x72xbf16>, vector<72x16xbf16>, vector<32x16xf32> -> vector<32x16xf32>
    %c0_3 = arith.constant 0 : index
    %c0_4 = arith.constant 0 : index
    %3 = vector.load %arg3[%c0_3, %c0_4] : memref<1x16xf32, #tpu.memory_space<vmem>>, vector<1x16xf32>
    %4 = vector.broadcast %3 : vector<1x16xf32> to vector<32x16xf32>
    %5 = arith.addf %2, %4 : vector<32x16xf32>
    %cst_5 = arith.constant 0.000000e+00 : f32
    %6 = vector.broadcast %cst_5 : f32 to vector<32x16xf32>
    %7 = arith.cmpf oge, %5, %6 : vector<32x16xf32>
    %cst_6 = arith.constant 0.00999999977 : f32
    %8 = vector.broadcast %cst_6 : f32 to vector<32x16xf32>
    %9 = arith.mulf %8, %5 : vector<32x16xf32>
    %10 = arith.select %7, %5, %9 : vector<32x16xi1>, vector<32x16xf32>
    %11 = arith.truncf %10 : vector<32x16xf32> to vector<32x16xbf16>
    %c0_7 = arith.constant 0 : index
    %c0_8 = arith.constant 0 : index
    %12 = vector.load %arg4[%c0_7, %c0_8] : memref<32x16xbf16, #tpu.memory_space<vmem>>, vector<32x16xbf16>
    tpu.vector_store %arg4[%c0_7, %c0_8], %11 {strides = array<i32>} : memref<32x16xbf16, #tpu.memory_space<vmem>>, vector<32x16xbf16>,
    return
  }
  func.func @transform_0(%arg0: i32) -> (i32, i32) {
    %c0_i32 = arith.constant 0 : i32
    %c0_i32_0 = arith.constant 0 : i32
    return %arg0, %c0_i32 : i32, i32
  }
  func.func @transform_1(%arg0: i32) -> (i32, i32) {
    %c0_i32 = arith.constant 0 : i32
    %c0_i32_0 = arith.constant 0 : i32
    %c0_i32_1 = arith.constant 0 : i32
    return %c0_i32, %c0_i32_0 : i32, i32
  }
  func.func @transform_2(%arg0: i32) -> (i32, i32) {
    %c0_i32 = arith.constant 0 : i32
    %c0_i32_0 = arith.constant 0 : i32
    %c0_i32_1 = arith.constant 0 : i32
    return %c0_i32, %c0_i32_0 : i32, i32
  }
  func.func @transform_3(%arg0: i32) -> (i32, i32) {
    %c0_i32 = arith.constant 0 : i32
    %c0_i32_0 = arith.constant 0 : i32
    return %arg0, %c0_i32 : i32, i32
  }
}

module attributes {stable_mosaic.version = 11 : i64} {
  func.func @_matmul_bias_act_kernel(%arg0: i32, %arg1: memref<8x144xbf16, #tpu.memory_space<vmem>>, %arg2: memref<144x32xbf16, #tpu.memory_space<vmem>>, %arg3: memref<1x32xf32, #tpu.memory_space<vmem>>, %arg4: memref<8x32xbf16, #tpu.memory_space<vmem>>) attributes {dimension_semantics = [#tpu.dimension_semantics<parallel>], iteration_bounds = array<i64: 1>, scalar_prefetch = 0 : i64, scratch_operands = 0 : i64, tpu.core_type = #tpu.core_type<tc>, window_params = [{transform_indices = @transform_0, window_bounds = array<i64: 8, 144>}, {pipeline_mode = #tpu.pipeline_mode<synchronous>, transform_indices = @transform_1, window_bounds = array<i64: 144, 32>}, {pipeline_mode = #tpu.pipeline_mode<synchronous>, transform_indices = @transform_2, window_bounds = array<i64: 1, 32>}, {transform_indices = @transform_3, window_bounds = array<i64: 8, 32>}]} {
    %c0 = arith.constant 0 : index
    %c0_0 = arith.constant 0 : index
    %0 = vector.load %arg1[%c0, %c0_0] : memref<8x144xbf16, #tpu.memory_space<vmem>>, vector<8x144xbf16>
    %c0_1 = arith.constant 0 : index
    %c0_2 = arith.constant 0 : index
    %1 = vector.load %arg2[%c0_1, %c0_2] : memref<144x32xbf16, #tpu.memory_space<vmem>>, vector<144x32xbf16>
    %cst = arith.constant dense<0.000000e+00> : vector<8x32xf32>
    %2 = tpu.matmul %0, %1, %cst {dimension_numbers = #tpu.dot_dimension_numbers<[1], [0], [0], [1], [0, 0, 1, 1], [], []>} : vector<8x144xbf16>, vector<144x32xbf16>, vector<8x32xf32> -> vector<8x32xf32>
    %c0_3 = arith.constant 0 : index
    %c0_4 = arith.constant 0 : index
    %3 = vector.load %arg3[%c0_3, %c0_4] : memref<1x32xf32, #tpu.memory_space<vmem>>, vector<1x32xf32>
    %4 = vector.broadcast %3 : vector<1x32xf32> to vector<8x32xf32>
    %5 = arith.addf %2, %4 : vector<8x32xf32>
    %cst_5 = arith.constant 0.000000e+00 : f32
    %6 = vector.broadcast %cst_5 : f32 to vector<8x32xf32>
    %7 = arith.cmpf oge, %5, %6 : vector<8x32xf32>
    %cst_6 = arith.constant 0.00999999977 : f32
    %8 = vector.broadcast %cst_6 : f32 to vector<8x32xf32>
    %9 = arith.mulf %8, %5 : vector<8x32xf32>
    %10 = arith.select %7, %5, %9 : vector<8x32xi1>, vector<8x32xf32>
    %11 = arith.truncf %10 : vector<8x32xf32> to vector<8x32xbf16>
    %c0_7 = arith.constant 0 : index
    %c0_8 = arith.constant 0 : index
    %12 = vector.load %arg4[%c0_7, %c0_8] : memref<8x32xbf16, #tpu.memory_space<vmem>>, vector<8x32xbf16>
    tpu.vector_store %arg4[%c0_7, %c0_8], %11 {strides = array<i32>} : memref<8x32xbf16, #tpu.memory_space<vmem>>, vector<8x32xbf16>,
    return
  }
  func.func @transform_0(%arg0: i32) -> (i32, i32) {
    %c0_i32 = arith.constant 0 : i32
    %c0_i32_0 = arith.constant 0 : i32
    return %arg0, %c0_i32 : i32, i32
  }
  func.func @transform_1(%arg0: i32) -> (i32, i32) {
    %c0_i32 = arith.constant 0 : i32
    %c0_i32_0 = arith.constant 0 : i32
    %c0_i32_1 = arith.constant 0 : i32
    return %c0_i32, %c0_i32_0 : i32, i32
  }
  func.func @transform_2(%arg0: i32) -> (i32, i32) {
    %c0_i32 = arith.constant 0 : i32
    %c0_i32_0 = arith.constant 0 : i32
    %c0_i32_1 = arith.constant 0 : i32
    return %c0_i32, %c0_i32_0 : i32, i32
  }
  func.func @transform_3(%arg0: i32) -> (i32, i32) {
    %c0_i32 = arith.constant 0 : i32
    %c0_i32_0 = arith.constant 0 : i32
    return %arg0, %c0_i32 : i32, i32
  }
}

module attributes {stable_mosaic.version = 11 : i64} {
  func.func @_latent_head_kernel(%arg0: i32, %arg1: memref<2x128xf32, #tpu.memory_space<vmem>>, %arg2: memref<128x16xf32, #tpu.memory_space<vmem>>, %arg3: memref<128x16xf32, #tpu.memory_space<vmem>>, %arg4: memref<16x128xf32, #tpu.memory_space<vmem>>, %arg5: memref<1x16xf32, #tpu.memory_space<vmem>>, %arg6: memref<1x16xf32, #tpu.memory_space<vmem>>, %arg7: memref<1x128xf32, #tpu.memory_space<vmem>>, %arg8: memref<2x16xf32, #tpu.memory_space<vmem>>, %arg9: memref<2x16xf32, #tpu.memory_space<vmem>>, %arg10: memref<2x16xf32, #tpu.memory_space<vmem>>, %arg11: memref<2x128xbf16, #tpu.memory_space<vmem>>) attributes {dimension_semantics = [#tpu.dimension_semantics<arbitrary>], iteration_bounds = array<i64: 1>, scalar_prefetch = 0 : i64, scratch_operands = 0 : i64, tpu.core_type = #tpu.core_type<tc>, window_params = [{pipeline_mode = #tpu.pipeline_mode<synchronous>, transform_indices = @transform_0, window_bounds = array<i64: 2, 128>}, {pipeline_mode = #tpu.pipeline_mode<synchronous>, transform_indices = @transform_1, window_bounds = array<i64: 128, 16>}, {pipeline_mode = #tpu.pipeline_mode<synchronous>, transform_indices = @transform_2, window_bounds = array<i64: 128, 16>}, {pipeline_mode = #tpu.pipeline_mode<synchronous>, transform_indices = @transform_3, window_bounds = array<i64: 16, 128>}, {pipeline_mode = #tpu.pipeline_mode<synchronous>, transform_indices = @transform_4, window_bounds = array<i64: 1, 16>}, {pipeline_mode = #tpu.pipeline_mode<synchronous>, transform_indices = @transform_5, window_bounds = array<i64: 1, 16>}, {pipeline_mode = #tpu.pipeline_mode<synchronous>, transform_indices = @transform_6, window_bounds = array<i64: 1, 128>}, {pipeline_mode = #tpu.pipeline_mode<synchronous>, transform_indices = @transform_7, window_bounds = array<i64: 2, 16>}, {pipeline_mode = #tpu.pipeline_mode<synchronous>, transform_indices = @transform_8, window_bounds = array<i64: 2, 16>}, {pipeline_mode = #tpu.pipeline_mode<synchronous>, transform_indices = @transform_9, window_bounds = array<i64: 2, 16>}, {pipeline_mode = #tpu.pipeline_mode<synchronous>, transform_indices = @transform_10, window_bounds = array<i64: 2, 128>}]} {
    %c0 = arith.constant 0 : index
    %c0_0 = arith.constant 0 : index
    %0 = vector.load %arg1[%c0, %c0_0] : memref<2x128xf32, #tpu.memory_space<vmem>>, vector<2x128xf32>
    %c0_1 = arith.constant 0 : index
    %c0_2 = arith.constant 0 : index
    %1 = vector.load %arg2[%c0_1, %c0_2] : memref<128x16xf32, #tpu.memory_space<vmem>>, vector<128x16xf32>
    %cst = arith.constant dense<0.000000e+00> : vector<2x16xf32>
    %2 = tpu.matmul %0, %1, %cst {dimension_numbers = #tpu.dot_dimension_numbers<[1], [0], [0], [1], [0, 0, 1, 1], [], []>} : vector<2x128xf32>, vector<128x16xf32>, vector<2x16xf32> -> vector<2x16xf32>
    %c0_3 = arith.constant 0 : index
    %c0_4 = arith.constant 0 : index
    %3 = vector.load %arg5[%c0_3, %c0_4] : memref<1x16xf32, #tpu.memory_space<vmem>>, vector<1x16xf32>
    %4 = vector.broadcast %3 : vector<1x16xf32> to vector<2x16xf32>
    %5 = arith.addf %2, %4 : vector<2x16xf32>
    %c0_5 = arith.constant 0 : index
    %c0_6 = arith.constant 0 : index
    %6 = vector.load %arg3[%c0_5, %c0_6] : memref<128x16xf32, #tpu.memory_space<vmem>>, vector<128x16xf32>
    %cst_7 = arith.constant dense<0.000000e+00> : vector<2x16xf32>
    %7 = tpu.matmul %0, %6, %cst_7 {dimension_numbers = #tpu.dot_dimension_numbers<[1], [0], [0], [1], [0, 0, 1, 1], [], []>} : vector<2x128xf32>, vector<128x16xf32>, vector<2x16xf32> -> vector<2x16xf32>
    %c0_8 = arith.constant 0 : index
    %c0_9 = arith.constant 0 : index
    %8 = vector.load %arg6[%c0_8, %c0_9] : memref<1x16xf32, #tpu.memory_space<vmem>>, vector<1x16xf32>
    %9 = vector.broadcast %8 : vector<1x16xf32> to vector<2x16xf32>
    %10 = arith.addf %7, %9 : vector<2x16xf32>
    %c0_10 = arith.constant 0 : index
    %c0_11 = arith.constant 0 : index
    %11 = vector.load %arg8[%c0_10, %c0_11] : memref<2x16xf32, #tpu.memory_space<vmem>>, vector<2x16xf32>
    %cst_12 = arith.constant 5.000000e-01 : f32
    %12 = vector.broadcast %cst_12 : f32 to vector<2x16xf32>
    %13 = arith.mulf %12, %10 : vector<2x16xf32>
    %14 = math.exp %13 : vector<2x16xf32>
    %15 = arith.mulf %11, %14 : vector<2x16xf32>
    %16 = arith.addf %15, %5 : vector<2x16xf32>
    %c0_13 = arith.constant 0 : index
    %c0_14 = arith.constant 0 : index
    %17 = vector.load %arg4[%c0_13, %c0_14] : memref<16x128xf32, #tpu.memory_space<vmem>>, vector<16x128xf32>
    %cst_15 = arith.constant dense<0.000000e+00> : vector<2x128xf32>
    %18 = tpu.matmul %16, %17, %cst_15 {dimension_numbers = #tpu.dot_dimension_numbers<[1], [0], [0], [1], [0, 0, 1, 1], [], []>} : vector<2x16xf32>, vector<16x128xf32>, vector<2x128xf32> -> vector<2x128xf32>
    %c0_16 = arith.constant 0 : index
    %c0_17 = arith.constant 0 : index
    %19 = vector.load %arg7[%c0_16, %c0_17] : memref<1x128xf32, #tpu.memory_space<vmem>>, vector<1x128xf32>
    %20 = vector.broadcast %19 : vector<1x128xf32> to vector<2x128xf32>
    %21 = arith.addf %18, %20 : vector<2x128xf32>
    %c0_18 = arith.constant 0 : index
    %c0_19 = arith.constant 0 : index
    %22 = vector.load %arg9[%c0_18, %c0_19] : memref<2x16xf32, #tpu.memory_space<vmem>>, vector<2x16xf32>
    tpu.vector_store %arg9[%c0_18, %c0_19], %5 {strides = array<i32>} : memref<2x16xf32, #tpu.memory_space<vmem>>, vector<2x16xf32>,
    %c0_20 = arith.constant 0 : index
    %c0_21 = arith.constant 0 : index
    %23 = vector.load %arg10[%c0_20, %c0_21] : memref<2x16xf32, #tpu.memory_space<vmem>>, vector<2x16xf32>
    tpu.vector_store %arg10[%c0_20, %c0_21], %10 {strides = array<i32>} : memref<2x16xf32, #tpu.memory_space<vmem>>, vector<2x16xf32>,
    %24 = arith.truncf %21 : vector<2x128xf32> to vector<2x128xbf16>
    %c0_22 = arith.constant 0 : index
    %c0_23 = arith.constant 0 : index
    %25 = vector.load %arg11[%c0_22, %c0_23] : memref<2x128xbf16, #tpu.memory_space<vmem>>, vector<2x128xbf16>
    tpu.vector_store %arg11[%c0_22, %c0_23], %24 {strides = array<i32>} : memref<2x128xbf16, #tpu.memory_space<vmem>>, vector<2x128xbf16>,
    return
  }
  func.func @transform_0(%arg0: i32) -> (i32, i32) {
    %c0_i32 = arith.constant 0 : i32
    %c0_i32_0 = arith.constant 0 : i32
    %c0_i32_1 = arith.constant 0 : i32
    return %c0_i32, %c0_i32_0 : i32, i32
  }
  func.func @transform_1(%arg0: i32) -> (i32, i32) {
    %c0_i32 = arith.constant 0 : i32
    %c0_i32_0 = arith.constant 0 : i32
    %c0_i32_1 = arith.constant 0 : i32
    return %c0_i32, %c0_i32_0 : i32, i32
  }
  func.func @transform_2(%arg0: i32) -> (i32, i32) {
    %c0_i32 = arith.constant 0 : i32
    %c0_i32_0 = arith.constant 0 : i32
    %c0_i32_1 = arith.constant 0 : i32
    return %c0_i32, %c0_i32_0 : i32, i32
  }
  func.func @transform_3(%arg0: i32) -> (i32, i32) {
    %c0_i32 = arith.constant 0 : i32
    %c0_i32_0 = arith.constant 0 : i32
    %c0_i32_1 = arith.constant 0 : i32
    return %c0_i32, %c0_i32_0 : i32, i32
  }
  func.func @transform_4(%arg0: i32) -> (i32, i32) {
    %c0_i32 = arith.constant 0 : i32
    %c0_i32_0 = arith.constant 0 : i32
    %c0_i32_1 = arith.constant 0 : i32
    return %c0_i32, %c0_i32_0 : i32, i32
  }
  func.func @transform_5(%arg0: i32) -> (i32, i32) {
    %c0_i32 = arith.constant 0 : i32
    %c0_i32_0 = arith.constant 0 : i32
    %c0_i32_1 = arith.constant 0 : i32
    return %c0_i32, %c0_i32_0 : i32, i32
  }
  func.func @transform_6(%arg0: i32) -> (i32, i32) {
    %c0_i32 = arith.constant 0 : i32
    %c0_i32_0 = arith.constant 0 : i32
    %c0_i32_1 = arith.constant 0 : i32
    return %c0_i32, %c0_i32_0 : i32, i32
  }
  func.func @transform_7(%arg0: i32) -> (i32, i32) {
    %c0_i32 = arith.constant 0 : i32
    %c0_i32_0 = arith.constant 0 : i32
    %c0_i32_1 = arith.constant 0 : i32
    return %c0_i32, %c0_i32_0 : i32, i32
  }
  func.func @transform_8(%arg0: i32) -> (i32, i32) {
    %c0_i32 = arith.constant 0 : i32
    %c0_i32_0 = arith.constant 0 : i32
    %c0_i32_1 = arith.constant 0 : i32
    return %c0_i32, %c0_i32_0 : i32, i32
  }
  func.func @transform_9(%arg0: i32) -> (i32, i32) {
    %c0_i32 = arith.constant 0 : i32
    %c0_i32_0 = arith.constant 0 : i32
    %c0_i32_1 = arith.constant 0 : i32
    return %c0_i32, %c0_i32_0 : i32, i32
  }
  func.func @transform_10(%arg0: i32) -> (i32, i32) {
    %c0_i32 = arith.constant 0 : i32
    %c0_i32_0 = arith.constant 0 : i32
    %c0_i32_1 = arith.constant 0 : i32
    return %c0_i32, %c0_i32_0 : i32, i32
  }
}

module attributes {stable_mosaic.version = 11 : i64} {
  func.func @_matmul_bias_act_kernel(%arg0: i32, %arg1: memref<8x128xbf16, #tpu.memory_space<vmem>>, %arg2: memref<128x64xbf16, #tpu.memory_space<vmem>>, %arg3: memref<1x64xf32, #tpu.memory_space<vmem>>, %arg4: memref<8x64xbf16, #tpu.memory_space<vmem>>) attributes {dimension_semantics = [#tpu.dimension_semantics<parallel>], iteration_bounds = array<i64: 1>, scalar_prefetch = 0 : i64, scratch_operands = 0 : i64, tpu.core_type = #tpu.core_type<tc>, window_params = [{transform_indices = @transform_0, window_bounds = array<i64: 8, 128>}, {pipeline_mode = #tpu.pipeline_mode<synchronous>, transform_indices = @transform_1, window_bounds = array<i64: 128, 64>}, {pipeline_mode = #tpu.pipeline_mode<synchronous>, transform_indices = @transform_2, window_bounds = array<i64: 1, 64>}, {transform_indices = @transform_3, window_bounds = array<i64: 8, 64>}]} {
    %c0 = arith.constant 0 : index
    %c0_0 = arith.constant 0 : index
    %0 = vector.load %arg1[%c0, %c0_0] : memref<8x128xbf16, #tpu.memory_space<vmem>>, vector<8x128xbf16>
    %c0_1 = arith.constant 0 : index
    %c0_2 = arith.constant 0 : index
    %1 = vector.load %arg2[%c0_1, %c0_2] : memref<128x64xbf16, #tpu.memory_space<vmem>>, vector<128x64xbf16>
    %cst = arith.constant dense<0.000000e+00> : vector<8x64xf32>
    %2 = tpu.matmul %0, %1, %cst {dimension_numbers = #tpu.dot_dimension_numbers<[1], [0], [0], [1], [0, 0, 1, 1], [], []>} : vector<8x128xbf16>, vector<128x64xbf16>, vector<8x64xf32> -> vector<8x64xf32>
    %c0_3 = arith.constant 0 : index
    %c0_4 = arith.constant 0 : index
    %3 = vector.load %arg3[%c0_3, %c0_4] : memref<1x64xf32, #tpu.memory_space<vmem>>, vector<1x64xf32>
    %4 = vector.broadcast %3 : vector<1x64xf32> to vector<8x64xf32>
    %5 = arith.addf %2, %4 : vector<8x64xf32>
    %cst_5 = arith.constant 0.000000e+00 : f32
    %6 = vector.broadcast %cst_5 : f32 to vector<8x64xf32>
    %7 = arith.cmpf oge, %5, %6 : vector<8x64xf32>
    %cst_6 = arith.constant 0.00999999977 : f32
    %8 = vector.broadcast %cst_6 : f32 to vector<8x64xf32>
    %9 = arith.mulf %8, %5 : vector<8x64xf32>
    %10 = arith.select %7, %5, %9 : vector<8x64xi1>, vector<8x64xf32>
    %11 = arith.truncf %10 : vector<8x64xf32> to vector<8x64xbf16>
    %c0_7 = arith.constant 0 : index
    %c0_8 = arith.constant 0 : index
    %12 = vector.load %arg4[%c0_7, %c0_8] : memref<8x64xbf16, #tpu.memory_space<vmem>>, vector<8x64xbf16>
    tpu.vector_store %arg4[%c0_7, %c0_8], %11 {strides = array<i32>} : memref<8x64xbf16, #tpu.memory_space<vmem>>, vector<8x64xbf16>,
    return
  }
  func.func @transform_0(%arg0: i32) -> (i32, i32) {
    %c0_i32 = arith.constant 0 : i32
    %c0_i32_0 = arith.constant 0 : i32
    return %arg0, %c0_i32 : i32, i32
  }
  func.func @transform_1(%arg0: i32) -> (i32, i32) {
    %c0_i32 = arith.constant 0 : i32
    %c0_i32_0 = arith.constant 0 : i32
    %c0_i32_1 = arith.constant 0 : i32
    return %c0_i32, %c0_i32_0 : i32, i32
  }
  func.func @transform_2(%arg0: i32) -> (i32, i32) {
    %c0_i32 = arith.constant 0 : i32
    %c0_i32_0 = arith.constant 0 : i32
    %c0_i32_1 = arith.constant 0 : i32
    return %c0_i32, %c0_i32_0 : i32, i32
  }
  func.func @transform_3(%arg0: i32) -> (i32, i32) {
    %c0_i32 = arith.constant 0 : i32
    %c0_i32_0 = arith.constant 0 : i32
    return %arg0, %c0_i32 : i32, i32
  }
}

module attributes {stable_mosaic.version = 11 : i64} {
  func.func @_matmul_bias_act_kernel(%arg0: i32, %arg1: memref<32x64xbf16, #tpu.memory_space<vmem>>, %arg2: memref<64x32xbf16, #tpu.memory_space<vmem>>, %arg3: memref<1x32xf32, #tpu.memory_space<vmem>>, %arg4: memref<32x32xbf16, #tpu.memory_space<vmem>>) attributes {dimension_semantics = [#tpu.dimension_semantics<parallel>], iteration_bounds = array<i64: 1>, scalar_prefetch = 0 : i64, scratch_operands = 0 : i64, tpu.core_type = #tpu.core_type<tc>, window_params = [{transform_indices = @transform_0, window_bounds = array<i64: 32, 64>}, {pipeline_mode = #tpu.pipeline_mode<synchronous>, transform_indices = @transform_1, window_bounds = array<i64: 64, 32>}, {pipeline_mode = #tpu.pipeline_mode<synchronous>, transform_indices = @transform_2, window_bounds = array<i64: 1, 32>}, {transform_indices = @transform_3, window_bounds = array<i64: 32, 32>}]} {
    %c0 = arith.constant 0 : index
    %c0_0 = arith.constant 0 : index
    %0 = vector.load %arg1[%c0, %c0_0] : memref<32x64xbf16, #tpu.memory_space<vmem>>, vector<32x64xbf16>
    %c0_1 = arith.constant 0 : index
    %c0_2 = arith.constant 0 : index
    %1 = vector.load %arg2[%c0_1, %c0_2] : memref<64x32xbf16, #tpu.memory_space<vmem>>, vector<64x32xbf16>
    %cst = arith.constant dense<0.000000e+00> : vector<32x32xf32>
    %2 = tpu.matmul %0, %1, %cst {dimension_numbers = #tpu.dot_dimension_numbers<[1], [0], [0], [1], [0, 0, 1, 1], [], []>} : vector<32x64xbf16>, vector<64x32xbf16>, vector<32x32xf32> -> vector<32x32xf32>
    %c0_3 = arith.constant 0 : index
    %c0_4 = arith.constant 0 : index
    %3 = vector.load %arg3[%c0_3, %c0_4] : memref<1x32xf32, #tpu.memory_space<vmem>>, vector<1x32xf32>
    %4 = vector.broadcast %3 : vector<1x32xf32> to vector<32x32xf32>
    %5 = arith.addf %2, %4 : vector<32x32xf32>
    %cst_5 = arith.constant 0.000000e+00 : f32
    %6 = vector.broadcast %cst_5 : f32 to vector<32x32xf32>
    %7 = arith.cmpf oge, %5, %6 : vector<32x32xf32>
    %cst_6 = arith.constant 0.00999999977 : f32
    %8 = vector.broadcast %cst_6 : f32 to vector<32x32xf32>
    %9 = arith.mulf %8, %5 : vector<32x32xf32>
    %10 = arith.select %7, %5, %9 : vector<32x32xi1>, vector<32x32xf32>
    %11 = arith.truncf %10 : vector<32x32xf32> to vector<32x32xbf16>
    %c0_7 = arith.constant 0 : index
    %c0_8 = arith.constant 0 : index
    %12 = vector.load %arg4[%c0_7, %c0_8] : memref<32x32xbf16, #tpu.memory_space<vmem>>, vector<32x32xbf16>
    tpu.vector_store %arg4[%c0_7, %c0_8], %11 {strides = array<i32>} : memref<32x32xbf16, #tpu.memory_space<vmem>>, vector<32x32xbf16>,
    return
  }
  func.func @transform_0(%arg0: i32) -> (i32, i32) {
    %c0_i32 = arith.constant 0 : i32
    %c0_i32_0 = arith.constant 0 : i32
    return %arg0, %c0_i32 : i32, i32
  }
  func.func @transform_1(%arg0: i32) -> (i32, i32) {
    %c0_i32 = arith.constant 0 : i32
    %c0_i32_0 = arith.constant 0 : i32
    %c0_i32_1 = arith.constant 0 : i32
    return %c0_i32, %c0_i32_0 : i32, i32
  }
  func.func @transform_2(%arg0: i32) -> (i32, i32) {
    %c0_i32 = arith.constant 0 : i32
    %c0_i32_0 = arith.constant 0 : i32
    %c0_i32_1 = arith.constant 0 : i32
    return %c0_i32, %c0_i32_0 : i32, i32
  }
  func.func @transform_3(%arg0: i32) -> (i32, i32) {
    %c0_i32 = arith.constant 0 : i32
    %c0_i32_0 = arith.constant 0 : i32
    return %arg0, %c0_i32 : i32, i32
  }
}

module attributes {stable_mosaic.version = 11 : i64} {
  func.func @_matmul_bias_act_kernel(%arg0: i32, %arg1: memref<128x32xbf16, #tpu.memory_space<vmem>>, %arg2: memref<32x32xbf16, #tpu.memory_space<vmem>>, %arg3: memref<1x32xf32, #tpu.memory_space<vmem>>, %arg4: memref<128x32xbf16, #tpu.memory_space<vmem>>) attributes {dimension_semantics = [#tpu.dimension_semantics<parallel>], iteration_bounds = array<i64: 1>, scalar_prefetch = 0 : i64, scratch_operands = 0 : i64, tpu.core_type = #tpu.core_type<tc>, window_params = [{transform_indices = @transform_0, window_bounds = array<i64: 128, 32>}, {pipeline_mode = #tpu.pipeline_mode<synchronous>, transform_indices = @transform_1, window_bounds = array<i64: 32, 32>}, {pipeline_mode = #tpu.pipeline_mode<synchronous>, transform_indices = @transform_2, window_bounds = array<i64: 1, 32>}, {transform_indices = @transform_3, window_bounds = array<i64: 128, 32>}]} {
    %c0 = arith.constant 0 : index
    %c0_0 = arith.constant 0 : index
    %0 = vector.load %arg1[%c0, %c0_0] : memref<128x32xbf16, #tpu.memory_space<vmem>>, vector<128x32xbf16>
    %c0_1 = arith.constant 0 : index
    %c0_2 = arith.constant 0 : index
    %1 = vector.load %arg2[%c0_1, %c0_2] : memref<32x32xbf16, #tpu.memory_space<vmem>>, vector<32x32xbf16>
    %cst = arith.constant dense<0.000000e+00> : vector<128x32xf32>
    %2 = tpu.matmul %0, %1, %cst {dimension_numbers = #tpu.dot_dimension_numbers<[1], [0], [0], [1], [0, 0, 1, 1], [], []>} : vector<128x32xbf16>, vector<32x32xbf16>, vector<128x32xf32> -> vector<128x32xf32>
    %c0_3 = arith.constant 0 : index
    %c0_4 = arith.constant 0 : index
    %3 = vector.load %arg3[%c0_3, %c0_4] : memref<1x32xf32, #tpu.memory_space<vmem>>, vector<1x32xf32>
    %4 = vector.broadcast %3 : vector<1x32xf32> to vector<128x32xf32>
    %5 = arith.addf %2, %4 : vector<128x32xf32>
    %cst_5 = arith.constant 0.000000e+00 : f32
    %6 = vector.broadcast %cst_5 : f32 to vector<128x32xf32>
    %7 = arith.cmpf oge, %5, %6 : vector<128x32xf32>
    %cst_6 = arith.constant 0.00999999977 : f32
    %8 = vector.broadcast %cst_6 : f32 to vector<128x32xf32>
    %9 = arith.mulf %8, %5 : vector<128x32xf32>
    %10 = arith.select %7, %5, %9 : vector<128x32xi1>, vector<128x32xf32>
    %11 = arith.truncf %10 : vector<128x32xf32> to vector<128x32xbf16>
    %c0_7 = arith.constant 0 : index
    %c0_8 = arith.constant 0 : index
    %12 = vector.load %arg4[%c0_7, %c0_8] : memref<128x32xbf16, #tpu.memory_space<vmem>>, vector<128x32xbf16>
    tpu.vector_store %arg4[%c0_7, %c0_8], %11 {strides = array<i32>} : memref<128x32xbf16, #tpu.memory_space<vmem>>, vector<128x32xbf16>,
    return
  }
  func.func @transform_0(%arg0: i32) -> (i32, i32) {
    %c0_i32 = arith.constant 0 : i32
    %c0_i32_0 = arith.constant 0 : i32
    return %arg0, %c0_i32 : i32, i32
  }
  func.func @transform_1(%arg0: i32) -> (i32, i32) {
    %c0_i32 = arith.constant 0 : i32
    %c0_i32_0 = arith.constant 0 : i32
    %c0_i32_1 = arith.constant 0 : i32
    return %c0_i32, %c0_i32_0 : i32, i32
  }
  func.func @transform_2(%arg0: i32) -> (i32, i32) {
    %c0_i32 = arith.constant 0 : i32
    %c0_i32_0 = arith.constant 0 : i32
    %c0_i32_1 = arith.constant 0 : i32
    return %c0_i32, %c0_i32_0 : i32, i32
  }
  func.func @transform_3(%arg0: i32) -> (i32, i32) {
    %c0_i32 = arith.constant 0 : i32
    %c0_i32_0 = arith.constant 0 : i32
    return %arg0, %c0_i32 : i32, i32
  }
}

module attributes {stable_mosaic.version = 11 : i64} {
  func.func @_matmul_bias_act_kernel(%arg0: i32, %arg1: memref<512x72xbf16, #tpu.memory_space<vmem>>, %arg2: memref<72x3xbf16, #tpu.memory_space<vmem>>, %arg3: memref<1x3xf32, #tpu.memory_space<vmem>>, %arg4: memref<512x3xf32, #tpu.memory_space<vmem>>) attributes {dimension_semantics = [#tpu.dimension_semantics<parallel>], iteration_bounds = array<i64: 1>, scalar_prefetch = 0 : i64, scratch_operands = 0 : i64, tpu.core_type = #tpu.core_type<tc>, window_params = [{transform_indices = @transform_0, window_bounds = array<i64: 512, 72>}, {pipeline_mode = #tpu.pipeline_mode<synchronous>, transform_indices = @transform_1, window_bounds = array<i64: 72, 3>}, {pipeline_mode = #tpu.pipeline_mode<synchronous>, transform_indices = @transform_2, window_bounds = array<i64: 1, 3>}, {transform_indices = @transform_3, window_bounds = array<i64: 512, 3>}]} {
    %c0 = arith.constant 0 : index
    %c0_0 = arith.constant 0 : index
    %0 = vector.load %arg1[%c0, %c0_0] : memref<512x72xbf16, #tpu.memory_space<vmem>>, vector<512x72xbf16>
    %c0_1 = arith.constant 0 : index
    %c0_2 = arith.constant 0 : index
    %1 = vector.load %arg2[%c0_1, %c0_2] : memref<72x3xbf16, #tpu.memory_space<vmem>>, vector<72x3xbf16>
    %cst = arith.constant dense<0.000000e+00> : vector<512x3xf32>
    %2 = tpu.matmul %0, %1, %cst {dimension_numbers = #tpu.dot_dimension_numbers<[1], [0], [0], [1], [0, 0, 1, 1], [], []>} : vector<512x72xbf16>, vector<72x3xbf16>, vector<512x3xf32> -> vector<512x3xf32>
    %c0_3 = arith.constant 0 : index
    %c0_4 = arith.constant 0 : index
    %3 = vector.load %arg3[%c0_3, %c0_4] : memref<1x3xf32, #tpu.memory_space<vmem>>, vector<1x3xf32>
    %4 = vector.broadcast %3 : vector<1x3xf32> to vector<512x3xf32>
    %5 = arith.addf %2, %4 : vector<512x3xf32>
    %6 = math.tanh %5 : vector<512x3xf32>
    %c0_5 = arith.constant 0 : index
    %c0_6 = arith.constant 0 : index
    %7 = vector.load %arg4[%c0_5, %c0_6] : memref<512x3xf32, #tpu.memory_space<vmem>>, vector<512x3xf32>
    tpu.vector_store %arg4[%c0_5, %c0_6], %6 {strides = array<i32>} : memref<512x3xf32, #tpu.memory_space<vmem>>, vector<512x3xf32>,
    return
  }
  func.func @transform_0(%arg0: i32) -> (i32, i32) {
    %c0_i32 = arith.constant 0 : i32
    %c0_i32_0 = arith.constant 0 : i32
    return %arg0, %c0_i32 : i32, i32
  }
  func.func @transform_1(%arg0: i32) -> (i32, i32) {
    %c0_i32 = arith.constant 0 : i32
    %c0_i32_0 = arith.constant 0 : i32
    %c0_i32_1 = arith.constant 0 : i32
    return %c0_i32, %c0_i32_0 : i32, i32
  }
  func.func @transform_2(%arg0: i32) -> (i32, i32) {
    %c0_i32 = arith.constant 0 : i32
    %c0_i32_0 = arith.constant 0 : i32
    %c0_i32_1 = arith.constant 0 : i32
    return %c0_i32, %c0_i32_0 : i32, i32
  }
  func.func @transform_3(%arg0: i32) -> (i32, i32) {
    %c0_i32 = arith.constant 0 : i32
    %c0_i32_0 = arith.constant 0 : i32
    return %arg0, %c0_i32 : i32, i32
  }
}

</mosaic_0001>

<llo_original>
// kernel: _lambda_.8
$region0: #{_lambda_.8}
  #allocation0 [shape = 'u32[]', space=smem, size = 0x4, offset = 0x4, fixed_abs, tag = 'smem constant byte address 0x4 - core index']
  #allocation1 [shape = 'u32[144,128]{1,0:T(1,128)}', space=vmem, size = 0x12000, scoped, tag = 'internal scratch']
  %s0 = inlined_call_operand.vmem [shape: bf16[128,27], index: 0, kind: input, shape index: {}]
  %s1 = inlined_call_operand.vmem [shape: bf16[27,8], index: 1, kind: input, shape index: {}]
  %s2 = inlined_call_operand.vmem [shape: f32[1,8], index: 2, kind: input, shape index: {}]
  %s3 = inlined_call_operand.vmem [shape: bf16[128,8], index: 3, kind: output, shape index: {}]
  %s4 = sld [smem:[#allocation0]]
  $region22: #{_lambda_.8} parent=0
    _
  %s6 = ssub.s32 1, %s4
  %s7 = scalar_select 0, %s6, %s4
  // Predicated region
  $region2: #{_lambda_.8} parent=0 // pred_check
    _
  $region3: #{_lambda_.8} parent=0 // pred_check_branch
    %9 = sbr.rel (0) target = $region5
  $region4: #{_lambda_.8} parent=0 // pred_region
    _
  $region5: #{_lambda_.8} parent=0 // pred_fallthru
    _
  // Predicated region
  $region6: #{_lambda_.8} parent=0 // pred_check
    _
  $region7: #{_lambda_.8} parent=0 // pred_check_branch
    %11 = sbr.rel (0) target = $region9
  $region8: #{_lambda_.8} parent=0 // pred_region
    _
  $region9: #{_lambda_.8} parent=0 // pred_fallthru
    _
  // Predicated region
  $region10: #{_lambda_.8} parent=0 // pred_check
    _
  $region11: #{_lambda_.8} parent=0 // pred_check_branch
    %13 = sbr.rel (0) target = $region13
  $region12: #{_lambda_.8} parent=0 // pred_region
    _
  $region13: #{_lambda_.8} parent=0 // pred_fallthru
    _
  %v15 = vld [vmem:[%s0] sm:$0xf]
  %v16 = vld [vmem:[%s0 + $0x4] sm:$0xf]
  %v17 = vld [vmem:[%s0 + $0x8] sm:$0xf]
  %v18 = vld [vmem:[%s0 + $0xc] sm:$0xf]
  %v19 = vld [vmem:[%s0 + $0x10] sm:$0xf]
  %v20 = vld [vmem:[%s0 + $0x14] sm:$0xf]
  %v21 = vld [vmem:[%s0 + $0x18] sm:$0xf]
  %v22 = vld [vmem:[%s0 + $0x1c] sm:$0xf]
  %v23 = vld [vmem:[%s0 + $0x20] sm:$0xf]
  %v24 = vld [vmem:[%s0 + $0x24] sm:$0xf]
  %v25 = vld [vmem:[%s0 + $0x28] sm:$0xf]
  %v26 = vld [vmem:[%s0 + $0x2c] sm:$0xf]
  %v27 = vld [vmem:[%s0 + $0x30] sm:$0xf]
  %v28 = vld [vmem:[%s0 + $0x34] sm:$0xf]
  %v29 = vld [vmem:[%s0 + $0x38] sm:$0xf]
  %v30 = vld [vmem:[%s0 + $0x3c] sm:$0xf]
  %v31 = vld [vmem:[%s1] sm:$0xf]
  %v32 = vld [vmem:[%s1 + $0x4] sm:$0xf]
  %v33 = vld [vmem:[%s1 + $0x8] sm:$0xf]
  %v34 = vld [vmem:[%s1 + $0xc] sm:$0x3]
  %v35 = vld [vmem:[%s2] sm:$0x1]
  %v37 = vlaneseq
  %v38 = vshrl.u32 %v37, 7
  %v39 = vsub.s32 0, %v38
  %v40 = vrot.slane %v35, %v39
  %v58 = vunpack.c.l.b16 %v15
  %v59 = vunpack.c.l.b16 %v16
  %v60 = vunpack.c.l.b16 %v17
  %v61 = vunpack.c.l.b16 %v18
  %v62 = vunpack.c.l.b16 %v19
  %v63 = vunpack.c.l.b16 %v20
  %v64 = vunpack.c.l.b16 %v21
  %v65 = vunpack.c.l.b16 %v22
  %v66 = vunpack.c.l.b16 %v23
  %v67 = vunpack.c.l.b16 %v24
  %v68 = vunpack.c.l.b16 %v25
  %v69 = vunpack.c.l.b16 %v26
  %v70 = vunpack.c.l.b16 %v27
  %v71 = vunpack.c.l.b16 %v28
  %v72 = vunpack.c.l.b16 %v29
  %v73 = vunpack.c.l.b16 %v30
  %v74 = vpack.c.b16 %v59, %v58
  %v75 = vpack.c.b16 %v61, %v60
  %v76 = vpack.c.b16 %v63, %v62
  %v77 = vpack.c.b16 %v65, %v64
  %v78 = vpack.c.b16 %v67, %v66
  %v79 = vpack.c.b16 %v69, %v68
  %v80 = vpack.c.b16 %v71, %v70
  %v81 = vpack.c.b16 %v73, %v72
  %v86 = vunpack.c.l.b16 %v31
  %v87 = vunpack.c.l.b16 %v32
  %v88 = vunpack.c.l.b16 %v33
  %v89 = vunpack.c.l.b16 %v34
  %v90 = vpack.c.b16 %v87, %v86
  %v91 = vpack.c.b16 %v89, %v88
  %vm93 = vcmask 220160
  %v95 = vsel %vm93, %v74, 0
  %v98 = vsel %vm93, %v75, 0
  %v101 = vsel %vm93, %v76, 0
  %v104 = vsel %vm93, %v77, 0
  %v107 = vsel %vm93, %v78, 0
  %v110 = vsel %vm93, %v79, 0
  %v113 = vsel %vm93, %v80, 0
  %v116 = vsel %vm93, %v81, 0
  %vm118 = vcmask 1044480
  %vm119 = vcmask 1045504
  %v120 = vsel %vm118, 4294967295, 65535
  %v121 = vsel %vm119, %v120, 0
  %v123 = vand.u32 %v91, %v121
  %125 = vmatprep.subr.bf16.mxu0 0
  %126 = vmatpush1.bf16.msra.mxu0 0
  %127 = vmatprep.subr.bf16.mxu0 0
  %128 = vmatpush1.bf16.msra.mxu0 0
  %129 = vmatprep.subr.bf16.mxu0 0
  %130 = vmatpush1.bf16.msra.mxu0 0
  %131 = vmatprep.subr.bf16.mxu0 0
  %132 = vmatpush1.bf16.msra.mxu0 0
  %133 = vmatprep.subr.bf16.mxu0 0
  %134 = vmatpush1.bf16.msra.mxu0 0
  %135 = vmatprep.subr.bf16.mxu0 0
  %136 = vmatpush1.bf16.msra.mxu0 0
  %137 = vmatprep.subr.bf16.mxu0 0
  %138 = vmatpush1.bf16.msra.mxu0 %v123
  %139 = vmatprep.subr.bf16.mxu0 0
  %140 = vmatpush1.bf16.msra.mxu0 %v90
  %141 = vmatprep.subr.bf16.mxu0 0
  %142 = vmatpush2.bf16.msra.mxu0 0
  %143 = vmatprep.subr.bf16.mxu0 0
  %144 = vmatpush2.bf16.msra.mxu0 0
  %145 = vmatprep.subr.bf16.mxu0 0
  %146 = vmatpush2.bf16.msra.mxu0 0
  %147 = vmatprep.subr.bf16.mxu0 0
  %148 = vmatpush2.bf16.msra.mxu0 0
  %149 = vmatprep.subr.bf16.mxu0 0
  %150 = vmatpush2.bf16.msra.mxu0 0
  %151 = vmatprep.subr.bf16.mxu0 0
  %152 = vmatpush2.bf16.msra.mxu0 0
  %153 = vmatprep.subr.bf16.mxu0 0
  %154 = vmatpush2.bf16.msra.mxu0 0
  %155 = vmatprep.subr.bf16.mxu0 0
  %156 = vmatpush2.bf16.msra.mxu0 0
  %157 = vmatprep.mubr.bf16.mxu0 0
  %158 = vmatmul.mubr.bf16.gmra.mxu0 %v95
  %v159 = vpop.f32.mrf.mxu0
  %v160 = vadd.f32 %v40, %v159
  %v161 = vpop.f32.mrf.mxu0
  %v162 = vpop.f32.mrf.mxu0
  %v163 = vadd.f32 %v40, %v162
  %v164 = vpop.f32.mrf.mxu0
  %165 = vmatprep.mubr.bf16.mxu0 0
  %166 = vmatmul.mubr.bf16.gmra.mxu0 %v98
  %v167 = vpop.f32.mrf.mxu0
  %v168 = vadd.f32 %v40, %v167
  %v169 = vpop.f32.mrf.mxu0
  %v170 = vpop.f32.mrf.mxu0
  %v171 = vadd.f32 %v40, %v170
  %v172 = vpop.f32.mrf.mxu0
  %173 = vmatprep.mubr.bf16.mxu0 0
  %174 = vmatmul.mubr.bf16.gmra.mxu0 %v101
  %v175 = vpop.f32.mrf.mxu0
  %v176 = vadd.f32 %v40, %v175
  %v177 = vpop.f32.mrf.mxu0
  %v178 = vpop.f32.mrf.mxu0
  %v179 = vadd.f32 %v40, %v178
  %v180 = vpop.f32.mrf.mxu0
  %181 = vmatprep.mubr.bf16.mxu0 0
  %182 = vmatmul.mubr.bf16.gmra.mxu0 %v104
  %v183 = vpop.f32.mrf.mxu0
  %v184 = vadd.f32 %v40, %v183
  %v185 = vpop.f32.mrf.mxu0
  %v186 = vpop.f32.mrf.mxu0
  %v187 = vadd.f32 %v40, %v186
  %v188 = vpop.f32.mrf.mxu0
  %189 = vmatprep.mubr.bf16.mxu0 0
  %190 = vmatmul.mubr.bf16.gmra.mxu0 %v107
  %v191 = vpop.f32.mrf.mxu0
  %v192 = vadd.f32 %v40, %v191
  %v193 = vpop.f32.mrf.mxu0
  %v194 = vpop.f32.mrf.mxu0
  %v195 = vadd.f32 %v40, %v194
  %v196 = vpop.f32.mrf.mxu0
  %197 = vmatprep.mubr.bf16.mxu0 0
  %198 = vmatmul.mubr.bf16.gmra.mxu0 %v110
  %v199 = vpop.f32.mrf.mxu0
  %v200 = vadd.f32 %v40, %v199
  %v201 = vpop.f32.mrf.mxu0
  %v202 = vpop.f32.mrf.mxu0
  %v203 = vadd.f32 %v40, %v202
  %v204 = vpop.f32.mrf.mxu0
  %205 = vmatprep.mubr.bf16.mxu0 0
  %206 = vmatmul.mubr.bf16.gmra.mxu0 %v113
  %v207 = vpop.f32.mrf.mxu0
  %v208 = vadd.f32 %v40, %v207
  %v209 = vpop.f32.mrf.mxu0
  %v210 = vpop.f32.mrf.mxu0
  %v211 = vadd.f32 %v40, %v210
  %v212 = vpop.f32.mrf.mxu0
  %213 = vmatprep.mubr.bf16.mxu0 0
  %214 = vmatmul.mubr.bf16.gmra.mxu0 %v116
  %v215 = vpop.f32.mrf.mxu0
  %v216 = vadd.f32 %v40, %v215
  %v217 = vpop.f32.mrf.mxu0
  %v218 = vpop.f32.mrf.mxu0
  %v219 = vadd.f32 %v40, %v218
  %v220 = vpop.f32.mrf.mxu0
  %221 = vdwg.mxu0
  %vm222 = vcmp.ge.f32.partialorder %v160, 0.0
  %vm223 = vcmp.ge.f32.partialorder %v163, 0.0
  %vm224 = vcmp.ge.f32.partialorder %v168, 0.0
  %vm225 = vcmp.ge.f32.partialorder %v171, 0.0
  %vm226 = vcmp.ge.f32.partialorder %v176, 0.0
  %vm227 = vcmp.ge.f32.partialorder %v179, 0.0
  %vm228 = vcmp.ge.f32.partialorder %v184, 0.0
  %vm229 = vcmp.ge.f32.partialorder %v187, 0.0
  %vm230 = vcmp.ge.f32.partialorder %v192, 0.0
  %vm231 = vcmp.ge.f32.partialorder %v195, 0.0
  %vm232 = vcmp.ge.f32.partialorder %v200, 0.0
  %vm233 = vcmp.ge.f32.partialorder %v203, 0.0
  %vm234 = vcmp.ge.f32.partialorder %v208, 0.0
  %vm235 = vcmp.ge.f32.partialorder %v211, 0.0
  %vm236 = vcmp.ge.f32.partialorder %v216, 0.0
  %vm237 = vcmp.ge.f32.partialorder %v219, 0.0
  %v238 = vmul.f32 %v160, 0.01
  %v239 = vmul.f32 %v163, 0.01
  %v240 = vmul.f32 %v168, 0.01
  %v241 = vmul.f32 %v171, 0.01
  %v242 = vmul.f32 %v176, 0.01
  %v243 = vmul.f32 %v179, 0.01
  %v244 = vmul.f32 %v184, 0.01
  %v245 = vmul.f32 %v187, 0.01
  %v246 = vmul.f32 %v192, 0.01
  %v247 = vmul.f32 %v195, 0.01
  %v248 = vmul.f32 %v200, 0.01
  %v249 = vmul.f32 %v203, 0.01
  %v250 = vmul.f32 %v208, 0.01
  %v251 = vmul.f32 %v211, 0.01
  %v252 = vmul.f32 %v216, 0.01
  %v253 = vmul.f32 %v219, 0.01
  %v254 = vsel %vm222, %v160, %v238
  %v255 = vsel %vm223, %v163, %v239
  %v256 = vsel %vm224, %v168, %v240
  %v257 = vsel %vm225, %v171, %v241
  %v258 = vsel %vm226, %v176, %v242
  %v259 = vsel %vm227, %v179, %v243
  %v260 = vsel %vm228, %v184, %v244
  %v261 = vsel %vm229, %v187, %v245
  %v262 = vsel %vm230, %v192, %v246
  %v263 = vsel %vm231, %v195, %v247
  %v264 = vsel %vm232, %v200, %v248
  %v265 = vsel %vm233, %v203, %v249
  %v266 = vsel %vm234, %v208, %v250
  %v267 = vsel %vm235, %v211, %v251
  %v268 = vsel %vm236, %v216, %v252
  %v269 = vsel %vm237, %v219, %v253
  %v270 = vpack.c.bf16 %v255, %v254
  %v271 = vpack.c.bf16 %v257, %v256
  %v272 = vpack.c.bf16 %v259, %v258
  %v273 = vpack.c.bf16 %v261, %v260
  %v274 = vpack.c.bf16 %v263, %v262
  %v275 = vpack.c.bf16 %v265, %v264
  %v276 = vpack.c.bf16 %v267, %v266
  %v277 = vpack.c.bf16 %v269, %v268
  %v286 = vunpack.c.l.b16 %v270
  %v287 = vunpack.c.h.b16 %v270
  %v288 = vunpack.c.l.b16 %v271
  %v289 = vunpack.c.h.b16 %v271
  %v290 = vunpack.c.l.b16 %v272
  %v291 = vunpack.c.h.b16 %v272
  %v292 = vunpack.c.l.b16 %v273
  %v293 = vunpack.c.h.b16 %v273
  %v294 = vunpack.c.l.b16 %v274
  %v295 = vunpack.c.h.b16 %v274
  %v296 = vunpack.c.l.b16 %v275
  %v297 = vunpack.c.h.b16 %v275
  %v298 = vunpack.c.l.b16 %v276
  %v299 = vunpack.c.h.b16 %v276
  %v300 = vunpack.c.l.b16 %v277
  %v301 = vunpack.c.h.b16 %v277
  %v302 = vpack.c.b16 %v286, %v286
  %v303 = vpack.c.b16 %v287, %v287
  %v304 = vpack.c.b16 %v288, %v288
  %v305 = vpack.c.b16 %v289, %v289
  %v306 = vpack.c.b16 %v290, %v290
  %v307 = vpack.c.b16 %v291, %v291
  %v308 = vpack.c.b16 %v292, %v292
  %v309 = vpack.c.b16 %v293, %v293
  %v310 = vpack.c.b16 %v294, %v294
  %v311 = vpack.c.b16 %v295, %v295
  %v312 = vpack.c.b16 %v296, %v296
  %v313 = vpack.c.b16 %v297, %v297
  %v314 = vpack.c.b16 %v298, %v298
  %v315 = vpack.c.b16 %v299, %v299
  %v316 = vpack.c.b16 %v300, %v300
  %v317 = vpack.c.b16 %v301, %v301
  %vm334 = vcmask 60416
  %335 = vst.msk [vmem:[%s3] sm:$0xf] %vm334, %v302
  %336 = vst.msk [vmem:[%s3 + $0x4] sm:$0xf] %vm334, %v303
  %337 = vst.msk [vmem:[%s3 + $0x8] sm:$0xf] %vm334, %v304
  %338 = vst.msk [vmem:[%s3 + $0xc] sm:$0xf] %vm334, %v305
  %339 = vst.msk [vmem:[%s3 + $0x10] sm:$0xf] %vm334, %v306
  %340 = vst.msk [vmem:[%s3 + $0x14] sm:$0xf] %vm334, %v307
  %341 = vst.msk [vmem:[%s3 + $0x18] sm:$0xf] %vm334, %v308
  %342 = vst.msk [vmem:[%s3 + $0x1c] sm:$0xf] %vm334, %v309
  %343 = vst.msk [vmem:[%s3 + $0x20] sm:$0xf] %vm334, %v310
  %344 = vst.msk [vmem:[%s3 + $0x24] sm:$0xf] %vm334, %v311
  %345 = vst.msk [vmem:[%s3 + $0x28] sm:$0xf] %vm334, %v312
  %346 = vst.msk [vmem:[%s3 + $0x2c] sm:$0xf] %vm334, %v313
  %347 = vst.msk [vmem:[%s3 + $0x30] sm:$0xf] %vm334, %v314
  %348 = vst.msk [vmem:[%s3 + $0x34] sm:$0xf] %vm334, %v315
  %349 = vst.msk [vmem:[%s3 + $0x38] sm:$0xf] %vm334, %v316
  %350 = vst.msk [vmem:[%s3 + $0x3c] sm:$0xf] %vm334, %v317
  // Predicated region
  $region14: #{_lambda_.8} parent=0 // pred_check
    _
  $region15: #{_lambda_.8} parent=0 // pred_check_branch
    %352 = sbr.rel (0) target = $region17
  $region16: #{_lambda_.8} parent=0 // pred_region
    _
  $region17: #{_lambda_.8} parent=0 // pred_fallthru
    _
  // Predicated region
  $region18: #{_lambda_.8} parent=0 // pred_check
    _
  $region19: #{_lambda_.8} parent=0 // pred_check_branch
    %354 = sbr.rel (0) target = $region21
  $region20: #{_lambda_.8} parent=0 // pred_region
    _
  $region21: #{_lambda_.8} parent=0 // pred_fallthru
    _

// kernel: _lambda_.9
$region0: #{_lambda_.9}
  #allocation0 [shape = 'u32[]', space=smem, size = 0x4, offset = 0x4, fixed_abs, tag = 'smem constant byte address 0x4 - core index']
  #allocation1 [shape = 'u32[144,128]{1,0:T(1,128)}', space=vmem, size = 0x12000, scoped, tag = 'internal scratch']
  %s0 = inlined_call_operand.vmem [shape: bf16[32,72], index: 0, kind: input, shape index: {}]
  %s1 = inlined_call_operand.vmem [shape: bf16[72,16], index: 1, kind: input, shape index: {}]
  %s2 = inlined_call_operand.vmem [shape: f32[1,16], index: 2, kind: input, shape index: {}]
  %s3 = inlined_call_operand.vmem [shape: bf16[32,16], index: 3, kind: output, shape index: {}]
  %s4 = sld [smem:[#allocation0]]
  $region22: #{_lambda_.9} parent=0
    _
  %s6 = ssub.s32 1, %s4
  %s7 = scalar_select 0, %s6, %s4
  // Predicated region
  $region2: #{_lambda_.9} parent=0 // pred_check
    _
  $region3: #{_lambda_.9} parent=0 // pred_check_branch
    %9 = sbr.rel (0) target = $region5
  $region4: #{_lambda_.9} parent=0 // pred_region
    _
  $region5: #{_lambda_.9} parent=0 // pred_fallthru
    _
  // Predicated region
  $region6: #{_lambda_.9} parent=0 // pred_check
    _
  $region7: #{_lambda_.9} parent=0 // pred_check_branch
    %11 = sbr.rel (0) target = $region9
  $region8: #{_lambda_.9} parent=0 // pred_region
    _
  $region9: #{_lambda_.9} parent=0 // pred_fallthru
    _
  // Predicated region
  $region10: #{_lambda_.9} parent=0 // pred_check
    _
  $region11: #{_lambda_.9} parent=0 // pred_check_branch
    %13 = sbr.rel (0) target = $region13
  $region12: #{_lambda_.9} parent=0 // pred_region
    _
  $region13: #{_lambda_.9} parent=0 // pred_fallthru
    _
  %v15 = vld [vmem:[%s0] sm:$0xf]
  %v16 = vld [vmem:[%s0 + $0x4] sm:$0xf]
  %v17 = vld [vmem:[%s0 + $0x8] sm:$0xf]
  %v18 = vld [vmem:[%s0 + $0xc] sm:$0xf]
  %v19 = vld [vmem:[%s1] sm:$0xf]
  %v20 = vld [vmem:[%s1 + $0x4] sm:$0xf]
  %v21 = vld [vmem:[%s1 + $0x8] sm:$0xf]
  %v22 = vld [vmem:[%s1 + $0xc] sm:$0xf]
  %v23 = vld [vmem:[%s1 + $0x10] sm:$0xf]
  %v24 = vld [vmem:[%s1 + $0x14] sm:$0xf]
  %v25 = vld [vmem:[%s1 + $0x18] sm:$0xf]
  %v26 = vld [vmem:[%s1 + $0x1c] sm:$0xf]
  %v27 = vld [vmem:[%s1 + $0x20] sm:$0xf]
  %v28 = vld [vmem:[%s2] sm:$0x1]
  %v30 = vlaneseq
  %v31 = vshrl.u32 %v30, 7
  %v32 = vsub.s32 0, %v31
  %v33 = vrot.slane %v28, %v32
  %v39 = vunpack.c.l.b16 %v15
  %v40 = vunpack.c.l.b16 %v16
  %v41 = vunpack.c.l.b16 %v17
  %v42 = vunpack.c.l.b16 %v18
  %v43 = vpack.c.b16 %v40, %v39
  %v44 = vpack.c.b16 %v42, %v41
  %v54 = vunpack.c.l.b16 %v19
  %v55 = vunpack.c.l.b16 %v20
  %v56 = vunpack.c.l.b16 %v21
  %v57 = vunpack.c.l.b16 %v22
  %v58 = vunpack.c.l.b16 %v23
  %v59 = vunpack.c.l.b16 %v24
  %v60 = vunpack.c.l.b16 %v25
  %v61 = vunpack.c.l.b16 %v26
  %v62 = vunpack.c.l.b16 %v27
  %v63 = vpack.c.b16 %v55, %v54
  %v64 = vpack.c.b16 %v57, %v56
  %v65 = vpack.c.b16 %v59, %v58
  %v66 = vpack.c.b16 %v61, %v60
  %v67 = vpack.c.b16 %v62, %v62
  %vm72 = vcmask 588800
  %v74 = vsel %vm72, %v43, 0
  %v77 = vsel %vm72, %v44, 0
  %vm79 = vcmask 1043456
  %v81 = vsel %vm79, %v67, 0
  %83 = vmatprep.subr.bf16.mxu0 0
  %84 = vmatpush1.bf16.msra.mxu0 0
  %85 = vmatprep.subr.bf16.mxu0 0
  %86 = vmatpush1.bf16.msra.mxu0 0
  %87 = vmatprep.subr.bf16.mxu0 0
  %88 = vmatpush1.bf16.msra.mxu0 0
  %89 = vmatprep.subr.bf16.mxu0 0
  %90 = vmatpush1.bf16.msra.mxu0 %v81
  %91 = vmatprep.subr.bf16.mxu0 0
  %92 = vmatpush1.bf16.msra.mxu0 %v66
  %93 = vmatprep.subr.bf16.mxu0 0
  %94 = vmatpush1.bf16.msra.mxu0 %v65
  %95 = vmatprep.subr.bf16.mxu0 0
  %96 = vmatpush1.bf16.msra.mxu0 %v64
  %97 = vmatprep.subr.bf16.mxu0 0
  %98 = vmatpush1.bf16.msra.mxu0 %v63
  %99 = vmatprep.subr.bf16.mxu0 0
  %100 = vmatpush2.bf16.msra.mxu0 0
  %101 = vmatprep.subr.bf16.mxu0 0
  %102 = vmatpush2.bf16.msra.mxu0 0
  %103 = vmatprep.subr.bf16.mxu0 0
  %104 = vmatpush2.bf16.msra.mxu0 0
  %105 = vmatprep.subr.bf16.mxu0 0
  %106 = vmatpush2.bf16.msra.mxu0 0
  %107 = vmatprep.subr.bf16.mxu0 0
  %108 = vmatpush2.bf16.msra.mxu0 0
  %109 = vmatprep.subr.bf16.mxu0 0
  %110 = vmatpush2.bf16.msra.mxu0 0
  %111 = vmatprep.subr.bf16.mxu0 0
  %112 = vmatpush2.bf16.msra.mxu0 0
  %113 = vmatprep.subr.bf16.mxu0 0
  %114 = vmatpush2.bf16.msra.mxu0 0
  %115 = vmatprep.mubr.bf16.mxu0 0
  %116 = vmatmul.mubr.bf16.gmra.mxu0 %v74
  %v117 = vpop.f32.mrf.mxu0
  %v118 = vadd.f32 %v33, %v117
  %v119 = vpop.f32.mrf.mxu0
  %v120 = vpop.f32.mrf.mxu0
  %v121 = vadd.f32 %v33, %v120
  %v122 = vpop.f32.mrf.mxu0
  %123 = vmatprep.mubr.bf16.mxu0 0
  %124 = vmatmul.mubr.bf16.gmra.mxu0 %v77
  %v125 = vpop.f32.mrf.mxu0
  %v126 = vadd.f32 %v33, %v125
  %v127 = vpop.f32.mrf.mxu0
  %v128 = vpop.f32.mrf.mxu0
  %v129 = vadd.f32 %v33, %v128
  %v130 = vpop.f32.mrf.mxu0
  %131 = vdwg.mxu0
  %vm132 = vcmp.ge.f32.partialorder %v118, 0.0
  %vm133 = vcmp.ge.f32.partialorder %v121, 0.0
  %vm134 = vcmp.ge.f32.partialorder %v126, 0.0
  %vm135 = vcmp.ge.f32.partialorder %v129, 0.0
  %v136 = vmul.f32 %v118, 0.01
  %v137 = vmul.f32 %v121, 0.01
  %v138 = vmul.f32 %v126, 0.01
  %v139 = vmul.f32 %v129, 0.01
  %v140 = vsel %vm132, %v118, %v136
  %v141 = vsel %vm133, %v121, %v137
  %v142 = vsel %vm134, %v126, %v138
  %v143 = vsel %vm135, %v129, %v139
  %v144 = vpack.c.bf16 %v141, %v140
  %v145 = vpack.c.bf16 %v143, %v142
  %v148 = vunpack.c.l.b16 %v144
  %v149 = vunpack.c.h.b16 %v144
  %v150 = vunpack.c.l.b16 %v145
  %v151 = vunpack.c.h.b16 %v145
  %v152 = vpack.c.b16 %v148, %v148
  %v153 = vpack.c.b16 %v149, %v149
  %v154 = vpack.c.b16 %v150, %v150
  %v155 = vpack.c.b16 %v151, %v151
  %vm160 = vcmask 125952
  %161 = vst.msk [vmem:[%s3] sm:$0xf] %vm160, %v152
  %162 = vst.msk [vmem:[%s3 + $0x4] sm:$0xf] %vm160, %v153
  %163 = vst.msk [vmem:[%s3 + $0x8] sm:$0xf] %vm160, %v154
  %164 = vst.msk [vmem:[%s3 + $0xc] sm:$0xf] %vm160, %v155
  // Predicated region
  $region14: #{_lambda_.9} parent=0 // pred_check
    _
  $region15: #{_lambda_.9} parent=0 // pred_check_branch
    %166 = sbr.rel (0) target = $region17
  $region16: #{_lambda_.9} parent=0 // pred_region
    _
  $region17: #{_lambda_.9} parent=0 // pred_fallthru
    _
  // Predicated region
  $region18: #{_lambda_.9} parent=0 // pred_check
    _
  $region19: #{_lambda_.9} parent=0 // pred_check_branch
    %168 = sbr.rel (0) target = $region21
  $region20: #{_lambda_.9} parent=0 // pred_region
    _
  $region21: #{_lambda_.9} parent=0 // pred_fallthru
    _

// kernel: _lambda_.10
$region0: #{_lambda_.10}
  #allocation0 [shape = 'u32[]', space=smem, size = 0x4, offset = 0x4, fixed_abs, tag = 'smem constant byte address 0x4 - core index']
  #allocation1 [shape = 'u32[144,128]{1,0:T(1,128)}', space=vmem, size = 0x12000, scoped, tag = 'internal scratch']
  %s0 = inlined_call_operand.vmem [shape: bf16[8,144], index: 0, kind: input, shape index: {}]
  %s1 = inlined_call_operand.vmem [shape: bf16[144,32], index: 1, kind: input, shape index: {}]
  %s2 = inlined_call_operand.vmem [shape: f32[1,32], index: 2, kind: input, shape index: {}]
  %s3 = inlined_call_operand.vmem [shape: bf16[8,32], index: 3, kind: output, shape index: {}]
  %s4 = sld [smem:[#allocation0]]
  $region22: #{_lambda_.10} parent=0
    _
  %s6 = ssub.s32 1, %s4
  %s7 = scalar_select 0, %s6, %s4
  // Predicated region
  $region2: #{_lambda_.10} parent=0 // pred_check
    _
  $region3: #{_lambda_.10} parent=0 // pred_check_branch
    %9 = sbr.rel (0) target = $region5
  $region4: #{_lambda_.10} parent=0 // pred_region
    _
  $region5: #{_lambda_.10} parent=0 // pred_fallthru
    _
  // Predicated region
  $region6: #{_lambda_.10} parent=0 // pred_check
    _
  $region7: #{_lambda_.10} parent=0 // pred_check_branch
    %11 = sbr.rel (0) target = $region9
  $region8: #{_lambda_.10} parent=0 // pred_region
    _
  $region9: #{_lambda_.10} parent=0 // pred_fallthru
    _
  // Predicated region
  $region10: #{_lambda_.10} parent=0 // pred_check
    _
  $region11: #{_lambda_.10} parent=0 // pred_check_branch
    %13 = sbr.rel (0) target = $region13
  $region12: #{_lambda_.10} parent=0 // pred_region
    _
  $region13: #{_lambda_.10} parent=0 // pred_fallthru
    _
  %v15 = vld [vmem:[%s0] sm:$0xff]
  %v16 = vld [vmem:[%s1] sm:$0xf]
  %v17 = vld [vmem:[%s1 + $0x4] sm:$0xf]
  %v18 = vld [vmem:[%s1 + $0x8] sm:$0xf]
  %v19 = vld [vmem:[%s1 + $0xc] sm:$0xf]
  %v20 = vld [vmem:[%s1 + $0x10] sm:$0xf]
  %v21 = vld [vmem:[%s1 + $0x14] sm:$0xf]
  %v22 = vld [vmem:[%s1 + $0x18] sm:$0xf]
  %v23 = vld [vmem:[%s1 + $0x1c] sm:$0xf]
  %v24 = vld [vmem:[%s1 + $0x20] sm:$0xf]
  %v25 = vld [vmem:[%s1 + $0x24] sm:$0xf]
  %v26 = vld [vmem:[%s1 + $0x28] sm:$0xf]
  %v27 = vld [vmem:[%s1 + $0x2c] sm:$0xf]
  %v28 = vld [vmem:[%s1 + $0x30] sm:$0xf]
  %v29 = vld [vmem:[%s1 + $0x34] sm:$0xf]
  %v30 = vld [vmem:[%s1 + $0x38] sm:$0xf]
  %v31 = vld [vmem:[%s1 + $0x3c] sm:$0xf]
  %v32 = vld [vmem:[%s1 + $0x40] sm:$0xf]
  %v33 = vld [vmem:[%s1 + $0x44] sm:$0xf]
  %v34 = vld [vmem:[%s2] sm:$0x1]
  %v36 = vlaneseq
  %v37 = vshrl.u32 %v36, 7
  %v38 = vsub.s32 0, %v37
  %v39 = vrot.slane %v34, %v38
  %v42 = vunpack.c.l.b16 %v15
  %v43 = vunpack.c.h.b16 %v15
  %v44 = vpack.c.b16 %v42, %v42
  %v45 = vpack.c.b16 %v43, %v43
  %v65 = vunpack.c.l.b16 %v16
  %v66 = vunpack.c.l.b16 %v17
  %v67 = vunpack.c.l.b16 %v18
  %v68 = vunpack.c.l.b16 %v19
  %v69 = vunpack.c.l.b16 %v20
  %v70 = vunpack.c.l.b16 %v21
  %v71 = vunpack.c.l.b16 %v22
  %v72 = vunpack.c.l.b16 %v23
  %v73 = vunpack.c.l.b16 %v24
  %v74 = vunpack.c.l.b16 %v25
  %v75 = vunpack.c.l.b16 %v26
  %v76 = vunpack.c.l.b16 %v27
  %v77 = vunpack.c.l.b16 %v28
  %v78 = vunpack.c.l.b16 %v29
  %v79 = vunpack.c.l.b16 %v30
  %v80 = vunpack.c.l.b16 %v31
  %v81 = vunpack.c.l.b16 %v32
  %v82 = vunpack.c.l.b16 %v33
  %v83 = vpack.c.b16 %v66, %v65
  %v84 = vpack.c.b16 %v68, %v67
  %v85 = vpack.c.b16 %v70, %v69
  %v86 = vpack.c.b16 %v72, %v71
  %v87 = vpack.c.b16 %v74, %v73
  %v88 = vpack.c.b16 %v76, %v75
  %v89 = vpack.c.b16 %v78, %v77
  %v90 = vpack.c.b16 %v80, %v79
  %v91 = vpack.c.b16 %v82, %v81
  %vm101 = vcmask 130048
  %v103 = vsel %vm101, %v45, 0
  %105 = vmatprep.subr.bf16.mxu0 0
  %106 = vmatpush1.bf16.msra.mxu0 %v90
  %107 = vmatprep.subr.bf16.mxu0 0
  %108 = vmatpush1.bf16.msra.mxu0 %v89
  %109 = vmatprep.subr.bf16.mxu0 0
  %110 = vmatpush1.bf16.msra.mxu0 %v88
  %111 = vmatprep.subr.bf16.mxu0 0
  %112 = vmatpush1.bf16.msra.mxu0 %v87
  %113 = vmatprep.subr.bf16.mxu0 0
  %114 = vmatpush1.bf16.msra.mxu0 %v86
  %115 = vmatprep.subr.bf16.mxu0 0
  %116 = vmatpush1.bf16.msra.mxu0 %v85
  %117 = vmatprep.subr.bf16.mxu0 0
  %118 = vmatpush1.bf16.msra.mxu0 %v84
  %119 = vmatprep.subr.bf16.mxu0 0
  %120 = vmatpush1.bf16.msra.mxu0 %v83
  %121 = vmatprep.subr.bf16.mxu0 0
  %122 = vmatpush2.bf16.msra.mxu0 0
  %123 = vmatprep.subr.bf16.mxu0 0
  %124 = vmatpush2.bf16.msra.mxu0 0
  %125 = vmatprep.subr.bf16.mxu0 0
  %126 = vmatpush2.bf16.msra.mxu0 0
  %127 = vmatprep.subr.bf16.mxu0 0
  %128 = vmatpush2.bf16.msra.mxu0 0
  %129 = vmatprep.subr.bf16.mxu0 0
  %130 = vmatpush2.bf16.msra.mxu0 0
  %131 = vmatprep.subr.bf16.mxu0 0
  %132 = vmatpush2.bf16.msra.mxu0 0
  %133 = vmatprep.subr.bf16.mxu0 0
  %134 = vmatpush2.bf16.msra.mxu0 0
  %135 = vmatprep.subr.bf16.mxu0 0
  %136 = vmatpush2.bf16.msra.mxu0 %v91
  %137 = vmatprep.mubr.bf16.mxu0 %v103
  %138 = vmatmul.mubr.bf16.gmra.mxu0 %v44
  %v139 = vpop.f32.mrf.mxu0
  %v140 = vadd.f32 %v39, %v139
  %v141 = vpop.f32.mrf.mxu0
  %v142 = vpop.f32.mrf.mxu0
  %v143 = vpop.f32.mrf.mxu0
  %144 = vdwg.mxu0
  %vm145 = vcmp.ge.f32.partialorder %v140, 0.0
  %v146 = vmul.f32 %v140, 0.01
  %v147 = vsel %vm145, %v140, %v146
  %v148 = vpack.c.bf16 %v147, %v147
  %vm149 = vcmask 257024
  %150 = vst.msk [vmem:[%s3] sm:$0xf] %vm149, %v148
  // Predicated region
  $region14: #{_lambda_.10} parent=0 // pred_check
    _
  $region15: #{_lambda_.10} parent=0 // pred_check_branch
    %152 = sbr.rel (0) target = $region17
  $region16: #{_lambda_.10} parent=0 // pred_region
    _
  $region17: #{_lambda_.10} parent=0 // pred_fallthru
    _
  // Predicated region
  $region18: #{_lambda_.10} parent=0 // pred_check
    _
  $region19: #{_lambda_.10} parent=0 // pred_check_branch
    %154 = sbr.rel (0) target = $region21
  $region20: #{_lambda_.10} parent=0 // pred_region
    _
  $region21: #{_lambda_.10} parent=0 // pred_fallthru
    _

// kernel: _lambda_.11
$region0: #{_lambda_.11}
  #allocation0 [shape = 'u32[]', space=smem, size = 0x4, offset = 0x4, fixed_abs, tag = 'smem constant byte address 0x4 - core index']
  #allocation1 [shape = 'u32[144,128]{1,0:T(1,128)}', space=vmem, size = 0x12000, scoped, tag = 'internal scratch']
  %s0 = inlined_call_operand.vmem [shape: f32[2,128], index: 0, kind: input, shape index: {}]
  %s1 = inlined_call_operand.vmem [shape: f32[128,16], index: 1, kind: input, shape index: {}]
  %s2 = inlined_call_operand.vmem [shape: f32[128,16], index: 2, kind: input, shape index: {}]
  %s3 = inlined_call_operand.vmem [shape: f32[16,128], index: 3, kind: input, shape index: {}]
  %s4 = inlined_call_operand.vmem [shape: f32[1,16], index: 4, kind: input, shape index: {}]
  %s5 = inlined_call_operand.vmem [shape: f32[1,16], index: 5, kind: input, shape index: {}]
  %s6 = inlined_call_operand.vmem [shape: f32[1,128], index: 6, kind: input, shape index: {}]
  %s7 = inlined_call_operand.vmem [shape: f32[2,16], index: 7, kind: input, shape index: {}]
  %s8 = inlined_call_operand.hbm [shape: f32[2,16], index: 8, kind: output, shape index: {0}]
  %s9 = inlined_call_operand.hbm [shape: f32[2,16], index: 9, kind: output, shape index: {1}]
  %s10 = inlined_call_operand.vmem [shape: bf16[2,128], index: 10, kind: output, shape index: {2}]
  %11 = xla_tuple %s8, %s9, %s10
  %s12 = sld [smem:[#allocation0]]
  $region58: #{_lambda_.11} parent=0
    _
  %s14 = ssub.s32 1, %s12
  %s15 = scalar_select 0, %s14, %s12
  $region1: #{_lambda_.11} parent=0
    #allocation2 [shape = 'u8[1024]{0}', space=vmem, size = 0x400, scoped, tag = 'output window, operand 0, single buffered']
    #allocation3 [shape = 's32[1]{0}', space=sflag, size = 0x4, scoped, tag = 'scoped memory for _lambda_.11']
    #allocation4 [shape = 'u8[1024]{0}', space=vmem, size = 0x400, scoped, tag = 'output window, operand 1, single buffered']
    #allocation5 [shape = 's32[1]{0}', space=sflag, size = 0x4, scoped, tag = 'scoped memory for _lambda_.11']
    %16 = vsyncpa [#allocation3], 0
    %17 = vsyncpa [#allocation5], 0
    // Predicated region
    $region2: #{_lambda_.11} parent=1 // pred_check
      _
    $region3: #{_lambda_.11} parent=1 // pred_check_branch
      %19 = sbr.rel (0) target = $region5
    $region4: #{_lambda_.11} parent=1 // pred_region
      _
    $region5: #{_lambda_.11} parent=1 // pred_fallthru
      _
    // Predicated region
    $region6: #{_lambda_.11} parent=1 // pred_check
      _
    $region7: #{_lambda_.11} parent=1 // pred_check_branch
      %21 = sbr.rel (0) target = $region9
    $region8: #{_lambda_.11} parent=1 // pred_region
      _
    $region9: #{_lambda_.11} parent=1 // pred_fallthru
      _
    // Predicated region
    $region10: #{_lambda_.11} parent=1 // pred_check
      _
    $region11: #{_lambda_.11} parent=1 // pred_check_branch
      %23 = sbr.rel (0) target = $region13
    $region12: #{_lambda_.11} parent=1 // pred_region
      _
    $region13: #{_lambda_.11} parent=1 // pred_fallthru
      _
    // Predicated region
    $region14: #{_lambda_.11} parent=1 // pred_check
      _
    $region15: #{_lambda_.11} parent=1 // pred_check_branch
      %25 = sbr.rel (0) target = $region17
    $region16: #{_lambda_.11} parent=1 // pred_region
      _
    $region17: #{_lambda_.11} parent=1 // pred_fallthru
      _
    // Predicated region
    $region18: #{_lambda_.11} parent=1 // pred_check
      _
    $region19: #{_lambda_.11} parent=1 // pred_check_branch
      %27 = sbr.rel (0) target = $region21
    $region20: #{_lambda_.11} parent=1 // pred_region
      _
    $region21: #{_lambda_.11} parent=1 // pred_fallthru
      _
    // Predicated region
    $region22: #{_lambda_.11} parent=1 // pred_check
      _
    $region23: #{_lambda_.11} parent=1 // pred_check_branch
      %29 = sbr.rel (0) target = $region25
    $region24: #{_lambda_.11} parent=1 // pred_region
      _
    $region25: #{_lambda_.11} parent=1 // pred_fallthru
      _
    // Predicated region
    $region26: #{_lambda_.11} parent=1 // pred_check
      _
    $region27: #{_lambda_.11} parent=1 // pred_check_branch
      %31 = sbr.rel (0) target = $region29
    $region28: #{_lambda_.11} parent=1 // pred_region
      _
    $region29: #{_lambda_.11} parent=1 // pred_fallthru
      _
    // Predicated region
    $region30: #{_lambda_.11} parent=1 // pred_check
      _
    $region31: #{_lambda_.11} parent=1 // pred_check_branch
      %33 = sbr.rel (0) target = $region33
    $region32: #{_lambda_.11} parent=1 // pred_region
      _
    $region33: #{_lambda_.11} parent=1 // pred_fallthru
      _
    %v34 = vld [vmem:[%s0] sm:$0x3]
    %v35 = vld [vmem:[%s1] sm:$0xff]
    %v36 = vld [vmem:[%s1 + $0x8] sm:$0xff]
    %v37 = vld [vmem:[%s1 + $0x10] sm:$0xff]
    %v38 = vld [vmem:[%s1 + $0x18] sm:$0xff]
    %v39 = vld [vmem:[%s1 + $0x20] sm:$0xff]
    %v40 = vld [vmem:[%s1 + $0x28] sm:$0xff]
    %v41 = vld [vmem:[%s1 + $0x30] sm:$0xff]
    %v42 = vld [vmem:[%s1 + $0x38] sm:$0xff]
    %v43 = vld [vmem:[%s1 + $0x40] sm:$0xff]
    %v44 = vld [vmem:[%s1 + $0x48] sm:$0xff]
    %v45 = vld [vmem:[%s1 + $0x50] sm:$0xff]
    %v46 = vld [vmem:[%s1 + $0x58] sm:$0xff]
    %v47 = vld [vmem:[%s1 + $0x60] sm:$0xff]
    %v48 = vld [vmem:[%s1 + $0x68] sm:$0xff]
    %v49 = vld [vmem:[%s1 + $0x70] sm:$0xff]
    %v50 = vld [vmem:[%s1 + $0x78] sm:$0xff]
    %v51 = vld [vmem:[%s4] sm:$0x1]
    %v53 = vlaneseq
    %v54 = vshrl.u32 %v53, 7
    %v55 = vsub.s32 0, %v54
    %v56 = vrot.slane %v51, %v55
    %58 = vmatprep.subr.mxu0 0.0
    %59 = vmatpush1.msra.mxu0 %v50
    %60 = vmatprep.subr.mxu0 0.0
    %61 = vmatpush1.msra.mxu0 %v49
    %62 = vmatprep.subr.mxu0 0.0
    %63 = vmatpush1.msra.mxu0 %v48
    %64 = vmatprep.subr.mxu0 0.0
    %65 = vmatpush1.msra.mxu0 %v47
    %66 = vmatprep.subr.mxu0 0.0
    %67 = vmatpush1.msra.mxu0 %v46
    %68 = vmatprep.subr.mxu0 0.0
    %69 = vmatpush1.msra.mxu0 %v45
    %70 = vmatprep.subr.mxu0 0.0
    %71 = vmatpush1.msra.mxu0 %v44
    %72 = vmatprep.subr.mxu0 0.0
    %73 = vmatpush1.msra.mxu0 %v43
    %74 = vmatprep.subr.mxu0 0.0
    %75 = vmatpush1.msra.mxu0 %v42
    %76 = vmatprep.subr.mxu0 0.0
    %77 = vmatpush1.msra.mxu0 %v41
    %78 = vmatprep.subr.mxu0 0.0
    %79 = vmatpush1.msra.mxu0 %v40
    %80 = vmatprep.subr.mxu0 0.0
    %81 = vmatpush1.msra.mxu0 %v39
    %82 = vmatprep.subr.mxu0 0.0
    %83 = vmatpush1.msra.mxu0 %v38
    %84 = vmatprep.subr.mxu0 0.0
    %85 = vmatpush1.msra.mxu0 %v37
    %86 = vmatprep.subr.mxu0 0.0
    %87 = vmatpush1.msra.mxu0 %v36
    %88 = vmatprep.subr.mxu0 0.0
    %89 = vmatpush1.msra.mxu0 %v35
    %90 = vmatprep.subr.mxu0 0.0
    %91 = vmatpush2.msra.mxu0 0.0
    %92 = vmatprep.subr.mxu0 0.0
    %93 = vmatpush2.msra.mxu0 0.0
    %94 = vmatprep.subr.mxu0 0.0
    %95 = vmatpush2.msra.mxu0 0.0
    %96 = vmatprep.subr.mxu0 0.0
    %97 = vmatpush2.msra.mxu0 0.0
    %98 = vmatprep.subr.mxu0 0.0
    %99 = vmatpush2.msra.mxu0 0.0
    %100 = vmatprep.subr.mxu0 0.0
    %101 = vmatpush2.msra.mxu0 0.0
    %102 = vmatprep.subr.mxu0 0.0
    %103 = vmatpush2.msra.mxu0 0.0
    %104 = vmatprep.subr.mxu0 0.0
    %105 = vmatpush2.msra.mxu0 0.0
    %106 = vmatprep.subr.mxu0 0.0
    %107 = vmatpush2.msra.mxu0 0.0
    %108 = vmatprep.subr.mxu0 0.0
    %109 = vmatpush2.msra.mxu0 0.0
    %110 = vmatprep.subr.mxu0 0.0
    %111 = vmatpush2.msra.mxu0 0.0
    %112 = vmatprep.subr.mxu0 0.0
    %113 = vmatpush2.msra.mxu0 0.0
    %114 = vmatprep.subr.mxu0 0.0
    %115 = vmatpush2.msra.mxu0 0.0
    %116 = vmatprep.subr.mxu0 0.0
    %117 = vmatpush2.msra.mxu0 0.0
    %118 = vmatprep.subr.mxu0 0.0
    %119 = vmatpush2.msra.mxu0 0.0
    %120 = vmatprep.subr.mxu0 0.0
    %121 = vmatpush2.msra.mxu0 0.0
    %122 = vmatprep.mubr.f32.mxu0 0.0
    %123 = vmatmul.mubr.f32.gmra.mxu0 %v34
    %v124 = vpop.f32.mrf.mxu0
    %v125 = vadd.f32 %v56, %v124
    %v126 = vpop.f32.mrf.mxu0
    %127 = vdwg.mxu0
    %v128 = vld [vmem:[%s2] sm:$0xff]
    %v129 = vld [vmem:[%s2 + $0x8] sm:$0xff]
    %v130 = vld [vmem:[%s2 + $0x10] sm:$0xff]
    %v131 = vld [vmem:[%s2 + $0x18] sm:$0xff]
    %v132 = vld [vmem:[%s2 + $0x20] sm:$0xff]
    %v133 = vld [vmem:[%s2 + $0x28] sm:$0xff]
    %v134 = vld [vmem:[%s2 + $0x30] sm:$0xff]
    %v135 = vld [vmem:[%s2 + $0x38] sm:$0xff]
    %v136 = vld [vmem:[%s2 + $0x40] sm:$0xff]
    %v137 = vld [vmem:[%s2 + $0x48] sm:$0xff]
    %v138 = vld [vmem:[%s2 + $0x50] sm:$0xff]
    %v139 = vld [vmem:[%s2 + $0x58] sm:$0xff]
    %v140 = vld [vmem:[%s2 + $0x60] sm:$0xff]
    %v141 = vld [vmem:[%s2 + $0x68] sm:$0xff]
    %v142 = vld [vmem:[%s2 + $0x70] sm:$0xff]
    %v143 = vld [vmem:[%s2 + $0x78] sm:$0xff]
    %v144 = vld [vmem:[%s5] sm:$0x1]
    %v146 = vlaneseq
    %v147 = vshrl.u32 %v146, 7
    %v148 = vsub.s32 0, %v147
    %v149 = vrot.slane %v144, %v148
    %151 = vmatprep.subr.mxu0 0.0
    %152 = vmatpush1.msra.mxu0 %v143
    %153 = vmatprep.subr.mxu0 0.0
    %154 = vmatpush1.msra.mxu0 %v142
    %155 = vmatprep.subr.mxu0 0.0
    %156 = vmatpush1.msra.mxu0 %v141
    %157 = vmatprep.subr.mxu0 0.0
    %158 = vmatpush1.msra.mxu0 %v140
    %159 = vmatprep.subr.mxu0 0.0
    %160 = vmatpush1.msra.mxu0 %v139
    %161 = vmatprep.subr.mxu0 0.0
    %162 = vmatpush1.msra.mxu0 %v138
    %163 = vmatprep.subr.mxu0 0.0
    %164 = vmatpush1.msra.mxu0 %v137
    %165 = vmatprep.subr.mxu0 0.0
    %166 = vmatpush1.msra.mxu0 %v136
    %167 = vmatprep.subr.mxu0 0.0
    %168 = vmatpush1.msra.mxu0 %v135
    %169 = vmatprep.subr.mxu0 0.0
    %170 = vmatpush1.msra.mxu0 %v134
    %171 = vmatprep.subr.mxu0 0.0
    %172 = vmatpush1.msra.mxu0 %v133
    %173 = vmatprep.subr.mxu0 0.0
    %174 = vmatpush1.msra.mxu0 %v132
    %175 = vmatprep.subr.mxu0 0.0
    %176 = vmatpush1.msra.mxu0 %v131
    %177 = vmatprep.subr.mxu0 0.0
    %178 = vmatpush1.msra.mxu0 %v130
    %179 = vmatprep.subr.mxu0 0.0
    %180 = vmatpush1.msra.mxu0 %v129
    %181 = vmatprep.subr.mxu0 0.0
    %182 = vmatpush1.msra.mxu0 %v128
    %183 = vmatprep.subr.mxu0 0.0
    %184 = vmatpush2.msra.mxu0 0.0
    %185 = vmatprep.subr.mxu0 0.0
    %186 = vmatpush2.msra.mxu0 0.0
    %187 = vmatprep.subr.mxu0 0.0
    %188 = vmatpush2.msra.mxu0 0.0
    %189 = vmatprep.subr.mxu0 0.0
    %190 = vmatpush2.msra.mxu0 0.0
    %191 = vmatprep.subr.mxu0 0.0
    %192 = vmatpush2.msra.mxu0 0.0
    %193 = vmatprep.subr.mxu0 0.0
    %194 = vmatpush2.msra.mxu0 0.0
    %195 = vmatprep.subr.mxu0 0.0
    %196 = vmatpush2.msra.mxu0 0.0
    %197 = vmatprep.subr.mxu0 0.0
    %198 = vmatpush2.msra.mxu0 0.0
    %199 = vmatprep.subr.mxu0 0.0
    %200 = vmatpush2.msra.mxu0 0.0
    %201 = vmatprep.subr.mxu0 0.0
    %202 = vmatpush2.msra.mxu0 0.0
    %203 = vmatprep.subr.mxu0 0.0
    %204 = vmatpush2.msra.mxu0 0.0
    %205 = vmatprep.subr.mxu0 0.0
    %206 = vmatpush2.msra.mxu0 0.0
    %207 = vmatprep.subr.mxu0 0.0
    %208 = vmatpush2.msra.mxu0 0.0
    %209 = vmatprep.subr.mxu0 0.0
    %210 = vmatpush2.msra.mxu0 0.0
    %211 = vmatprep.subr.mxu0 0.0
    %212 = vmatpush2.msra.mxu0 0.0
    %213 = vmatprep.subr.mxu0 0.0
    %214 = vmatpush2.msra.mxu0 0.0
    %215 = vmatprep.mubr.f32.mxu0 0.0
    %216 = vmatmul.mubr.f32.gmra.mxu0 %v34
    %v217 = vpop.f32.mrf.mxu0
    %v218 = vadd.f32 %v149, %v217
    %v219 = vpop.f32.mrf.mxu0
    %220 = vdwg.mxu0
    %v221 = vld [vmem:[%s7] sm:$0x3]
    %v222 = vmul.f32 %v218, 0.5
    %v223 = vmul.f32 %v222, 1.442695
    %v224 = vpow.pop %v223
    %v225 = vmul.f32 %v221, %v224
    %v226 = vadd.f32 %v225, %v125
    %v227 = vld [vmem:[%s3] sm:$0xff]
    %v228 = vld [vmem:[%s3 + $0x8] sm:$0xff]
    %v229 = vld [vmem:[%s6] sm:$0x1]
    %v231 = vlaneseq
    %v232 = vshrl.u32 %v231, 7
    %v233 = vsub.s32 0, %v232
    %v234 = vrot.slane %v229, %v233
    %vm236 = vcmask 130048
    %v238 = vsel %vm236, %v226, 0
    %240 = vmatprep.subr.mxu0 0.0
    %241 = vmatpush1.msra.mxu0 0.0
    %242 = vmatprep.subr.mxu0 0.0
    %243 = vmatpush1.msra.mxu0 0.0
    %244 = vmatprep.subr.mxu0 0.0
    %245 = vmatpush1.msra.mxu0 0.0
    %246 = vmatprep.subr.mxu0 0.0
    %247 = vmatpush1.msra.mxu0 0.0
    %248 = vmatprep.subr.mxu0 0.0
    %249 = vmatpush1.msra.mxu0 0.0
    %250 = vmatprep.subr.mxu0 0.0
    %251 = vmatpush1.msra.mxu0 0.0
    %252 = vmatprep.subr.mxu0 0.0
    %253 = vmatpush1.msra.mxu0 0.0
    %254 = vmatprep.subr.mxu0 0.0
    %255 = vmatpush1.msra.mxu0 0.0
    %256 = vmatprep.subr.mxu0 0.0
    %257 = vmatpush1.msra.mxu0 0.0
    %258 = vmatprep.subr.mxu0 0.0
    %259 = vmatpush1.msra.mxu0 0.0
    %260 = vmatprep.subr.mxu0 0.0
    %261 = vmatpush1.msra.mxu0 0.0
    %262 = vmatprep.subr.mxu0 0.0
    %263 = vmatpush1.msra.mxu0 0.0
    %264 = vmatprep.subr.mxu0 0.0
    %265 = vmatpush1.msra.mxu0 0.0
    %266 = vmatprep.subr.mxu0 0.0
    %267 = vmatpush1.msra.mxu0 0.0
    %268 = vmatprep.subr.mxu0 0.0
    %269 = vmatpush1.msra.mxu0 %v228
    %270 = vmatprep.subr.mxu0 0.0
    %271 = vmatpush1.msra.mxu0 %v227
    %272 = vmatprep.subr.mxu0 0.0
    %273 = vmatpush2.msra.mxu0 0.0
    %274 = vmatprep.subr.mxu0 0.0
    %275 = vmatpush2.msra.mxu0 0.0
    %276 = vmatprep.subr.mxu0 0.0
    %277 = vmatpush2.msra.mxu0 0.0
    %278 = vmatprep.subr.mxu0 0.0
    %279 = vmatpush2.msra.mxu0 0.0
    %280 = vmatprep.subr.mxu0 0.0
    %281 = vmatpush2.msra.mxu0 0.0
    %282 = vmatprep.subr.mxu0 0.0
    %283 = vmatpush2.msra.mxu0 0.0
    %284 = vmatprep.subr.mxu0 0.0
    %285 = vmatpush2.msra.mxu0 0.0
    %286 = vmatprep.subr.mxu0 0.0
    %287 = vmatpush2.msra.mxu0 0.0
    %288 = vmatprep.subr.mxu0 0.0
    %289 = vmatpush2.msra.mxu0 0.0
    %290 = vmatprep.subr.mxu0 0.0
    %291 = vmatpush2.msra.mxu0 0.0
    %292 = vmatprep.subr.mxu0 0.0
    %293 = vmatpush2.msra.mxu0 0.0
    %294 = vmatprep.subr.mxu0 0.0
    %295 = vmatpush2.msra.mxu0 0.0
    %296 = vmatprep.subr.mxu0 0.0
    %297 = vmatpush2.msra.mxu0 0.0
    %298 = vmatprep.subr.mxu0 0.0
    %299 = vmatpush2.msra.mxu0 0.0
    %300 = vmatprep.subr.mxu0 0.0
    %301 = vmatpush2.msra.mxu0 0.0
    %302 = vmatprep.subr.mxu0 0.0
    %303 = vmatpush2.msra.mxu0 0.0
    %304 = vmatprep.mubr.f32.mxu0 0.0
    %305 = vmatmul.mubr.f32.gmra.mxu0 %v238
    %v306 = vpop.f32.mrf.mxu0
    %v307 = vadd.f32 %v234, %v306
    %v308 = vpop.f32.mrf.mxu0
    %309 = vdwg.mxu0
    %vm310 = vcmask 123904
    %311 = vst.msk [vmem:[#allocation2] sm:$0x3] %vm310, %v125
    %312 = vst.msk [vmem:[#allocation4] sm:$0x3] %vm310, %v218
    %v313 = vpack.c.bf16 %v307, %v307
    %314 = vst [vmem:[%s10] sm:$0x1] %v313
    // Predicated region
    $region34: #{_lambda_.11} parent=1 // pred_check
      _
    $region35: #{_lambda_.11} parent=1 // pred_check_branch
      %316 = sbr.rel (0) target = $region37
    $region36: #{_lambda_.11} parent=1 // pred_region
      %s318 = ssub.s32 32, 32
      %319 = vsyncadd [#allocation3], %s318
      %s321 = sshll.u32 [#allocation2], 4
      %s322 = int_to_ptr.vmem [resolvable:$true] %s321
      %324 = dma.vmem_to_hbm [thread:$0]  %s322, 32, %s8, [#allocation3]
    $region37: #{_lambda_.11} parent=1 // pred_fallthru
      _
    // Predicated region
    $region38: #{_lambda_.11} parent=1 // pred_check
      _
    $region39: #{_lambda_.11} parent=1 // pred_check_branch
      %326 = sbr.rel (0) target = $region41
    $region40: #{_lambda_.11} parent=1 // pred_region
      %s328 = ssub.s32 32, 32
      %329 = vsyncadd [#allocation5], %s328
      %s331 = sshll.u32 [#allocation4], 4
      %s332 = int_to_ptr.vmem [resolvable:$true] %s331
      %334 = dma.vmem_to_hbm [thread:$0]  %s332, 32, %s9, [#allocation5]
    $region41: #{_lambda_.11} parent=1 // pred_fallthru
      _
    // Predicated region
    $region42: #{_lambda_.11} parent=1 // pred_check
      _
    $region43: #{_lambda_.11} parent=1 // pred_check_branch
      %336 = sbr.rel (0) target = $region45
    $region44: #{_lambda_.11} parent=1 // pred_region
      _
    $region45: #{_lambda_.11} parent=1 // pred_fallthru
      _
    // Predicated region
    $region46: #{_lambda_.11} parent=1 // pred_check
      _
    $region47: #{_lambda_.11} parent=1 // pred_check_branch
      %338 = sbr.rel (0) target = $region49
    $region48: #{_lambda_.11} parent=1 // pred_region
      %339 = dma.done [#allocation3], 32
    $region49: #{_lambda_.11} parent=1 // pred_fallthru
      _
    // Predicated region
    $region50: #{_lambda_.11} parent=1 // pred_check
      _
    $region51: #{_lambda_.11} parent=1 // pred_check_branch
      %341 = sbr.rel (0) target = $region53
    $region52: #{_lambda_.11} parent=1 // pred_region
      %342 = dma.done [#allocation5], 32
    $region53: #{_lambda_.11} parent=1 // pred_fallthru
      _
    // Predicated region
    $region54: #{_lambda_.11} parent=1 // pred_check
      _
    $region55: #{_lambda_.11} parent=1 // pred_check_branch
      %344 = sbr.rel (0) target = $region57
    $region56: #{_lambda_.11} parent=1 // pred_region
      _
    $region57: #{_lambda_.11} parent=1 // pred_fallthru
      _
    %345 = vsyncpa [#allocation3], 1
    %346 = vsyncpa [#allocation5], 1

// kernel: tile.33
$region0: #{tile.33}
  #allocation0 [shape = 's32[1]{0}', space=sflag, size = 0x4, scoped, tag = 'scoped memory for tile.33']
  %s0 = inlined_call_operand.vmem [shape: f32[16], index: 0, kind: input, shape index: {}]
  %s1 = inlined_call_operand.vmem [shape: f32[4,16], index: 1, kind: output, shape index: {}]
  // Predicated region
  $region2: #{tile.33} parent=0 // pred_check
    _
  $region3: #{tile.33} parent=0 // pred_check_branch
    %3 = sbr.rel (0) target = $region5
  $region4: #{tile.33} parent=0 // pred_region
    _
  $region5: #{tile.33} parent=0 // pred_fallthru
    _
  %v4 = vld [vmem:[%s0] ss:$0 sm:$0xff]
  %5 = vst [vmem:[%s1] sm:$0xf] %v4

// kernel: mul.56
$region0: #{mul.56}
  %s0 = inlined_call_operand.vmem [shape: f32[4,16], index: 0, kind: input, shape index: {}]
  %s1 = inlined_call_operand.vmem [shape: f32[64], index: 1, kind: output, shape index: {}]
  $region1: #{mul.56} parent=0
    #allocation0 [shape = 'u8[4096]{0}', space=vmem, size = 0x1000, scoped, tag = 'scoped mem for output reshape']
    #allocation1 [shape = 'u8[4096]{0}', space=vmem, size = 0x1000, scoped, tag = 'scoped mem for input reshape']
    %s3 = sshll.u32 1, 4
    %s4 = ssub.s32 %s3, 1
    %v5 = vld [vmem:[%s0] sm:%s4]
    %6 = vst [vmem:[#allocation1] sm:%s4] %v5
    %v7 = vld [vmem:[#allocation1] sm:$0x1]
    %vm8 = vcmask 130048
    %9 = vst.msk [vmem:[#allocation0] sm:$0x1] %vm8, %v7
    %s10 = scalar_lea.vmem [#allocation1], 3
    %v11 = vld [vmem:[%s10] sm:$0x1]
    %12 = vrot.lane.b32.xlu0 %v11, 48
    %v13 = vpop.permute.xlu0 %12
    %vm14 = vcmask 523648
    %15 = vst.msk [vmem:[#allocation0] sm:$0x1] %vm14, %v13
    %s16 = scalar_lea.vmem [#allocation1], 2
    %v17 = vld [vmem:[%s16] sm:$0x1]
    %18 = vrot.lane.b32.xlu0 %v17, 32
    %v19 = vpop.permute.xlu0 %18
    %vm20 = vcmask 392448
    %21 = vst.msk [vmem:[#allocation0] sm:$0x1] %vm20, %v19
    %s22 = scalar_lea.vmem [#allocation1], 1
    %v23 = vld [vmem:[%s22] sm:$0x1]
    %24 = vrot.lane.b32.xlu0 %v23, 16
    %v25 = vpop.permute.xlu0 %24
    %vm26 = vcmask 261248
    %27 = vst.msk [vmem:[#allocation0] sm:$0x1] %vm26, %v25
    %s29 = sshll.u32 1, 1
    %s30 = ssub.s32 %s29, 1
    %v32 = vld [vmem:[#allocation0] sm:%s30]
    %s33 = sshll.u32 1, 1
    %s34 = ssub.s32 %s33, 1
    %35 = vst [vmem:[%s1] sm:%s34] %v32

// kernel: tile.39
$region0: #{tile.39}
  %s0 = inlined_call_operand.vmem [shape: f32[4,16], index: 0, kind: input, shape index: {}]
  %s1 = inlined_call_operand.vmem [shape: f32[1,64], index: 1, kind: output, shape index: {}]
  $region1: #{tile.39} parent=0
    #allocation0 [shape = 'u8[4096]{0}', space=vmem, size = 0x1000, scoped, tag = 'scoped mem for output reshape']
    #allocation1 [shape = 'u8[4096]{0}', space=vmem, size = 0x1000, scoped, tag = 'scoped mem for input reshape']
    %s3 = sshll.u32 1, 4
    %s4 = ssub.s32 %s3, 1
    %v5 = vld [vmem:[%s0] sm:%s4]
    %6 = vst [vmem:[#allocation1] sm:%s4] %v5
    %v7 = vld [vmem:[#allocation1] sm:$0x1]
    %vm8 = vcmask 130048
    %9 = vst.msk [vmem:[#allocation0] sm:$0x1] %vm8, %v7
    %s10 = scalar_lea.vmem [#allocation1], 3
    %v11 = vld [vmem:[%s10] sm:$0x1]
    %12 = vrot.lane.b32.xlu0 %v11, 48
    %v13 = vpop.permute.xlu0 %12
    %vm14 = vcmask 523648
    %15 = vst.msk [vmem:[#allocation0] sm:$0x1] %vm14, %v13
    %s16 = scalar_lea.vmem [#allocation1], 2
    %v17 = vld [vmem:[%s16] sm:$0x1]
    %18 = vrot.lane.b32.xlu0 %v17, 32
    %v19 = vpop.permute.xlu0 %18
    %vm20 = vcmask 392448
    %21 = vst.msk [vmem:[#allocation0] sm:$0x1] %vm20, %v19
    %s22 = scalar_lea.vmem [#allocation1], 1
    %v23 = vld [vmem:[%s22] sm:$0x1]
    %24 = vrot.lane.b32.xlu0 %v23, 16
    %v25 = vpop.permute.xlu0 %24
    %vm26 = vcmask 261248
    %27 = vst.msk [vmem:[#allocation0] sm:$0x1] %vm26, %v25
    %s29 = sshll.u32 1, 1
    %s30 = ssub.s32 %s29, 1
    %v32 = vld [vmem:[#allocation0] sm:%s30]
    %s33 = sshll.u32 1, 1
    %s34 = ssub.s32 %s33, 1
    %35 = vst [vmem:[%s1] sm:%s34] %v32

// kernel: tile.43
$region0: #{tile.43}
  #allocation0 [shape = 's32[1]{0}', space=sflag, size = 0x4, scoped, tag = 'scoped memory for tile.43']
  %s0 = inlined_call_operand.vmem [shape: f32[8], index: 0, kind: input, shape index: {}]
  %s1 = inlined_call_operand.vmem [shape: f32[4,8], index: 1, kind: output, shape index: {}]
  // Predicated region
  $region2: #{tile.43} parent=0 // pred_check
    _
  $region3: #{tile.43} parent=0 // pred_check_branch
    %3 = sbr.rel (0) target = $region5
  $region4: #{tile.43} parent=0 // pred_region
    _
  $region5: #{tile.43} parent=0 // pred_fallthru
    _
  %v4 = vld [vmem:[%s0] ss:$0 sm:$0xff]
  %5 = vst [vmem:[%s1] sm:$0xf] %v4

// kernel: mul.62
$region0: #{mul.62}
  %s0 = inlined_call_operand.vmem [shape: f32[4,8], index: 0, kind: input, shape index: {}]
  %s1 = inlined_call_operand.vmem [shape: f32[32], index: 1, kind: output, shape index: {}]
  $region1: #{mul.62} parent=0
    #allocation0 [shape = 'u8[4096]{0}', space=vmem, size = 0x1000, scoped, tag = 'scoped mem for output reshape']
    #allocation1 [shape = 'u8[4096]{0}', space=vmem, size = 0x1000, scoped, tag = 'scoped mem for input reshape']
    %s3 = sshll.u32 1, 4
    %s4 = ssub.s32 %s3, 1
    %v5 = vld [vmem:[%s0] sm:%s4]
    %6 = vst [vmem:[#allocation1] sm:%s4] %v5
    %v7 = vld [vmem:[#allocation1] sm:$0x1]
    %vm8 = vcmask 64512
    %9 = vst.msk [vmem:[#allocation0] sm:$0x1] %vm8, %v7
    %s10 = scalar_lea.vmem [#allocation1], 3
    %v11 = vld [vmem:[%s10] sm:$0x1]
    %12 = vrot.lane.b32.xlu0 %v11, 24
    %v13 = vpop.permute.xlu0 %12
    %vm14 = vcmask 261312
    %15 = vst.msk [vmem:[#allocation0] sm:$0x1] %vm14, %v13
    %s16 = scalar_lea.vmem [#allocation1], 2
    %v17 = vld [vmem:[%s16] sm:$0x1]
    %18 = vrot.lane.b32.xlu0 %v17, 16
    %v19 = vpop.permute.xlu0 %18
    %vm20 = vcmask 195712
    %21 = vst.msk [vmem:[#allocation0] sm:$0x1] %vm20, %v19
    %s22 = scalar_lea.vmem [#allocation1], 1
    %v23 = vld [vmem:[%s22] sm:$0x1]
    %24 = vrot.lane.b32.xlu0 %v23, 8
    %v25 = vpop.permute.xlu0 %24
    %vm26 = vcmask 130112
    %27 = vst.msk [vmem:[#allocation0] sm:$0x1] %vm26, %v25
    %s29 = sshll.u32 1, 1
    %s30 = ssub.s32 %s29, 1
    %v32 = vld [vmem:[#allocation0] sm:%s30]
    %s33 = sshll.u32 1, 1
    %s34 = ssub.s32 %s33, 1
    %35 = vst [vmem:[%s1] sm:%s34] %v32

// kernel: tile.49
$region0: #{tile.49}
  %s0 = inlined_call_operand.vmem [shape: f32[4,8], index: 0, kind: input, shape index: {}]
  %s1 = inlined_call_operand.vmem [shape: f32[1,32], index: 1, kind: output, shape index: {}]
  $region1: #{tile.49} parent=0
    #allocation0 [shape = 'u8[4096]{0}', space=vmem, size = 0x1000, scoped, tag = 'scoped mem for output reshape']
    #allocation1 [shape = 'u8[4096]{0}', space=vmem, size = 0x1000, scoped, tag = 'scoped mem for input reshape']
    %s3 = sshll.u32 1, 4
    %s4 = ssub.s32 %s3, 1
    %v5 = vld [vmem:[%s0] sm:%s4]
    %6 = vst [vmem:[#allocation1] sm:%s4] %v5
    %v7 = vld [vmem:[#allocation1] sm:$0x1]
    %vm8 = vcmask 64512
    %9 = vst.msk [vmem:[#allocation0] sm:$0x1] %vm8, %v7
    %s10 = scalar_lea.vmem [#allocation1], 3
    %v11 = vld [vmem:[%s10] sm:$0x1]
    %12 = vrot.lane.b32.xlu0 %v11, 24
    %v13 = vpop.permute.xlu0 %12
    %vm14 = vcmask 261312
    %15 = vst.msk [vmem:[#allocation0] sm:$0x1] %vm14, %v13
    %s16 = scalar_lea.vmem [#allocation1], 2
    %v17 = vld [vmem:[%s16] sm:$0x1]
    %18 = vrot.lane.b32.xlu0 %v17, 16
    %v19 = vpop.permute.xlu0 %18
    %vm20 = vcmask 195712
    %21 = vst.msk [vmem:[#allocation0] sm:$0x1] %vm20, %v19
    %s22 = scalar_lea.vmem [#allocation1], 1
    %v23 = vld [vmem:[%s22] sm:$0x1]
    %24 = vrot.lane.b32.xlu0 %v23, 8
    %v25 = vpop.permute.xlu0 %24
    %vm26 = vcmask 130112
    %27 = vst.msk [vmem:[#allocation0] sm:$0x1] %vm26, %v25
    %s29 = sshll.u32 1, 1
    %s30 = ssub.s32 %s29, 1
    %v32 = vld [vmem:[#allocation0] sm:%s30]
    %s33 = sshll.u32 1, 1
    %s34 = ssub.s32 %s33, 1
    %35 = vst [vmem:[%s1] sm:%s34] %v32

// kernel: _lambda_.12
$region0: #{_lambda_.12}
  #allocation0 [shape = 'u32[]', space=smem, size = 0x4, offset = 0x4, fixed_abs, tag = 'smem constant byte address 0x4 - core index']
  #allocation1 [shape = 'u32[144,128]{1,0:T(1,128)}', space=vmem, size = 0x12000, scoped, tag = 'internal scratch']
  %s0 = inlined_call_operand.vmem [shape: bf16[8,128], index: 0, kind: input, shape index: {}]
  %s1 = inlined_call_operand.vmem [shape: bf16[128,64], index: 1, kind: input, shape index: {}]
  %s2 = inlined_call_operand.vmem [shape: f32[1,64], index: 2, kind: input, shape index: {}]
  %s3 = inlined_call_operand.vmem [shape: bf16[8,64], index: 3, kind: output, shape index: {}]
  %s4 = sld [smem:[#allocation0]]
  $region22: #{_lambda_.12} parent=0
    _
  %s6 = ssub.s32 1, %s4
  %s7 = scalar_select 0, %s6, %s4
  // Predicated region
  $region2: #{_lambda_.12} parent=0 // pred_check
    _
  $region3: #{_lambda_.12} parent=0 // pred_check_branch
    %9 = sbr.rel (0) target = $region5
  $region4: #{_lambda_.12} parent=0 // pred_region
    _
  $region5: #{_lambda_.12} parent=0 // pred_fallthru
    _
  // Predicated region
  $region6: #{_lambda_.12} parent=0 // pred_check
    _
  $region7: #{_lambda_.12} parent=0 // pred_check_branch
    %11 = sbr.rel (0) target = $region9
  $region8: #{_lambda_.12} parent=0 // pred_region
    _
  $region9: #{_lambda_.12} parent=0 // pred_fallthru
    _
  // Predicated region
  $region10: #{_lambda_.12} parent=0 // pred_check
    _
  $region11: #{_lambda_.12} parent=0 // pred_check_branch
    %13 = sbr.rel (0) target = $region13
  $region12: #{_lambda_.12} parent=0 // pred_region
    _
  $region13: #{_lambda_.12} parent=0 // pred_fallthru
    _
  %v15 = vld [vmem:[%s0] sm:$0xf]
  %v16 = vld [vmem:[%s1] sm:$0xf]
  %v17 = vld [vmem:[%s1 + $0x4] sm:$0xf]
  %v18 = vld [vmem:[%s1 + $0x8] sm:$0xf]
  %v19 = vld [vmem:[%s1 + $0xc] sm:$0xf]
  %v20 = vld [vmem:[%s1 + $0x10] sm:$0xf]
  %v21 = vld [vmem:[%s1 + $0x14] sm:$0xf]
  %v22 = vld [vmem:[%s1 + $0x18] sm:$0xf]
  %v23 = vld [vmem:[%s1 + $0x1c] sm:$0xf]
  %v24 = vld [vmem:[%s1 + $0x20] sm:$0xf]
  %v25 = vld [vmem:[%s1 + $0x24] sm:$0xf]
  %v26 = vld [vmem:[%s1 + $0x28] sm:$0xf]
  %v27 = vld [vmem:[%s1 + $0x2c] sm:$0xf]
  %v28 = vld [vmem:[%s1 + $0x30] sm:$0xf]
  %v29 = vld [vmem:[%s1 + $0x34] sm:$0xf]
  %v30 = vld [vmem:[%s1 + $0x38] sm:$0xf]
  %v31 = vld [vmem:[%s1 + $0x3c] sm:$0xf]
  %v32 = vld [vmem:[%s2] sm:$0x1]
  %v34 = vlaneseq
  %v35 = vshrl.u32 %v34, 7
  %v36 = vsub.s32 0, %v35
  %v37 = vrot.slane %v32, %v36
  %v55 = vunpack.c.l.b16 %v16
  %v56 = vunpack.c.l.b16 %v17
  %v57 = vunpack.c.l.b16 %v18
  %v58 = vunpack.c.l.b16 %v19
  %v59 = vunpack.c.l.b16 %v20
  %v60 = vunpack.c.l.b16 %v21
  %v61 = vunpack.c.l.b16 %v22
  %v62 = vunpack.c.l.b16 %v23
  %v63 = vunpack.c.l.b16 %v24
  %v64 = vunpack.c.l.b16 %v25
  %v65 = vunpack.c.l.b16 %v26
  %v66 = vunpack.c.l.b16 %v27
  %v67 = vunpack.c.l.b16 %v28
  %v68 = vunpack.c.l.b16 %v29
  %v69 = vunpack.c.l.b16 %v30
  %v70 = vunpack.c.l.b16 %v31
  %v71 = vpack.c.b16 %v56, %v55
  %v72 = vpack.c.b16 %v58, %v57
  %v73 = vpack.c.b16 %v60, %v59
  %v74 = vpack.c.b16 %v62, %v61
  %v75 = vpack.c.b16 %v64, %v63
  %v76 = vpack.c.b16 %v66, %v65
  %v77 = vpack.c.b16 %v68, %v67
  %v78 = vpack.c.b16 %v70, %v69
  %87 = vmatprep.subr.bf16.mxu0 0
  %88 = vmatpush1.bf16.msra.mxu0 %v78
  %89 = vmatprep.subr.bf16.mxu0 0
  %90 = vmatpush1.bf16.msra.mxu0 %v77
  %91 = vmatprep.subr.bf16.mxu0 0
  %92 = vmatpush1.bf16.msra.mxu0 %v76
  %93 = vmatprep.subr.bf16.mxu0 0
  %94 = vmatpush1.bf16.msra.mxu0 %v75
  %95 = vmatprep.subr.bf16.mxu0 0
  %96 = vmatpush1.bf16.msra.mxu0 %v74
  %97 = vmatprep.subr.bf16.mxu0 0
  %98 = vmatpush1.bf16.msra.mxu0 %v73
  %99 = vmatprep.subr.bf16.mxu0 0
  %100 = vmatpush1.bf16.msra.mxu0 %v72
  %101 = vmatprep.subr.bf16.mxu0 0
  %102 = vmatpush1.bf16.msra.mxu0 %v71
  %103 = vmatprep.subr.bf16.mxu0 0
  %104 = vmatpush2.bf16.msra.mxu0 0
  %105 = vmatprep.subr.bf16.mxu0 0
  %106 = vmatpush2.bf16.msra.mxu0 0
  %107 = vmatprep.subr.bf16.mxu0 0
  %108 = vmatpush2.bf16.msra.mxu0 0
  %109 = vmatprep.subr.bf16.mxu0 0
  %110 = vmatpush2.bf16.msra.mxu0 0
  %111 = vmatprep.subr.bf16.mxu0 0
  %112 = vmatpush2.bf16.msra.mxu0 0
  %113 = vmatprep.subr.bf16.mxu0 0
  %114 = vmatpush2.bf16.msra.mxu0 0
  %115 = vmatprep.subr.bf16.mxu0 0
  %116 = vmatpush2.bf16.msra.mxu0 0
  %117 = vmatprep.subr.bf16.mxu0 0
  %118 = vmatpush2.bf16.msra.mxu0 0
  %119 = vmatprep.mubr.bf16.mxu0 0
  %120 = vmatmul.mubr.bf16.gmra.mxu0 %v15
  %v121 = vpop.f32.mrf.mxu0
  %v122 = vadd.f32 %v37, %v121
  %v123 = vpop.f32.mrf.mxu0
  %v124 = vpop.f32.mrf.mxu0
  %v125 = vpop.f32.mrf.mxu0
  %126 = vdwg.mxu0
  %vm127 = vcmp.ge.f32.partialorder %v122, 0.0
  %v128 = vmul.f32 %v122, 0.01
  %v129 = vsel %vm127, %v122, %v128
  %v130 = vpack.c.bf16 %v129, %v129
  %vm131 = vcmask 519168
  %132 = vst.msk [vmem:[%s3] sm:$0xf] %vm131, %v130
  // Predicated region
  $region14: #{_lambda_.12} parent=0 // pred_check
    _
  $region15: #{_lambda_.12} parent=0 // pred_check_branch
    %134 = sbr.rel (0) target = $region17
  $region16: #{_lambda_.12} parent=0 // pred_region
    _
  $region17: #{_lambda_.12} parent=0 // pred_fallthru
    _
  // Predicated region
  $region18: #{_lambda_.12} parent=0 // pred_check
    _
  $region19: #{_lambda_.12} parent=0 // pred_check_branch
    %136 = sbr.rel (0) target = $region21
  $region20: #{_lambda_.12} parent=0 // pred_region
    _
  $region21: #{_lambda_.12} parent=0 // pred_fallthru
    _

// kernel: _lambda_.13
$region0: #{_lambda_.13}
  #allocation0 [shape = 'u32[]', space=smem, size = 0x4, offset = 0x4, fixed_abs, tag = 'smem constant byte address 0x4 - core index']
  #allocation1 [shape = 'u32[144,128]{1,0:T(1,128)}', space=vmem, size = 0x12000, scoped, tag = 'internal scratch']
  %s0 = inlined_call_operand.vmem [shape: bf16[32,64], index: 0, kind: input, shape index: {}]
  %s1 = inlined_call_operand.vmem [shape: bf16[64,32], index: 1, kind: input, shape index: {}]
  %s2 = inlined_call_operand.vmem [shape: f32[1,32], index: 2, kind: input, shape index: {}]
  %s3 = inlined_call_operand.vmem [shape: bf16[32,32], index: 3, kind: output, shape index: {}]
  %s4 = sld [smem:[#allocation0]]
  $region22: #{_lambda_.13} parent=0
    _
  %s6 = ssub.s32 1, %s4
  %s7 = scalar_select 0, %s6, %s4
  // Predicated region
  $region2: #{_lambda_.13} parent=0 // pred_check
    _
  $region3: #{_lambda_.13} parent=0 // pred_check_branch
    %9 = sbr.rel (0) target = $region5
  $region4: #{_lambda_.13} parent=0 // pred_region
    _
  $region5: #{_lambda_.13} parent=0 // pred_fallthru
    _
  // Predicated region
  $region6: #{_lambda_.13} parent=0 // pred_check
    _
  $region7: #{_lambda_.13} parent=0 // pred_check_branch
    %11 = sbr.rel (0) target = $region9
  $region8: #{_lambda_.13} parent=0 // pred_region
    _
  $region9: #{_lambda_.13} parent=0 // pred_fallthru
    _
  // Predicated region
  $region10: #{_lambda_.13} parent=0 // pred_check
    _
  $region11: #{_lambda_.13} parent=0 // pred_check_branch
    %13 = sbr.rel (0) target = $region13
  $region12: #{_lambda_.13} parent=0 // pred_region
    _
  $region13: #{_lambda_.13} parent=0 // pred_fallthru
    _
  %v15 = vld [vmem:[%s0] sm:$0xf]
  %v16 = vld [vmem:[%s0 + $0x4] sm:$0xf]
  %v17 = vld [vmem:[%s0 + $0x8] sm:$0xf]
  %v18 = vld [vmem:[%s0 + $0xc] sm:$0xf]
  %v19 = vld [vmem:[%s1] sm:$0xf]
  %v20 = vld [vmem:[%s1 + $0x4] sm:$0xf]
  %v21 = vld [vmem:[%s1 + $0x8] sm:$0xf]
  %v22 = vld [vmem:[%s1 + $0xc] sm:$0xf]
  %v23 = vld [vmem:[%s1 + $0x10] sm:$0xf]
  %v24 = vld [vmem:[%s1 + $0x14] sm:$0xf]
  %v25 = vld [vmem:[%s1 + $0x18] sm:$0xf]
  %v26 = vld [vmem:[%s1 + $0x1c] sm:$0xf]
  %v27 = vld [vmem:[%s2] sm:$0x1]
  %v29 = vlaneseq
  %v30 = vshrl.u32 %v29, 7
  %v31 = vsub.s32 0, %v30
  %v32 = vrot.slane %v27, %v31
  %v38 = vunpack.c.l.b16 %v15
  %v39 = vunpack.c.l.b16 %v16
  %v40 = vunpack.c.l.b16 %v17
  %v41 = vunpack.c.l.b16 %v18
  %v42 = vpack.c.b16 %v39, %v38
  %v43 = vpack.c.b16 %v41, %v40
  %v52 = vunpack.c.l.b16 %v19
  %v53 = vunpack.c.l.b16 %v20
  %v54 = vunpack.c.l.b16 %v21
  %v55 = vunpack.c.l.b16 %v22
  %v56 = vunpack.c.l.b16 %v23
  %v57 = vunpack.c.l.b16 %v24
  %v58 = vunpack.c.l.b16 %v25
  %v59 = vunpack.c.l.b16 %v26
  %v60 = vpack.c.b16 %v53, %v52
  %v61 = vpack.c.b16 %v55, %v54
  %v62 = vpack.c.b16 %v57, %v56
  %v63 = vpack.c.b16 %v59, %v58
  %vm68 = vcmask 523264
  %v70 = vsel %vm68, %v42, 0
  %v73 = vsel %vm68, %v43, 0
  %75 = vmatprep.subr.bf16.mxu0 0
  %76 = vmatpush1.bf16.msra.mxu0 0
  %77 = vmatprep.subr.bf16.mxu0 0
  %78 = vmatpush1.bf16.msra.mxu0 0
  %79 = vmatprep.subr.bf16.mxu0 0
  %80 = vmatpush1.bf16.msra.mxu0 0
  %81 = vmatprep.subr.bf16.mxu0 0
  %82 = vmatpush1.bf16.msra.mxu0 0
  %83 = vmatprep.subr.bf16.mxu0 0
  %84 = vmatpush1.bf16.msra.mxu0 %v63
  %85 = vmatprep.subr.bf16.mxu0 0
  %86 = vmatpush1.bf16.msra.mxu0 %v62
  %87 = vmatprep.subr.bf16.mxu0 0
  %88 = vmatpush1.bf16.msra.mxu0 %v61
  %89 = vmatprep.subr.bf16.mxu0 0
  %90 = vmatpush1.bf16.msra.mxu0 %v60
  %91 = vmatprep.subr.bf16.mxu0 0
  %92 = vmatpush2.bf16.msra.mxu0 0
  %93 = vmatprep.subr.bf16.mxu0 0
  %94 = vmatpush2.bf16.msra.mxu0 0
  %95 = vmatprep.subr.bf16.mxu0 0
  %96 = vmatpush2.bf16.msra.mxu0 0
  %97 = vmatprep.subr.bf16.mxu0 0
  %98 = vmatpush2.bf16.msra.mxu0 0
  %99 = vmatprep.subr.bf16.mxu0 0
  %100 = vmatpush2.bf16.msra.mxu0 0
  %101 = vmatprep.subr.bf16.mxu0 0
  %102 = vmatpush2.bf16.msra.mxu0 0
  %103 = vmatprep.subr.bf16.mxu0 0
  %104 = vmatpush2.bf16.msra.mxu0 0
  %105 = vmatprep.subr.bf16.mxu0 0
  %106 = vmatpush2.bf16.msra.mxu0 0
  %107 = vmatprep.mubr.bf16.mxu0 0
  %108 = vmatmul.mubr.bf16.gmra.mxu0 %v70
  %v109 = vpop.f32.mrf.mxu0
  %v110 = vadd.f32 %v32, %v109
  %v111 = vpop.f32.mrf.mxu0
  %v112 = vpop.f32.mrf.mxu0
  %v113 = vadd.f32 %v32, %v112
  %v114 = vpop.f32.mrf.mxu0
  %115 = vmatprep.mubr.bf16.mxu0 0
  %116 = vmatmul.mubr.bf16.gmra.mxu0 %v73
  %v117 = vpop.f32.mrf.mxu0
  %v118 = vadd.f32 %v32, %v117
  %v119 = vpop.f32.mrf.mxu0
  %v120 = vpop.f32.mrf.mxu0
  %v121 = vadd.f32 %v32, %v120
  %v122 = vpop.f32.mrf.mxu0
  %123 = vdwg.mxu0
  %vm124 = vcmp.ge.f32.partialorder %v110, 0.0
  %vm125 = vcmp.ge.f32.partialorder %v113, 0.0
  %vm126 = vcmp.ge.f32.partialorder %v118, 0.0
  %vm127 = vcmp.ge.f32.partialorder %v121, 0.0
  %v128 = vmul.f32 %v110, 0.01
  %v129 = vmul.f32 %v113, 0.01
  %v130 = vmul.f32 %v118, 0.01
  %v131 = vmul.f32 %v121, 0.01
  %v132 = vsel %vm124, %v110, %v128
  %v133 = vsel %vm125, %v113, %v129
  %v134 = vsel %vm126, %v118, %v130
  %v135 = vsel %vm127, %v121, %v131
  %v136 = vpack.c.bf16 %v133, %v132
  %v137 = vpack.c.bf16 %v135, %v134
  %v140 = vunpack.c.l.b16 %v136
  %v141 = vunpack.c.h.b16 %v136
  %v142 = vunpack.c.l.b16 %v137
  %v143 = vunpack.c.h.b16 %v137
  %v144 = vpack.c.b16 %v140, %v140
  %v145 = vpack.c.b16 %v141, %v141
  %v146 = vpack.c.b16 %v142, %v142
  %v147 = vpack.c.b16 %v143, %v143
  %vm152 = vcmask 257024
  %153 = vst.msk [vmem:[%s3] sm:$0xf] %vm152, %v144
  %154 = vst.msk [vmem:[%s3 + $0x4] sm:$0xf] %vm152, %v145
  %155 = vst.msk [vmem:[%s3 + $0x8] sm:$0xf] %vm152, %v146
  %156 = vst.msk [vmem:[%s3 + $0xc] sm:$0xf] %vm152, %v147
  // Predicated region
  $region14: #{_lambda_.13} parent=0 // pred_check
    _
  $region15: #{_lambda_.13} parent=0 // pred_check_branch
    %158 = sbr.rel (0) target = $region17
  $region16: #{_lambda_.13} parent=0 // pred_region
    _
  $region17: #{_lambda_.13} parent=0 // pred_fallthru
    _
  // Predicated region
  $region18: #{_lambda_.13} parent=0 // pred_check
    _
  $region19: #{_lambda_.13} parent=0 // pred_check_branch
    %160 = sbr.rel (0) target = $region21
  $region20: #{_lambda_.13} parent=0 // pred_region
    _
  $region21: #{_lambda_.13} parent=0 // pred_fallthru
    _

// kernel: _lambda_.14
$region0: #{_lambda_.14}
  #allocation0 [shape = 'u32[]', space=smem, size = 0x4, offset = 0x4, fixed_abs, tag = 'smem constant byte address 0x4 - core index']
  #allocation1 [shape = 'u32[144,128]{1,0:T(1,128)}', space=vmem, size = 0x12000, scoped, tag = 'internal scratch']
  %s0 = inlined_call_operand.vmem [shape: bf16[128,32], index: 0, kind: input, shape index: {}]
  %s1 = inlined_call_operand.vmem [shape: bf16[32,32], index: 1, kind: input, shape index: {}]
  %s2 = inlined_call_operand.vmem [shape: f32[1,32], index: 2, kind: input, shape index: {}]
  %s3 = inlined_call_operand.vmem [shape: bf16[128,32], index: 3, kind: output, shape index: {}]
  %s4 = sld [smem:[#allocation0]]
  $region22: #{_lambda_.14} parent=0
    _
  %s6 = ssub.s32 1, %s4
  %s7 = scalar_select 0, %s6, %s4
  // Predicated region
  $region2: #{_lambda_.14} parent=0 // pred_check
    _
  $region3: #{_lambda_.14} parent=0 // pred_check_branch
    %9 = sbr.rel (0) target = $region5
  $region4: #{_lambda_.14} parent=0 // pred_region
    _
  $region5: #{_lambda_.14} parent=0 // pred_fallthru
    _
  // Predicated region
  $region6: #{_lambda_.14} parent=0 // pred_check
    _
  $region7: #{_lambda_.14} parent=0 // pred_check_branch
    %11 = sbr.rel (0) target = $region9
  $region8: #{_lambda_.14} parent=0 // pred_region
    _
  $region9: #{_lambda_.14} parent=0 // pred_fallthru
    _
  // Predicated region
  $region10: #{_lambda_.14} parent=0 // pred_check
    _
  $region11: #{_lambda_.14} parent=0 // pred_check_branch
    %13 = sbr.rel (0) target = $region13
  $region12: #{_lambda_.14} parent=0 // pred_region
    _
  $region13: #{_lambda_.14} parent=0 // pred_fallthru
    _
  %v15 = vld [vmem:[%s0] sm:$0xf]
  %v16 = vld [vmem:[%s0 + $0x4] sm:$0xf]
  %v17 = vld [vmem:[%s0 + $0x8] sm:$0xf]
  %v18 = vld [vmem:[%s0 + $0xc] sm:$0xf]
  %v19 = vld [vmem:[%s0 + $0x10] sm:$0xf]
  %v20 = vld [vmem:[%s0 + $0x14] sm:$0xf]
  %v21 = vld [vmem:[%s0 + $0x18] sm:$0xf]
  %v22 = vld [vmem:[%s0 + $0x1c] sm:$0xf]
  %v23 = vld [vmem:[%s0 + $0x20] sm:$0xf]
  %v24 = vld [vmem:[%s0 + $0x24] sm:$0xf]
  %v25 = vld [vmem:[%s0 + $0x28] sm:$0xf]
  %v26 = vld [vmem:[%s0 + $0x2c] sm:$0xf]
  %v27 = vld [vmem:[%s0 + $0x30] sm:$0xf]
  %v28 = vld [vmem:[%s0 + $0x34] sm:$0xf]
  %v29 = vld [vmem:[%s0 + $0x38] sm:$0xf]
  %v30 = vld [vmem:[%s0 + $0x3c] sm:$0xf]
  %v31 = vld [vmem:[%s1] sm:$0xf]
  %v32 = vld [vmem:[%s1 + $0x4] sm:$0xf]
  %v33 = vld [vmem:[%s1 + $0x8] sm:$0xf]
  %v34 = vld [vmem:[%s1 + $0xc] sm:$0xf]
  %v35 = vld [vmem:[%s2] sm:$0x1]
  %v37 = vlaneseq
  %v38 = vshrl.u32 %v37, 7
  %v39 = vsub.s32 0, %v38
  %v40 = vrot.slane %v35, %v39
  %v58 = vunpack.c.l.b16 %v15
  %v59 = vunpack.c.l.b16 %v16
  %v60 = vunpack.c.l.b16 %v17
  %v61 = vunpack.c.l.b16 %v18
  %v62 = vunpack.c.l.b16 %v19
  %v63 = vunpack.c.l.b16 %v20
  %v64 = vunpack.c.l.b16 %v21
  %v65 = vunpack.c.l.b16 %v22
  %v66 = vunpack.c.l.b16 %v23
  %v67 = vunpack.c.l.b16 %v24
  %v68 = vunpack.c.l.b16 %v25
  %v69 = vunpack.c.l.b16 %v26
  %v70 = vunpack.c.l.b16 %v27
  %v71 = vunpack.c.l.b16 %v28
  %v72 = vunpack.c.l.b16 %v29
  %v73 = vunpack.c.l.b16 %v30
  %v74 = vpack.c.b16 %v59, %v58
  %v75 = vpack.c.b16 %v61, %v60
  %v76 = vpack.c.b16 %v63, %v62
  %v77 = vpack.c.b16 %v65, %v64
  %v78 = vpack.c.b16 %v67, %v66
  %v79 = vpack.c.b16 %v69, %v68
  %v80 = vpack.c.b16 %v71, %v70
  %v81 = vpack.c.b16 %v73, %v72
  %v86 = vunpack.c.l.b16 %v31
  %v87 = vunpack.c.l.b16 %v32
  %v88 = vunpack.c.l.b16 %v33
  %v89 = vunpack.c.l.b16 %v34
  %v90 = vpack.c.b16 %v87, %v86
  %v91 = vpack.c.b16 %v89, %v88
  %vm94 = vcmask 261120
  %v96 = vsel %vm94, %v74, 0
  %v99 = vsel %vm94, %v75, 0
  %v102 = vsel %vm94, %v76, 0
  %v105 = vsel %vm94, %v77, 0
  %v108 = vsel %vm94, %v78, 0
  %v111 = vsel %vm94, %v79, 0
  %v114 = vsel %vm94, %v80, 0
  %v117 = vsel %vm94, %v81, 0
  %119 = vmatprep.subr.bf16.mxu0 0
  %120 = vmatpush1.bf16.msra.mxu0 0
  %121 = vmatprep.subr.bf16.mxu0 0
  %122 = vmatpush1.bf16.msra.mxu0 0
  %123 = vmatprep.subr.bf16.mxu0 0
  %124 = vmatpush1.bf16.msra.mxu0 0
  %125 = vmatprep.subr.bf16.mxu0 0
  %126 = vmatpush1.bf16.msra.mxu0 0
  %127 = vmatprep.subr.bf16.mxu0 0
  %128 = vmatpush1.bf16.msra.mxu0 0
  %129 = vmatprep.subr.bf16.mxu0 0
  %130 = vmatpush1.bf16.msra.mxu0 0
  %131 = vmatprep.subr.bf16.mxu0 0
  %132 = vmatpush1.bf16.msra.mxu0 %v91
  %133 = vmatprep.subr.bf16.mxu0 0
  %134 = vmatpush1.bf16.msra.mxu0 %v90
  %135 = vmatprep.subr.bf16.mxu0 0
  %136 = vmatpush2.bf16.msra.mxu0 0
  %137 = vmatprep.subr.bf16.mxu0 0
  %138 = vmatpush2.bf16.msra.mxu0 0
  %139 = vmatprep.subr.bf16.mxu0 0
  %140 = vmatpush2.bf16.msra.mxu0 0
  %141 = vmatprep.subr.bf16.mxu0 0
  %142 = vmatpush2.bf16.msra.mxu0 0
  %143 = vmatprep.subr.bf16.mxu0 0
  %144 = vmatpush2.bf16.msra.mxu0 0
  %145 = vmatprep.subr.bf16.mxu0 0
  %146 = vmatpush2.bf16.msra.mxu0 0
  %147 = vmatprep.subr.bf16.mxu0 0
  %148 = vmatpush2.bf16.msra.mxu0 0
  %149 = vmatprep.subr.bf16.mxu0 0
  %150 = vmatpush2.bf16.msra.mxu0 0
  %151 = vmatprep.mubr.bf16.mxu0 0
  %152 = vmatmul.mubr.bf16.gmra.mxu0 %v96
  %v153 = vpop.f32.mrf.mxu0
  %v154 = vadd.f32 %v40, %v153
  %v155 = vpop.f32.mrf.mxu0
  %v156 = vpop.f32.mrf.mxu0
  %v157 = vadd.f32 %v40, %v156
  %v158 = vpop.f32.mrf.mxu0
  %159 = vmatprep.mubr.bf16.mxu0 0
  %160 = vmatmul.mubr.bf16.gmra.mxu0 %v99
  %v161 = vpop.f32.mrf.mxu0
  %v162 = vadd.f32 %v40, %v161
  %v163 = vpop.f32.mrf.mxu0
  %v164 = vpop.f32.mrf.mxu0
  %v165 = vadd.f32 %v40, %v164
  %v166 = vpop.f32.mrf.mxu0
  %167 = vmatprep.mubr.bf16.mxu0 0
  %168 = vmatmul.mubr.bf16.gmra.mxu0 %v102
  %v169 = vpop.f32.mrf.mxu0
  %v170 = vadd.f32 %v40, %v169
  %v171 = vpop.f32.mrf.mxu0
  %v172 = vpop.f32.mrf.mxu0
  %v173 = vadd.f32 %v40, %v172
  %v174 = vpop.f32.mrf.mxu0
  %175 = vmatprep.mubr.bf16.mxu0 0
  %176 = vmatmul.mubr.bf16.gmra.mxu0 %v105
  %v177 = vpop.f32.mrf.mxu0
  %v178 = vadd.f32 %v40, %v177
  %v179 = vpop.f32.mrf.mxu0
  %v180 = vpop.f32.mrf.mxu0
  %v181 = vadd.f32 %v40, %v180
  %v182 = vpop.f32.mrf.mxu0
  %183 = vmatprep.mubr.bf16.mxu0 0
  %184 = vmatmul.mubr.bf16.gmra.mxu0 %v108
  %v185 = vpop.f32.mrf.mxu0
  %v186 = vadd.f32 %v40, %v185
  %v187 = vpop.f32.mrf.mxu0
  %v188 = vpop.f32.mrf.mxu0
  %v189 = vadd.f32 %v40, %v188
  %v190 = vpop.f32.mrf.mxu0
  %191 = vmatprep.mubr.bf16.mxu0 0
  %192 = vmatmul.mubr.bf16.gmra.mxu0 %v111
  %v193 = vpop.f32.mrf.mxu0
  %v194 = vadd.f32 %v40, %v193
  %v195 = vpop.f32.mrf.mxu0
  %v196 = vpop.f32.mrf.mxu0
  %v197 = vadd.f32 %v40, %v196
  %v198 = vpop.f32.mrf.mxu0
  %199 = vmatprep.mubr.bf16.mxu0 0
  %200 = vmatmul.mubr.bf16.gmra.mxu0 %v114
  %v201 = vpop.f32.mrf.mxu0
  %v202 = vadd.f32 %v40, %v201
  %v203 = vpop.f32.mrf.mxu0
  %v204 = vpop.f32.mrf.mxu0
  %v205 = vadd.f32 %v40, %v204
  %v206 = vpop.f32.mrf.mxu0
  %207 = vmatprep.mubr.bf16.mxu0 0
  %208 = vmatmul.mubr.bf16.gmra.mxu0 %v117
  %v209 = vpop.f32.mrf.mxu0
  %v210 = vadd.f32 %v40, %v209
  %v211 = vpop.f32.mrf.mxu0
  %v212 = vpop.f32.mrf.mxu0
  %v213 = vadd.f32 %v40, %v212
  %v214 = vpop.f32.mrf.mxu0
  %215 = vdwg.mxu0
  %vm216 = vcmp.ge.f32.partialorder %v154, 0.0
  %vm217 = vcmp.ge.f32.partialorder %v157, 0.0
  %vm218 = vcmp.ge.f32.partialorder %v162, 0.0
  %vm219 = vcmp.ge.f32.partialorder %v165, 0.0
  %vm220 = vcmp.ge.f32.partialorder %v170, 0.0
  %vm221 = vcmp.ge.f32.partialorder %v173, 0.0
  %vm222 = vcmp.ge.f32.partialorder %v178, 0.0
  %vm223 = vcmp.ge.f32.partialorder %v181, 0.0
  %vm224 = vcmp.ge.f32.partialorder %v186, 0.0
  %vm225 = vcmp.ge.f32.partialorder %v189, 0.0
  %vm226 = vcmp.ge.f32.partialorder %v194, 0.0
  %vm227 = vcmp.ge.f32.partialorder %v197, 0.0
  %vm228 = vcmp.ge.f32.partialorder %v202, 0.0
  %vm229 = vcmp.ge.f32.partialorder %v205, 0.0
  %vm230 = vcmp.ge.f32.partialorder %v210, 0.0
  %vm231 = vcmp.ge.f32.partialorder %v213, 0.0
  %v232 = vmul.f32 %v154, 0.01
  %v233 = vmul.f32 %v157, 0.01
  %v234 = vmul.f32 %v162, 0.01
  %v235 = vmul.f32 %v165, 0.01
  %v236 = vmul.f32 %v170, 0.01
  %v237 = vmul.f32 %v173, 0.01
  %v238 = vmul.f32 %v178, 0.01
  %v239 = vmul.f32 %v181, 0.01
  %v240 = vmul.f32 %v186, 0.01
  %v241 = vmul.f32 %v189, 0.01
  %v242 = vmul.f32 %v194, 0.01
  %v243 = vmul.f32 %v197, 0.01
  %v244 = vmul.f32 %v202, 0.01
  %v245 = vmul.f32 %v205, 0.01
  %v246 = vmul.f32 %v210, 0.01
  %v247 = vmul.f32 %v213, 0.01
  %v248 = vsel %vm216, %v154, %v232
  %v249 = vsel %vm217, %v157, %v233
  %v250 = vsel %vm218, %v162, %v234
  %v251 = vsel %vm219, %v165, %v235
  %v252 = vsel %vm220, %v170, %v236
  %v253 = vsel %vm221, %v173, %v237
  %v254 = vsel %vm222, %v178, %v238
  %v255 = vsel %vm223, %v181, %v239
  %v256 = vsel %vm224, %v186, %v240
  %v257 = vsel %vm225, %v189, %v241
  %v258 = vsel %vm226, %v194, %v242
  %v259 = vsel %vm227, %v197, %v243
  %v260 = vsel %vm228, %v202, %v244
  %v261 = vsel %vm229, %v205, %v245
  %v262 = vsel %vm230, %v210, %v246
  %v263 = vsel %vm231, %v213, %v247
  %v264 = vpack.c.bf16 %v249, %v248
  %v265 = vpack.c.bf16 %v251, %v250
  %v266 = vpack.c.bf16 %v253, %v252
  %v267 = vpack.c.bf16 %v255, %v254
  %v268 = vpack.c.bf16 %v257, %v256
  %v269 = vpack.c.bf16 %v259, %v258
  %v270 = vpack.c.bf16 %v261, %v260
  %v271 = vpack.c.bf16 %v263, %v262
  %v280 = vunpack.c.l.b16 %v264
  %v281 = vunpack.c.h.b16 %v264
  %v282 = vunpack.c.l.b16 %v265
  %v283 = vunpack.c.h.b16 %v265
  %v284 = vunpack.c.l.b16 %v266
  %v285 = vunpack.c.h.b16 %v266
  %v286 = vunpack.c.l.b16 %v267
  %v287 = vunpack.c.h.b16 %v267
  %v288 = vunpack.c.l.b16 %v268
  %v289 = vunpack.c.h.b16 %v268
  %v290 = vunpack.c.l.b16 %v269
  %v291 = vunpack.c.h.b16 %v269
  %v292 = vunpack.c.l.b16 %v270
  %v293 = vunpack.c.h.b16 %v270
  %v294 = vunpack.c.l.b16 %v271
  %v295 = vunpack.c.h.b16 %v271
  %v296 = vpack.c.b16 %v280, %v280
  %v297 = vpack.c.b16 %v281, %v281
  %v298 = vpack.c.b16 %v282, %v282
  %v299 = vpack.c.b16 %v283, %v283
  %v300 = vpack.c.b16 %v284, %v284
  %v301 = vpack.c.b16 %v285, %v285
  %v302 = vpack.c.b16 %v286, %v286
  %v303 = vpack.c.b16 %v287, %v287
  %v304 = vpack.c.b16 %v288, %v288
  %v305 = vpack.c.b16 %v289, %v289
  %v306 = vpack.c.b16 %v290, %v290
  %v307 = vpack.c.b16 %v291, %v291
  %v308 = vpack.c.b16 %v292, %v292
  %v309 = vpack.c.b16 %v293, %v293
  %v310 = vpack.c.b16 %v294, %v294
  %v311 = vpack.c.b16 %v295, %v295
  %vm328 = vcmask 257024
  %329 = vst.msk [vmem:[%s3] sm:$0xf] %vm328, %v296
  %330 = vst.msk [vmem:[%s3 + $0x4] sm:$0xf] %vm328, %v297
  %331 = vst.msk [vmem:[%s3 + $0x8] sm:$0xf] %vm328, %v298
  %332 = vst.msk [vmem:[%s3 + $0xc] sm:$0xf] %vm328, %v299
  %333 = vst.msk [vmem:[%s3 + $0x10] sm:$0xf] %vm328, %v300
  %334 = vst.msk [vmem:[%s3 + $0x14] sm:$0xf] %vm328, %v301
  %335 = vst.msk [vmem:[%s3 + $0x18] sm:$0xf] %vm328, %v302
  %336 = vst.msk [vmem:[%s3 + $0x1c] sm:$0xf] %vm328, %v303
  %337 = vst.msk [vmem:[%s3 + $0x20] sm:$0xf] %vm328, %v304
  %338 = vst.msk [vmem:[%s3 + $0x24] sm:$0xf] %vm328, %v305
  %339 = vst.msk [vmem:[%s3 + $0x28] sm:$0xf] %vm328, %v306
  %340 = vst.msk [vmem:[%s3 + $0x2c] sm:$0xf] %vm328, %v307
  %341 = vst.msk [vmem:[%s3 + $0x30] sm:$0xf] %vm328, %v308
  %342 = vst.msk [vmem:[%s3 + $0x34] sm:$0xf] %vm328, %v309
  %343 = vst.msk [vmem:[%s3 + $0x38] sm:$0xf] %vm328, %v310
  %344 = vst.msk [vmem:[%s3 + $0x3c] sm:$0xf] %vm328, %v311
  // Predicated region
  $region14: #{_lambda_.14} parent=0 // pred_check
    _
  $region15: #{_lambda_.14} parent=0 // pred_check_branch
    %346 = sbr.rel (0) target = $region17
  $region16: #{_lambda_.14} parent=0 // pred_region
    _
  $region17: #{_lambda_.14} parent=0 // pred_fallthru
    _
  // Predicated region
  $region18: #{_lambda_.14} parent=0 // pred_check
    _
  $region19: #{_lambda_.14} parent=0 // pred_check_branch
    %348 = sbr.rel (0) target = $region21
  $region20: #{_lambda_.14} parent=0 // pred_region
    _
  $region21: #{_lambda_.14} parent=0 // pred_fallthru
    _

// kernel: _lambda_.15
$region0: #{_lambda_.15}
  #allocation0 [shape = 'u32[]', space=smem, size = 0x4, offset = 0x4, fixed_abs, tag = 'smem constant byte address 0x4 - core index']
  #allocation1 [shape = 'u32[144,128]{1,0:T(1,128)}', space=vmem, size = 0x12000, scoped, tag = 'internal scratch']
  %s0 = inlined_call_operand.vmem [shape: bf16[512,72], index: 0, kind: input, shape index: {}]
  %s1 = inlined_call_operand.vmem [shape: bf16[72,3], index: 1, kind: input, shape index: {}]
  %s2 = inlined_call_operand.vmem [shape: f32[1,3], index: 2, kind: input, shape index: {}]
  %s3 = inlined_call_operand.vmem [shape: f32[512,3], index: 3, kind: output, shape index: {}]
  %s4 = sld [smem:[#allocation0]]
  $region22: #{_lambda_.15} parent=0
    _
  %s6 = ssub.s32 1, %s4
  %s7 = scalar_select 0, %s6, %s4
  // Predicated region
  $region2: #{_lambda_.15} parent=0 // pred_check
    _
  $region3: #{_lambda_.15} parent=0 // pred_check_branch
    %9 = sbr.rel (0) target = $region5
  $region4: #{_lambda_.15} parent=0 // pred_region
    _
  $region5: #{_lambda_.15} parent=0 // pred_fallthru
    _
  // Predicated region
  $region6: #{_lambda_.15} parent=0 // pred_check
    _
  $region7: #{_lambda_.15} parent=0 // pred_check_branch
    %11 = sbr.rel (0) target = $region9
  $region8: #{_lambda_.15} parent=0 // pred_region
    _
  $region9: #{_lambda_.15} parent=0 // pred_fallthru
    _
  // Predicated region
  $region10: #{_lambda_.15} parent=0 // pred_check
    _
  $region11: #{_lambda_.15} parent=0 // pred_check_branch
    %13 = sbr.rel (0) target = $region13
  $region12: #{_lambda_.15} parent=0 // pred_region
    _
  $region13: #{_lambda_.15} parent=0 // pred_fallthru
    _
  %v15 = vld [vmem:[%s0] sm:$0xf]
  %v16 = vld [vmem:[%s0 + $0x4] sm:$0xf]
  %v17 = vld [vmem:[%s0 + $0x8] sm:$0xf]
  %v18 = vld [vmem:[%s0 + $0xc] sm:$0xf]
  %v19 = vld [vmem:[%s0 + $0x10] sm:$0xf]
  %v20 = vld [vmem:[%s0 + $0x14] sm:$0xf]
  %v21 = vld [vmem:[%s0 + $0x18] sm:$0xf]
  %v22 = vld [vmem:[%s0 + $0x1c] sm:$0xf]
  %v23 = vld [vmem:[%s0 + $0x20] sm:$0xf]
  %v24 = vld [vmem:[%s0 + $0x24] sm:$0xf]
  %v25 = vld [vmem:[%s0 + $0x28] sm:$0xf]
  %v26 = vld [vmem:[%s0 + $0x2c] sm:$0xf]
  %v27 = vld [vmem:[%s0 + $0x30] sm:$0xf]
  %v28 = vld [vmem:[%s0 + $0x34] sm:$0xf]
  %v29 = vld [vmem:[%s0 + $0x38] sm:$0xf]
  %v30 = vld [vmem:[%s0 + $0x3c] sm:$0xf]
  %v31 = vld [vmem:[%s0 + $0x40] sm:$0xf]
  %v32 = vld [vmem:[%s0 + $0x44] sm:$0xf]
  %v33 = vld [vmem:[%s0 + $0x48] sm:$0xf]
  %v34 = vld [vmem:[%s0 + $0x4c] sm:$0xf]
  %v35 = vld [vmem:[%s0 + $0x50] sm:$0xf]
  %v36 = vld [vmem:[%s0 + $0x54] sm:$0xf]
  %v37 = vld [vmem:[%s0 + $0x58] sm:$0xf]
  %v38 = vld [vmem:[%s0 + $0x5c] sm:$0xf]
  %v39 = vld [vmem:[%s0 + $0x60] sm:$0xf]
  %v40 = vld [vmem:[%s0 + $0x64] sm:$0xf]
  %v41 = vld [vmem:[%s0 + $0x68] sm:$0xf]
  %v42 = vld [vmem:[%s0 + $0x6c] sm:$0xf]
  %v43 = vld [vmem:[%s0 + $0x70] sm:$0xf]
  %v44 = vld [vmem:[%s0 + $0x74] sm:$0xf]
  %v45 = vld [vmem:[%s0 + $0x78] sm:$0xf]
  %v46 = vld [vmem:[%s0 + $0x7c] sm:$0xf]
  %v47 = vld [vmem:[%s0 + $0x80] sm:$0xf]
  %v48 = vld [vmem:[%s0 + $0x84] sm:$0xf]
  %v49 = vld [vmem:[%s0 + $0x88] sm:$0xf]
  %v50 = vld [vmem:[%s0 + $0x8c] sm:$0xf]
  %v51 = vld [vmem:[%s0 + $0x90] sm:$0xf]
  %v52 = vld [vmem:[%s0 + $0x94] sm:$0xf]
  %v53 = vld [vmem:[%s0 + $0x98] sm:$0xf]
  %v54 = vld [vmem:[%s0 + $0x9c] sm:$0xf]
  %v55 = vld [vmem:[%s0 + $0xa0] sm:$0xf]
  %v56 = vld [vmem:[%s0 + $0xa4] sm:$0xf]
  %v57 = vld [vmem:[%s0 + $0xa8] sm:$0xf]
  %v58 = vld [vmem:[%s0 + $0xac] sm:$0xf]
  %v59 = vld [vmem:[%s0 + $0xb0] sm:$0xf]
  %v60 = vld [vmem:[%s0 + $0xb4] sm:$0xf]
  %v61 = vld [vmem:[%s0 + $0xb8] sm:$0xf]
  %v62 = vld [vmem:[%s0 + $0xbc] sm:$0xf]
  %v63 = vld [vmem:[%s0 + $0xc0] sm:$0xf]
  %v64 = vld [vmem:[%s0 + $0xc4] sm:$0xf]
  %v65 = vld [vmem:[%s0 + $0xc8] sm:$0xf]
  %v66 = vld [vmem:[%s0 + $0xcc] sm:$0xf]
  %v67 = vld [vmem:[%s0 + $0xd0] sm:$0xf]
  %v68 = vld [vmem:[%s0 + $0xd4] sm:$0xf]
  %v69 = vld [vmem:[%s0 + $0xd8] sm:$0xf]
  %v70 = vld [vmem:[%s0 + $0xdc] sm:$0xf]
  %v71 = vld [vmem:[%s0 + $0xe0] sm:$0xf]
  %v72 = vld [vmem:[%s0 + $0xe4] sm:$0xf]
  %v73 = vld [vmem:[%s0 + $0xe8] sm:$0xf]
  %v74 = vld [vmem:[%s0 + $0xec] sm:$0xf]
  %v75 = vld [vmem:[%s0 + $0xf0] sm:$0xf]
  %v76 = vld [vmem:[%s0 + $0xf4] sm:$0xf]
  %v77 = vld [vmem:[%s0 + $0xf8] sm:$0xf]
  %v78 = vld [vmem:[%s0 + $0xfc] sm:$0xf]
  %v79 = vld [vmem:[%s1] sm:$0xf]
  %v80 = vld [vmem:[%s1 + $0x4] sm:$0xf]
  %v81 = vld [vmem:[%s1 + $0x8] sm:$0xf]
  %v82 = vld [vmem:[%s1 + $0xc] sm:$0xf]
  %v83 = vld [vmem:[%s1 + $0x10] sm:$0xf]
  %v84 = vld [vmem:[%s1 + $0x14] sm:$0xf]
  %v85 = vld [vmem:[%s1 + $0x18] sm:$0xf]
  %v86 = vld [vmem:[%s1 + $0x1c] sm:$0xf]
  %v87 = vld [vmem:[%s1 + $0x20] sm:$0xf]
  %v88 = vld [vmem:[%s2] sm:$0x1]
  %v90 = vlaneseq
  %v91 = vshrl.u32 %v90, 7
  %v92 = vsub.s32 0, %v91
  %v93 = vrot.slane %v88, %v92
  %v159 = vunpack.c.l.b16 %v15
  %v160 = vunpack.c.l.b16 %v16
  %v161 = vunpack.c.l.b16 %v17
  %v162 = vunpack.c.l.b16 %v18
  %v163 = vunpack.c.l.b16 %v19
  %v164 = vunpack.c.l.b16 %v20
  %v165 = vunpack.c.l.b16 %v21
  %v166 = vunpack.c.l.b16 %v22
  %v167 = vunpack.c.l.b16 %v23
  %v168 = vunpack.c.l.b16 %v24
  %v169 = vunpack.c.l.b16 %v25
  %v170 = vunpack.c.l.b16 %v26
  %v171 = vunpack.c.l.b16 %v27
  %v172 = vunpack.c.l.b16 %v28
  %v173 = vunpack.c.l.b16 %v29
  %v174 = vunpack.c.l.b16 %v30
  %v175 = vunpack.c.l.b16 %v31
  %v176 = vunpack.c.l.b16 %v32
  %v177 = vunpack.c.l.b16 %v33
  %v178 = vunpack.c.l.b16 %v34
  %v179 = vunpack.c.l.b16 %v35
  %v180 = vunpack.c.l.b16 %v36
  %v181 = vunpack.c.l.b16 %v37
  %v182 = vunpack.c.l.b16 %v38
  %v183 = vunpack.c.l.b16 %v39
  %v184 = vunpack.c.l.b16 %v40
  %v185 = vunpack.c.l.b16 %v41
  %v186 = vunpack.c.l.b16 %v42
  %v187 = vunpack.c.l.b16 %v43
  %v188 = vunpack.c.l.b16 %v44
  %v189 = vunpack.c.l.b16 %v45
  %v190 = vunpack.c.l.b16 %v46
  %v191 = vunpack.c.l.b16 %v47
  %v192 = vunpack.c.l.b16 %v48
  %v193 = vunpack.c.l.b16 %v49
  %v194 = vunpack.c.l.b16 %v50
  %v195 = vunpack.c.l.b16 %v51
  %v196 = vunpack.c.l.b16 %v52
  %v197 = vunpack.c.l.b16 %v53
  %v198 = vunpack.c.l.b16 %v54
  %v199 = vunpack.c.l.b16 %v55
  %v200 = vunpack.c.l.b16 %v56
  %v201 = vunpack.c.l.b16 %v57
  %v202 = vunpack.c.l.b16 %v58
  %v203 = vunpack.c.l.b16 %v59
  %v204 = vunpack.c.l.b16 %v60
  %v205 = vunpack.c.l.b16 %v61
  %v206 = vunpack.c.l.b16 %v62
  %v207 = vunpack.c.l.b16 %v63
  %v208 = vunpack.c.l.b16 %v64
  %v209 = vunpack.c.l.b16 %v65
  %v210 = vunpack.c.l.b16 %v66
  %v211 = vunpack.c.l.b16 %v67
  %v212 = vunpack.c.l.b16 %v68
  %v213 = vunpack.c.l.b16 %v69
  %v214 = vunpack.c.l.b16 %v70
  %v215 = vunpack.c.l.b16 %v71
  %v216 = vunpack.c.l.b16 %v72
  %v217 = vunpack.c.l.b16 %v73
  %v218 = vunpack.c.l.b16 %v74
  %v219 = vunpack.c.l.b16 %v75
  %v220 = vunpack.c.l.b16 %v76
  %v221 = vunpack.c.l.b16 %v77
  %v222 = vunpack.c.l.b16 %v78
  %v223 = vpack.c.b16 %v160, %v159
  %v224 = vpack.c.b16 %v162, %v161
  %v225 = vpack.c.b16 %v164, %v163
  %v226 = vpack.c.b16 %v166, %v165
  %v227 = vpack.c.b16 %v168, %v167
  %v228 = vpack.c.b16 %v170, %v169
  %v229 = vpack.c.b16 %v172, %v171
  %v230 = vpack.c.b16 %v174, %v173
  %v231 = vpack.c.b16 %v176, %v175
  %v232 = vpack.c.b16 %v178, %v177
  %v233 = vpack.c.b16 %v180, %v179
  %v234 = vpack.c.b16 %v182, %v181
  %v235 = vpack.c.b16 %v184, %v183
  %v236 = vpack.c.b16 %v186, %v185
  %v237 = vpack.c.b16 %v188, %v187
  %v238 = vpack.c.b16 %v190, %v189
  %v239 = vpack.c.b16 %v192, %v191
  %v240 = vpack.c.b16 %v194, %v193
  %v241 = vpack.c.b16 %v196, %v195
  %v242 = vpack.c.b16 %v198, %v197
  %v243 = vpack.c.b16 %v200, %v199
  %v244 = vpack.c.b16 %v202, %v201
  %v245 = vpack.c.b16 %v204, %v203
  %v246 = vpack.c.b16 %v206, %v205
  %v247 = vpack.c.b16 %v208, %v207
  %v248 = vpack.c.b16 %v210, %v209
  %v249 = vpack.c.b16 %v212, %v211
  %v250 = vpack.c.b16 %v214, %v213
  %v251 = vpack.c.b16 %v216, %v215
  %v252 = vpack.c.b16 %v218, %v217
  %v253 = vpack.c.b16 %v220, %v219
  %v254 = vpack.c.b16 %v222, %v221
  %v264 = vunpack.c.l.b16 %v79
  %v265 = vunpack.c.l.b16 %v80
  %v266 = vunpack.c.l.b16 %v81
  %v267 = vunpack.c.l.b16 %v82
  %v268 = vunpack.c.l.b16 %v83
  %v269 = vunpack.c.l.b16 %v84
  %v270 = vunpack.c.l.b16 %v85
  %v271 = vunpack.c.l.b16 %v86
  %v272 = vunpack.c.l.b16 %v87
  %v273 = vpack.c.b16 %v265, %v264
  %v274 = vpack.c.b16 %v267, %v266
  %v275 = vpack.c.b16 %v269, %v268
  %v276 = vpack.c.b16 %v271, %v270
  %v277 = vpack.c.b16 %v272, %v272
  %vm282 = vcmask 588800
  %v284 = vsel %vm282, %v223, 0
  %v287 = vsel %vm282, %v224, 0
  %v290 = vsel %vm282, %v225, 0
  %v293 = vsel %vm282, %v226, 0
  %v296 = vsel %vm282, %v227, 0
  %v299 = vsel %vm282, %v228, 0
  %v302 = vsel %vm282, %v229, 0
  %v305 = vsel %vm282, %v230, 0
  %v308 = vsel %vm282, %v231, 0
  %v311 = vsel %vm282, %v232, 0
  %v314 = vsel %vm282, %v233, 0
  %v317 = vsel %vm282, %v234, 0
  %v320 = vsel %vm282, %v235, 0
  %v323 = vsel %vm282, %v236, 0
  %v326 = vsel %vm282, %v237, 0
  %v329 = vsel %vm282, %v238, 0
  %v332 = vsel %vm282, %v239, 0
  %v335 = vsel %vm282, %v240, 0
  %v338 = vsel %vm282, %v241, 0
  %v341 = vsel %vm282, %v242, 0
  %v344 = vsel %vm282, %v243, 0
  %v347 = vsel %vm282, %v244, 0
  %v350 = vsel %vm282, %v245, 0
  %v353 = vsel %vm282, %v246, 0
  %v356 = vsel %vm282, %v247, 0
  %v359 = vsel %vm282, %v248, 0
  %v362 = vsel %vm282, %v249, 0
  %v365 = vsel %vm282, %v250, 0
  %v368 = vsel %vm282, %v251, 0
  %v371 = vsel %vm282, %v252, 0
  %v374 = vsel %vm282, %v253, 0
  %v377 = vsel %vm282, %v254, 0
  %vm379 = vcmask 1043456
  %v381 = vsel %vm379, %v277, 0
  %383 = vmatprep.subr.bf16.mxu0 0
  %384 = vmatpush1.bf16.msra.mxu0 0
  %385 = vmatprep.subr.bf16.mxu0 0
  %386 = vmatpush1.bf16.msra.mxu0 0
  %387 = vmatprep.subr.bf16.mxu0 0
  %388 = vmatpush1.bf16.msra.mxu0 0
  %389 = vmatprep.subr.bf16.mxu0 0
  %390 = vmatpush1.bf16.msra.mxu0 %v381
  %391 = vmatprep.subr.bf16.mxu0 0
  %392 = vmatpush1.bf16.msra.mxu0 %v276
  %393 = vmatprep.subr.bf16.mxu0 0
  %394 = vmatpush1.bf16.msra.mxu0 %v275
  %395 = vmatprep.subr.bf16.mxu0 0
  %396 = vmatpush1.bf16.msra.mxu0 %v274
  %397 = vmatprep.subr.bf16.mxu0 0
  %398 = vmatpush1.bf16.msra.mxu0 %v273
  %399 = vmatprep.subr.bf16.mxu0 0
  %400 = vmatpush2.bf16.msra.mxu0 0
  %401 = vmatprep.subr.bf16.mxu0 0
  %402 = vmatpush2.bf16.msra.mxu0 0
  %403 = vmatprep.subr.bf16.mxu0 0
  %404 = vmatpush2.bf16.msra.mxu0 0
  %405 = vmatprep.subr.bf16.mxu0 0
  %406 = vmatpush2.bf16.msra.mxu0 0
  %407 = vmatprep.subr.bf16.mxu0 0
  %408 = vmatpush2.bf16.msra.mxu0 0
  %409 = vmatprep.subr.bf16.mxu0 0
  %410 = vmatpush2.bf16.msra.mxu0 0
  %411 = vmatprep.subr.bf16.mxu0 0
  %412 = vmatpush2.bf16.msra.mxu0 0
  %413 = vmatprep.subr.bf16.mxu0 0
  %414 = vmatpush2.bf16.msra.mxu0 0
  %415 = vmatprep.mubr.bf16.mxu0 0
  %416 = vmatmul.mubr.bf16.gmra.mxu0 %v284
  %v417 = vpop.f32.mrf.mxu0
  %v418 = vadd.f32 %v93, %v417
  %v419 = vpop.f32.mrf.mxu0
  %v420 = vpop.f32.mrf.mxu0
  %v421 = vadd.f32 %v93, %v420
  %v422 = vpop.f32.mrf.mxu0
  %423 = vmatprep.mubr.bf16.mxu0 0
  %424 = vmatmul.mubr.bf16.gmra.mxu0 %v287
  %v425 = vpop.f32.mrf.mxu0
  %v426 = vadd.f32 %v93, %v425
  %v427 = vpop.f32.mrf.mxu0
  %v428 = vpop.f32.mrf.mxu0
  %v429 = vadd.f32 %v93, %v428
  %v430 = vpop.f32.mrf.mxu0
  %431 = vmatprep.mubr.bf16.mxu0 0
  %432 = vmatmul.mubr.bf16.gmra.mxu0 %v290
  %v433 = vpop.f32.mrf.mxu0
  %v434 = vadd.f32 %v93, %v433
  %v435 = vpop.f32.mrf.mxu0
  %v436 = vpop.f32.mrf.mxu0
  %v437 = vadd.f32 %v93, %v436
  %v438 = vpop.f32.mrf.mxu0
  %439 = vmatprep.mubr.bf16.mxu0 0
  %440 = vmatmul.mubr.bf16.gmra.mxu0 %v293
  %v441 = vpop.f32.mrf.mxu0
  %v442 = vadd.f32 %v93, %v441
  %v443 = vpop.f32.mrf.mxu0
  %v444 = vpop.f32.mrf.mxu0
  %v445 = vadd.f32 %v93, %v444
  %v446 = vpop.f32.mrf.mxu0
  %447 = vmatprep.mubr.bf16.mxu0 0
  %448 = vmatmul.mubr.bf16.gmra.mxu0 %v296
  %v449 = vpop.f32.mrf.mxu0
  %v450 = vadd.f32 %v93, %v449
  %v451 = vpop.f32.mrf.mxu0
  %v452 = vpop.f32.mrf.mxu0
  %v453 = vadd.f32 %v93, %v452
  %v454 = vpop.f32.mrf.mxu0
  %455 = vmatprep.mubr.bf16.mxu0 0
  %456 = vmatmul.mubr.bf16.gmra.mxu0 %v299
  %v457 = vpop.f32.mrf.mxu0
  %v458 = vadd.f32 %v93, %v457
  %v459 = vpop.f32.mrf.mxu0
  %v460 = vpop.f32.mrf.mxu0
  %v461 = vadd.f32 %v93, %v460
  %v462 = vpop.f32.mrf.mxu0
  %463 = vmatprep.mubr.bf16.mxu0 0
  %464 = vmatmul.mubr.bf16.gmra.mxu0 %v302
  %v465 = vpop.f32.mrf.mxu0
  %v466 = vadd.f32 %v93, %v465
  %v467 = vpop.f32.mrf.mxu0
  %v468 = vpop.f32.mrf.mxu0
  %v469 = vadd.f32 %v93, %v468
  %v470 = vpop.f32.mrf.mxu0
  %471 = vmatprep.mubr.bf16.mxu0 0
  %472 = vmatmul.mubr.bf16.gmra.mxu0 %v305
  %v473 = vpop.f32.mrf.mxu0
  %v474 = vadd.f32 %v93, %v473
  %v475 = vpop.f32.mrf.mxu0
  %v476 = vpop.f32.mrf.mxu0
  %v477 = vadd.f32 %v93, %v476
  %v478 = vpop.f32.mrf.mxu0
  %479 = vmatprep.mubr.bf16.mxu0 0
  %480 = vmatmul.mubr.bf16.gmra.mxu0 %v308
  %v481 = vpop.f32.mrf.mxu0
  %v482 = vadd.f32 %v93, %v481
  %v483 = vpop.f32.mrf.mxu0
  %v484 = vpop.f32.mrf.mxu0
  %v485 = vadd.f32 %v93, %v484
  %v486 = vpop.f32.mrf.mxu0
  %487 = vmatprep.mubr.bf16.mxu0 0
  %488 = vmatmul.mubr.bf16.gmra.mxu0 %v311
  %v489 = vpop.f32.mrf.mxu0
  %v490 = vadd.f32 %v93, %v489
  %v491 = vpop.f32.mrf.mxu0
  %v492 = vpop.f32.mrf.mxu0
  %v493 = vadd.f32 %v93, %v492
  %v494 = vpop.f32.mrf.mxu0
  %495 = vmatprep.mubr.bf16.mxu0 0
  %496 = vmatmul.mubr.bf16.gmra.mxu0 %v314
  %v497 = vpop.f32.mrf.mxu0
  %v498 = vadd.f32 %v93, %v497
  %v499 = vpop.f32.mrf.mxu0
  %v500 = vpop.f32.mrf.mxu0
  %v501 = vadd.f32 %v93, %v500
  %v502 = vpop.f32.mrf.mxu0
  %503 = vmatprep.mubr.bf16.mxu0 0
  %504 = vmatmul.mubr.bf16.gmra.mxu0 %v317
  %v505 = vpop.f32.mrf.mxu0
  %v506 = vadd.f32 %v93, %v505
  %v507 = vpop.f32.mrf.mxu0
  %v508 = vpop.f32.mrf.mxu0
  %v509 = vadd.f32 %v93, %v508
  %v510 = vpop.f32.mrf.mxu0
  %511 = vmatprep.mubr.bf16.mxu0 0
  %512 = vmatmul.mubr.bf16.gmra.mxu0 %v320
  %v513 = vpop.f32.mrf.mxu0
  %v514 = vadd.f32 %v93, %v513
  %v515 = vpop.f32.mrf.mxu0
  %v516 = vpop.f32.mrf.mxu0
  %v517 = vadd.f32 %v93, %v516
  %v518 = vpop.f32.mrf.mxu0
  %519 = vmatprep.mubr.bf16.mxu0 0
  %520 = vmatmul.mubr.bf16.gmra.mxu0 %v323
  %v521 = vpop.f32.mrf.mxu0
  %v522 = vadd.f32 %v93, %v521
  %v523 = vpop.f32.mrf.mxu0
  %v524 = vpop.f32.mrf.mxu0
  %v525 = vadd.f32 %v93, %v524
  %v526 = vpop.f32.mrf.mxu0
  %527 = vmatprep.mubr.bf16.mxu0 0
  %528 = vmatmul.mubr.bf16.gmra.mxu0 %v326
  %v529 = vpop.f32.mrf.mxu0
  %v530 = vadd.f32 %v93, %v529
  %v531 = vpop.f32.mrf.mxu0
  %v532 = vpop.f32.mrf.mxu0
  %v533 = vadd.f32 %v93, %v532
  %v534 = vpop.f32.mrf.mxu0
  %535 = vmatprep.mubr.bf16.mxu0 0
  %536 = vmatmul.mubr.bf16.gmra.mxu0 %v329
  %v537 = vpop.f32.mrf.mxu0
  %v538 = vadd.f32 %v93, %v537
  %v539 = vpop.f32.mrf.mxu0
  %v540 = vpop.f32.mrf.mxu0
  %v541 = vadd.f32 %v93, %v540
  %v542 = vpop.f32.mrf.mxu0
  %543 = vmatprep.mubr.bf16.mxu0 0
  %544 = vmatmul.mubr.bf16.gmra.mxu0 %v332
  %v545 = vpop.f32.mrf.mxu0
  %v546 = vadd.f32 %v93, %v545
  %v547 = vpop.f32.mrf.mxu0
  %v548 = vpop.f32.mrf.mxu0
  %v549 = vadd.f32 %v93, %v548
  %v550 = vpop.f32.mrf.mxu0
  %551 = vmatprep.mubr.bf16.mxu0 0
  %552 = vmatmul.mubr.bf16.gmra.mxu0 %v335
  %v553 = vpop.f32.mrf.mxu0
  %v554 = vadd.f32 %v93, %v553
  %v555 = vpop.f32.mrf.mxu0
  %v556 = vpop.f32.mrf.mxu0
  %v557 = vadd.f32 %v93, %v556
  %v558 = vpop.f32.mrf.mxu0
  %559 = vmatprep.mubr.bf16.mxu0 0
  %560 = vmatmul.mubr.bf16.gmra.mxu0 %v338
  %v561 = vpop.f32.mrf.mxu0
  %v562 = vadd.f32 %v93, %v561
  %v563 = vpop.f32.mrf.mxu0
  %v564 = vpop.f32.mrf.mxu0
  %v565 = vadd.f32 %v93, %v564
  %v566 = vpop.f32.mrf.mxu0
  %567 = vmatprep.mubr.bf16.mxu0 0
  %568 = vmatmul.mubr.bf16.gmra.mxu0 %v341
  %v569 = vpop.f32.mrf.mxu0
  %v570 = vadd.f32 %v93, %v569
  %v571 = vpop.f32.mrf.mxu0
  %v572 = vpop.f32.mrf.mxu0
  %v573 = vadd.f32 %v93, %v572
  %v574 = vpop.f32.mrf.mxu0
  %575 = vmatprep.mubr.bf16.mxu0 0
  %576 = vmatmul.mubr.bf16.gmra.mxu0 %v344
  %v577 = vpop.f32.mrf.mxu0
  %v578 = vadd.f32 %v93, %v577
  %v579 = vpop.f32.mrf.mxu0
  %v580 = vpop.f32.mrf.mxu0
  %v581 = vadd.f32 %v93, %v580
  %v582 = vpop.f32.mrf.mxu0
  %583 = vmatprep.mubr.bf16.mxu0 0
  %584 = vmatmul.mubr.bf16.gmra.mxu0 %v347
  %v585 = vpop.f32.mrf.mxu0
  %v586 = vadd.f32 %v93, %v585
  %v587 = vpop.f32.mrf.mxu0
  %v588 = vpop.f32.mrf.mxu0
  %v589 = vadd.f32 %v93, %v588
  %v590 = vpop.f32.mrf.mxu0
  %591 = vmatprep.mubr.bf16.mxu0 0
  %592 = vmatmul.mubr.bf16.gmra.mxu0 %v350
  %v593 = vpop.f32.mrf.mxu0
  %v594 = vadd.f32 %v93, %v593
  %v595 = vpop.f32.mrf.mxu0
  %v596 = vpop.f32.mrf.mxu0
  %v597 = vadd.f32 %v93, %v596
  %v598 = vpop.f32.mrf.mxu0
  %599 = vmatprep.mubr.bf16.mxu0 0
  %600 = vmatmul.mubr.bf16.gmra.mxu0 %v353
  %v601 = vpop.f32.mrf.mxu0
  %v602 = vadd.f32 %v93, %v601
  %v603 = vpop.f32.mrf.mxu0
  %v604 = vpop.f32.mrf.mxu0
  %v605 = vadd.f32 %v93, %v604
  %v606 = vpop.f32.mrf.mxu0
  %607 = vmatprep.mubr.bf16.mxu0 0
  %608 = vmatmul.mubr.bf16.gmra.mxu0 %v356
  %v609 = vpop.f32.mrf.mxu0
  %v610 = vadd.f32 %v93, %v609
  %v611 = vpop.f32.mrf.mxu0
  %v612 = vpop.f32.mrf.mxu0
  %v613 = vadd.f32 %v93, %v612
  %v614 = vpop.f32.mrf.mxu0
  %615 = vmatprep.mubr.bf16.mxu0 0
  %616 = vmatmul.mubr.bf16.gmra.mxu0 %v359
  %v617 = vpop.f32.mrf.mxu0
  %v618 = vadd.f32 %v93, %v617
  %v619 = vpop.f32.mrf.mxu0
  %v620 = vpop.f32.mrf.mxu0
  %v621 = vadd.f32 %v93, %v620
  %v622 = vpop.f32.mrf.mxu0
  %623 = vmatprep.mubr.bf16.mxu0 0
  %624 = vmatmul.mubr.bf16.gmra.mxu0 %v362
  %v625 = vpop.f32.mrf.mxu0
  %v626 = vadd.f32 %v93, %v625
  %v627 = vpop.f32.mrf.mxu0
  %v628 = vpop.f32.mrf.mxu0
  %v629 = vadd.f32 %v93, %v628
  %v630 = vpop.f32.mrf.mxu0
  %631 = vmatprep.mubr.bf16.mxu0 0
  %632 = vmatmul.mubr.bf16.gmra.mxu0 %v365
  %v633 = vpop.f32.mrf.mxu0
  %v634 = vadd.f32 %v93, %v633
  %v635 = vpop.f32.mrf.mxu0
  %v636 = vpop.f32.mrf.mxu0
  %v637 = vadd.f32 %v93, %v636
  %v638 = vpop.f32.mrf.mxu0
  %639 = vmatprep.mubr.bf16.mxu0 0
  %640 = vmatmul.mubr.bf16.gmra.mxu0 %v368
  %v641 = vpop.f32.mrf.mxu0
  %v642 = vadd.f32 %v93, %v641
  %v643 = vpop.f32.mrf.mxu0
  %v644 = vpop.f32.mrf.mxu0
  %v645 = vadd.f32 %v93, %v644
  %v646 = vpop.f32.mrf.mxu0
  %647 = vmatprep.mubr.bf16.mxu0 0
  %648 = vmatmul.mubr.bf16.gmra.mxu0 %v371
  %v649 = vpop.f32.mrf.mxu0
  %v650 = vadd.f32 %v93, %v649
  %v651 = vpop.f32.mrf.mxu0
  %v652 = vpop.f32.mrf.mxu0
  %v653 = vadd.f32 %v93, %v652
  %v654 = vpop.f32.mrf.mxu0
  %655 = vmatprep.mubr.bf16.mxu0 0
  %656 = vmatmul.mubr.bf16.gmra.mxu0 %v374
  %v657 = vpop.f32.mrf.mxu0
  %v658 = vadd.f32 %v93, %v657
  %v659 = vpop.f32.mrf.mxu0
  %v660 = vpop.f32.mrf.mxu0
  %v661 = vadd.f32 %v93, %v660
  %v662 = vpop.f32.mrf.mxu0
  %663 = vmatprep.mubr.bf16.mxu0 0
  %664 = vmatmul.mubr.bf16.gmra.mxu0 %v377
  %v665 = vpop.f32.mrf.mxu0
  %v666 = vadd.f32 %v93, %v665
  %v667 = vpop.f32.mrf.mxu0
  %v668 = vpop.f32.mrf.mxu0
  %v669 = vadd.f32 %v93, %v668
  %v670 = vpop.f32.mrf.mxu0
  %671 = vdwg.mxu0
  %v672 = vtanh.pop %v418
  %v673 = vtanh.pop %v421
  %v674 = vtanh.pop %v426
  %v675 = vtanh.pop %v429
  %v676 = vtanh.pop %v434
  %v677 = vtanh.pop %v437
  %v678 = vtanh.pop %v442
  %v679 = vtanh.pop %v445
  %v680 = vtanh.pop %v450
  %v681 = vtanh.pop %v453
  %v682 = vtanh.pop %v458
  %v683 = vtanh.pop %v461
  %v684 = vtanh.pop %v466
  %v685 = vtanh.pop %v469
  %v686 = vtanh.pop %v474
  %v687 = vtanh.pop %v477
  %v688 = vtanh.pop %v482
  %v689 = vtanh.pop %v485
  %v690 = vtanh.pop %v490
  %v691 = vtanh.pop %v493
  %v692 = vtanh.pop %v498
  %v693 = vtanh.pop %v501
  %v694 = vtanh.pop %v506
  %v695 = vtanh.pop %v509
  %v696 = vtanh.pop %v514
  %v697 = vtanh.pop %v517
  %v698 = vtanh.pop %v522
  %v699 = vtanh.pop %v525
  %v700 = vtanh.pop %v530
  %v701 = vtanh.pop %v533
  %v702 = vtanh.pop %v538
  %v703 = vtanh.pop %v541
  %v704 = vtanh.pop %v546
  %v705 = vtanh.pop %v549
  %v706 = vtanh.pop %v554
  %v707 = vtanh.pop %v557
  %v708 = vtanh.pop %v562
  %v709 = vtanh.pop %v565
  %v710 = vtanh.pop %v570
  %v711 = vtanh.pop %v573
  %v712 = vtanh.pop %v578
  %v713 = vtanh.pop %v581
  %v714 = vtanh.pop %v586
  %v715 = vtanh.pop %v589
  %v716 = vtanh.pop %v594
  %v717 = vtanh.pop %v597
  %v718 = vtanh.pop %v602
  %v719 = vtanh.pop %v605
  %v720 = vtanh.pop %v610
  %v721 = vtanh.pop %v613
  %v722 = vtanh.pop %v618
  %v723 = vtanh.pop %v621
  %v724 = vtanh.pop %v626
  %v725 = vtanh.pop %v629
  %v726 = vtanh.pop %v634
  %v727 = vtanh.pop %v637
  %v728 = vtanh.pop %v642
  %v729 = vtanh.pop %v645
  %v730 = vtanh.pop %v650
  %v731 = vtanh.pop %v653
  %v732 = vtanh.pop %v658
  %v733 = vtanh.pop %v661
  %v734 = vtanh.pop %v666
  %v735 = vtanh.pop %v669
  %vm736 = vcmask 23552
  %737 = vst.msk [vmem:[%s3] sm:$0xff] %vm736, %v672
  %738 = vst.msk [vmem:[%s3 + $0x8] sm:$0xff] %vm736, %v673
  %739 = vst.msk [vmem:[%s3 + $0x10] sm:$0xff] %vm736, %v674
  %740 = vst.msk [vmem:[%s3 + $0x18] sm:$0xff] %vm736, %v675
  %741 = vst.msk [vmem:[%s3 + $0x20] sm:$0xff] %vm736, %v676
  %742 = vst.msk [vmem:[%s3 + $0x28] sm:$0xff] %vm736, %v677
  %743 = vst.msk [vmem:[%s3 + $0x30] sm:$0xff] %vm736, %v678
  %744 = vst.msk [vmem:[%s3 + $0x38] sm:$0xff] %vm736, %v679
  %745 = vst.msk [vmem:[%s3 + $0x40] sm:$0xff] %vm736, %v680
  %746 = vst.msk [vmem:[%s3 + $0x48] sm:$0xff] %vm736, %v681
  %747 = vst.msk [vmem:[%s3 + $0x50] sm:$0xff] %vm736, %v682
  %748 = vst.msk [vmem:[%s3 + $0x58] sm:$0xff] %vm736, %v683
  %749 = vst.msk [vmem:[%s3 + $0x60] sm:$0xff] %vm736, %v684
  %750 = vst.msk [vmem:[%s3 + $0x68] sm:$0xff] %vm736, %v685
  %751 = vst.msk [vmem:[%s3 + $0x70] sm:$0xff] %vm736, %v686
  %752 = vst.msk [vmem:[%s3 + $0x78] sm:$0xff] %vm736, %v687
  %753 = vst.msk [vmem:[%s3 + $0x80] sm:$0xff] %vm736, %v688
  %754 = vst.msk [vmem:[%s3 + $0x88] sm:$0xff] %vm736, %v689
  %755 = vst.msk [vmem:[%s3 + $0x90] sm:$0xff] %vm736, %v690
  %756 = vst.msk [vmem:[%s3 + $0x98] sm:$0xff] %vm736, %v691
  %757 = vst.msk [vmem:[%s3 + $0xa0] sm:$0xff] %vm736, %v692
  %758 = vst.msk [vmem:[%s3 + $0xa8] sm:$0xff] %vm736, %v693
  %759 = vst.msk [vmem:[%s3 + $0xb0] sm:$0xff] %vm736, %v694
  %760 = vst.msk [vmem:[%s3 + $0xb8] sm:$0xff] %vm736, %v695
  %761 = vst.msk [vmem:[%s3 + $0xc0] sm:$0xff] %vm736, %v696
  %762 = vst.msk [vmem:[%s3 + $0xc8] sm:$0xff] %vm736, %v697
  %763 = vst.msk [vmem:[%s3 + $0xd0] sm:$0xff] %vm736, %v698
  %764 = vst.msk [vmem:[%s3 + $0xd8] sm:$0xff] %vm736, %v699
  %765 = vst.msk [vmem:[%s3 + $0xe0] sm:$0xff] %vm736, %v700
  %766 = vst.msk [vmem:[%s3 + $0xe8] sm:$0xff] %vm736, %v701
  %767 = vst.msk [vmem:[%s3 + $0xf0] sm:$0xff] %vm736, %v702
  %768 = vst.msk [vmem:[%s3 + $0xf8] sm:$0xff] %vm736, %v703
  %769 = vst.msk [vmem:[%s3 + $0x100] sm:$0xff] %vm736, %v704
  %770 = vst.msk [vmem:[%s3 + $0x108] sm:$0xff] %vm736, %v705
  %771 = vst.msk [vmem:[%s3 + $0x110] sm:$0xff] %vm736, %v706
  %772 = vst.msk [vmem:[%s3 + $0x118] sm:$0xff] %vm736, %v707
  %773 = vst.msk [vmem:[%s3 + $0x120] sm:$0xff] %vm736, %v708
  %774 = vst.msk [vmem:[%s3 + $0x128] sm:$0xff] %vm736, %v709
  %775 = vst.msk [vmem:[%s3 + $0x130] sm:$0xff] %vm736, %v710
  %776 = vst.msk [vmem:[%s3 + $0x138] sm:$0xff] %vm736, %v711
  %777 = vst.msk [vmem:[%s3 + $0x140] sm:$0xff] %vm736, %v712
  %778 = vst.msk [vmem:[%s3 + $0x148] sm:$0xff] %vm736, %v713
  %779 = vst.msk [vmem:[%s3 + $0x150] sm:$0xff] %vm736, %v714
  %780 = vst.msk [vmem:[%s3 + $0x158] sm:$0xff] %vm736, %v715
  %781 = vst.msk [vmem:[%s3 + $0x160] sm:$0xff] %vm736, %v716
  %782 = vst.msk [vmem:[%s3 + $0x168] sm:$0xff] %vm736, %v717
  %783 = vst.msk [vmem:[%s3 + $0x170] sm:$0xff] %vm736, %v718
  %784 = vst.msk [vmem:[%s3 + $0x178] sm:$0xff] %vm736, %v719
  %785 = vst.msk [vmem:[%s3 + $0x180] sm:$0xff] %vm736, %v720
  %786 = vst.msk [vmem:[%s3 + $0x188] sm:$0xff] %vm736, %v721
  %787 = vst.msk [vmem:[%s3 + $0x190] sm:$0xff] %vm736, %v722
  %788 = vst.msk [vmem:[%s3 + $0x198] sm:$0xff] %vm736, %v723
  %789 = vst.msk [vmem:[%s3 + $0x1a0] sm:$0xff] %vm736, %v724
  %790 = vst.msk [vmem:[%s3 + $0x1a8] sm:$0xff] %vm736, %v725
  %791 = vst.msk [vmem:[%s3 + $0x1b0] sm:$0xff] %vm736, %v726
  %792 = vst.msk [vmem:[%s3 + $0x1b8] sm:$0xff] %vm736, %v727
  %793 = vst.msk [vmem:[%s3 + $0x1c0] sm:$0xff] %vm736, %v728
  %794 = vst.msk [vmem:[%s3 + $0x1c8] sm:$0xff] %vm736, %v729
  %795 = vst.msk [vmem:[%s3 + $0x1d0] sm:$0xff] %vm736, %v730
  %796 = vst.msk [vmem:[%s3 + $0x1d8] sm:$0xff] %vm736, %v731
  %797 = vst.msk [vmem:[%s3 + $0x1e0] sm:$0xff] %vm736, %v732
  %798 = vst.msk [vmem:[%s3 + $0x1e8] sm:$0xff] %vm736, %v733
  %799 = vst.msk [vmem:[%s3 + $0x1f0] sm:$0xff] %vm736, %v734
  %800 = vst.msk [vmem:[%s3 + $0x1f8] sm:$0xff] %vm736, %v735
  // Predicated region
  $region14: #{_lambda_.15} parent=0 // pred_check
    _
  $region15: #{_lambda_.15} parent=0 // pred_check_branch
    %802 = sbr.rel (0) target = $region17
  $region16: #{_lambda_.15} parent=0 // pred_region
    _
  $region17: #{_lambda_.15} parent=0 // pred_fallthru
    _
  // Predicated region
  $region18: #{_lambda_.15} parent=0 // pred_check
    _
  $region19: #{_lambda_.15} parent=0 // pred_check_branch
    %804 = sbr.rel (0) target = $region21
  $region20: #{_lambda_.15} parent=0 // pred_region
    _
  $region21: #{_lambda_.15} parent=0 // pred_fallthru
    _

</llo_original>
